<compile_context>
chip_gen: v6e
topology: v6e:2x2x1
jax: 0.10.0
libtpu: 0.0.40
codegen_flags: <defaults>
</compile_context>

<pallas_src>
import functools
import math

import jax
import jax.numpy as jnp
from jax.experimental import pallas as pl
from jax.experimental.pallas import tpu as pltpu


# ----------------------------------------------------------------------------
# Fused kernel: all layers for one batch element; grid = (batch, layer).
# ----------------------------------------------------------------------------
def _fused_cross_encoder_kernel(
    rgb_ref, ir_ref, pos_ref,
    wqk_ref, bqk_ref, wv_ref, bv_ref, wo_ref, bo_ref,
    g1_ref, beta1_ref, w1_ref, bf1_ref, w2_ref, bf2_ref, g2_ref, beta2_ref,
    rgb_out_ref, ir_out_ref,
    x_state,
    *, nhead, compute_dtype,
):
    S, D = rgb_ref.shape[1], rgb_ref.shape[2]
    dh = D // nhead
    layer = pl.program_id(1)

    # Seed the VMEM-resident activations at the first layer of each batch item.
    @pl.when(layer == 0)
    def _():
        x_state[0] = rgb_ref[0].astype(jnp.float32)
        x_state[1] = ir_ref[0].astype(jnp.float32)

    x3 = x_state[...]                                  # (2, S, D) [rgb, ir], f32
    pos = pos_ref[...].astype(jnp.float32)             # (S, D)

    def mm(a, w, b=None):
        out = jnp.dot(a.astype(compute_dtype), w,
                      preferred_element_type=jnp.float32)
        return out if b is None else out + b

    def layer_norm(v, g, b):
        mu = jnp.mean(v, axis=-1, keepdims=True)
        c = v - mu
        var = jnp.mean(c * c, axis=-1, keepdims=True)
        return c * jax.lax.rsqrt(var + 1e-5) * g + b

    # ---- cross multi-head attention, both streams stacked on the row axis ---
    q_in = (x3 + pos[None]).reshape(2 * S, D)          # queries/keys carry pos
    v_in = jnp.concatenate([x3[1], x3[0]], axis=0)     # values from the OTHER stream

    qk = mm(q_in, wqk_ref[0], bqk_ref[0])              # (2S, 2D); scale folded in wq
    q = qk[:, :D]
    k_own = qk[:, D:]
    # stream s attends to the other stream's keys -> swap the two S-row halves
    k = jnp.concatenate([k_own[S:], k_own[:S]], axis=0)
    v = mm(v_in, wv_ref[0], bv_ref[0])                 # (2S, D)

    wo_all = wo_ref[0]                                 # (nhead, dh, D)
    attn = jnp.zeros((2 * S, D), jnp.float32)
    for h in range(nhead):                             # static unroll over heads
        lo, hi = h * dh, (h + 1) * dh
        qh = q[:, lo:hi].reshape(2, S, dh)
        kh = k[:, lo:hi].reshape(2, S, dh)
        vh = v[:, lo:hi].reshape(2, S, dh)
        s = jnp.einsum("bqd,bkd->bqk",
                       qh.astype(compute_dtype), kh.astype(compute_dtype),
                       preferred_element_type=jnp.float32)       # (2, S, S)
        s = s - jnp.max(s, axis=-1, keepdims=True)
        p = jnp.exp(s)
        p = p * pl.reciprocal(jnp.sum(p, axis=-1, keepdims=True), approx=True)
        oh = jnp.einsum("bqk,bkd->bqd",
                        p.astype(compute_dtype), vh.astype(compute_dtype),
                        preferred_element_type=jnp.float32)      # (2, S, dh)
        # Fold the out-projection into the head loop: no lane-axis concat,
        # wo slices are leading-dim indexed (aligned).
        attn = attn + mm(oh.reshape(2 * S, dh), wo_all[h])
    attn = attn + bo_ref[0]

    x2 = x3.reshape(2 * S, D)
    h1 = layer_norm(x2 + attn, g1_ref[0], beta1_ref[0])

    ffn = mm(jnp.maximum(mm(h1, w1_ref[0], bf1_ref[0]), 0.0),
             w2_ref[0], bf2_ref[0])
    out = layer_norm(h1 + ffn, g2_ref[0], beta2_ref[0])

    out3 = out.reshape(2, S, D)
    x_state[...] = out3                                # carry to the next layer
    rgb_out_ref[0] = out3[0].astype(rgb_out_ref.dtype)
    ir_out_ref[0] = out3[1].astype(ir_out_ref.dtype)


# ----------------------------------------------------------------------------
# Parameter packing: stack layers, fuse wq|wk, fold softmax scale, split wo.
# ----------------------------------------------------------------------------
def _pack_layer_params(layer_params, nhead, compute_dtype):
    L = len(layer_params)
    D = layer_params[0]["wq"].shape[0]
    dh = D // nhead
    scale = 1.0 / math.sqrt(dh)

    def stk(name):
        return jnp.stack([jnp.asarray(p[name], jnp.float32) for p in layer_params])

    wqk = jnp.concatenate([stk("wq") * scale, stk("wk")], axis=-1)   # (L, D, 2D)
    bqk = jnp.concatenate([stk("bq") * scale, stk("bk")], axis=-1)   # (L, 1, 2D)
    wo = stk("wo").reshape(L, nhead, dh, D)                          # per-head slices

    return dict(
        wqk=wqk.astype(compute_dtype), bqk=bqk,
        wv=stk("wv").astype(compute_dtype), bv=stk("bv"),
        wo=wo.astype(compute_dtype), bo=stk("bo"),
        g1=stk("g1"), beta1=stk("beta1"),
        w1=stk("w1").astype(compute_dtype), bf1=stk("bf1"),
        w2=stk("w2").astype(compute_dtype), bf2=stk("bf2"),
        g2=stk("g2"), beta2=stk("beta2"),
    )


def transformer_encoder_cross(rgb, ir, pos, layer_params, nhead,
                              *, compute_dtype=jnp.float32):
    """TransformerEncoder_cross.forward (self.norm is None)."""
    B, S, D = rgb.shape
    L = len(layer_params)
    assert D % nhead == 0

    packed = _pack_layer_params(layer_params, nhead, compute_dtype)
    order = ["wqk", "bqk", "wv", "bv", "wo", "bo", "g1", "beta1",
             "w1", "bf1", "w2", "bf2", "g2", "beta2"]
    weights = [packed[n] for n in order]

    def layer_spec(arr):
        nd = arr.ndim
        return pl.BlockSpec((1,) + arr.shape[1:],
                            lambda b, l, _nd=nd: (l,) + (0,) * (_nd - 1))

    tok_spec = pl.BlockSpec((1, S, D), lambda b, l: (b, 0, 0))
    pos_spec = pl.BlockSpec(pos.shape, lambda b, l: (0, 0))

    grid_spec = pltpu.PrefetchScalarGridSpec(
        num_scalar_prefetch=0,
        grid=(B, L),                       # batch parallel, layers sequential
        in_specs=[tok_spec, tok_spec, pos_spec] + [layer_spec(w) for w in weights],
        out_specs=[tok_spec, tok_spec],
        scratch_shapes=[pltpu.VMEM((2, S, D), jnp.float32)],
    )

    kernel = functools.partial(_fused_cross_encoder_kernel,
                               nhead=nhead, compute_dtype=compute_dtype)

    out_rgb, out_ir = pl.pallas_call(
        kernel,
        out_shape=(jax.ShapeDtypeStruct((B, S, D), rgb.dtype),
                   jax.ShapeDtypeStruct((B, S, D), ir.dtype)),
        grid_spec=grid_spec,
        compiler_params=pltpu.CompilerParams(
            dimension_semantics=("parallel", "arbitrary"),
            vmem_limit_bytes=32 * 1024 * 1024,
        ),
    )(rgb, ir, pos, *weights)
    return out_rgb, out_ir


# ----------------------------------------------------------------------------
# Pure-JAX reference (matches the PyTorch module in eval mode, f32).
# ----------------------------------------------------------------------------
def _ref_layer(rgb, ir, pos, p, nhead):
    def linear(x, w, b):
        return x @ w + b

    def ln(x, g, b):
        mu = x.mean(-1, keepdims=True)
        var = ((x - mu) ** 2).mean(-1, keepdims=True)
        return (x - mu) / jnp.sqrt(var + 1e-5) * g + b

    def mha(qx, kx, vx):
        B, S, D = qx.shape
        dh = D // nhead
        q = linear(qx, p["wq"], p["bq"]).reshape(B, S, nhead, dh)
        k = linear(kx, p["wk"], p["bk"]).reshape(B, S, nhead, dh)
        v = linear(vx, p["wv"], p["bv"]).reshape(B, S, nhead, dh)
        s = jnp.einsum("bqhd,bkhd->bhqk", q, k) / math.sqrt(dh)
        a = jax.nn.softmax(s, axis=-1)
        o = jnp.einsum("bhqk,bkhd->bqhd", a, v).reshape(B, S, D)
        return linear(o, p["wo"], p["bo"])

    def ffn(x):
        return linear(jax.nn.relu(linear(x, p["w1"], p["bf1"])), p["w2"], p["bf2"])

    q_rgb, q_ir = rgb + pos, ir + pos
    rgb2 = mha(q_rgb, q_ir, ir)
    ir2 = mha(q_ir, q_rgb, rgb)
    h_rgb = ln(rgb + rgb2, p["g1"], p["beta1"])
    h_ir = ln(ir + ir2, p["g1"], p["beta1"])
    out_rgb = ln(h_rgb + ffn(h_rgb), p["g2"], p["beta2"])
    out_ir = ln(h_ir + ffn(h_ir), p["g2"], p["beta2"])
    return out_rgb, out_ir


def _ref_encoder(rgb, ir, pos, layer_params, nhead):
    for p in layer_params:
        rgb, ir = _ref_layer(rgb, ir, pos, p, nhead)
    return rgb, ir


# ----------------------------------------------------------------------------
# Deterministic parameter construction + smoke test.
# ----------------------------------------------------------------------------
def _make_layer_params(key, d_model, dff):
    ks = jax.random.split(key, 8)
    scale = 0.1
    return {
        "wq": scale * jax.random.normal(ks[0], (d_model, d_model), jnp.float32),
        "bq": scale * jax.random.normal(ks[1], (1, d_model), jnp.float32),
        "wk": scale * jax.random.normal(ks[2], (d_model, d_model), jnp.float32),
        "bk": scale * jax.random.normal(ks[3], (1, d_model), jnp.float32),
        "wv": scale * jax.random.normal(ks[4], (d_model, d_model), jnp.float32),
        "bv": scale * jax.random.normal(ks[5], (1, d_model), jnp.float32),
        "wo": scale * jax.random.normal(ks[6], (d_model, d_model), jnp.float32),
        "bo": jnp.zeros((1, d_model), jnp.float32),
        "g1": jnp.ones((1, d_model), jnp.float32),
        "beta1": jnp.zeros((1, d_model), jnp.float32),
        "w1": scale * jax.random.normal(ks[7], (d_model, dff), jnp.float32),
        "bf1": jnp.zeros((1, dff), jnp.float32),
        "w2": scale * jax.random.normal(jax.random.fold_in(key, 99), (dff, d_model), jnp.float32),
        "bf2": jnp.zeros((1, d_model), jnp.float32),
        "g2": jnp.ones((1, d_model), jnp.float32),
        "beta2": jnp.zeros((1, d_model), jnp.float32),
    }


if __name__ == "__main__":
    B, S, D = 2, 16, 32        # batch, seq (flattened H*W), d_model
    NHEAD = 4
    DFF = 64
    NUM_LAYERS = 2

    root = jax.random.PRNGKey(0)
    k_rgb, k_ir, k_pos, k_par = jax.random.split(root, 4)

    rgb = jax.random.normal(k_rgb, (B, S, D), jnp.float32)
    ir = jax.random.normal(k_ir, (B, S, D), jnp.float32)
    pos = 0.02 * jax.random.normal(k_pos, (S, D), jnp.float32)   # shared pos_embed

    layer_params = [
        _make_layer_params(jax.random.fold_in(k_par, i), D, DFF)
        for i in range(NUM_LAYERS)
    ]

    ref_rgb, ref_ir = _ref_encoder(rgb, ir, pos, layer_params, NHEAD)

    # f32 MXU operands (tight check; approx softmax reciprocal is the only
    # intended deviation from the reference).
    out_rgb, out_ir = transformer_encoder_cross(
        rgb, ir, pos, layer_params, NHEAD, compute_dtype=jnp.float32)
    out_rgb = jax.block_until_ready(out_rgb)
    out_ir = jax.block_until_ready(out_ir)
    assert out_rgb.shape == (B, S, D) and out_ir.shape == (B, S, D)
    assert jnp.allclose(out_rgb, ref_rgb, atol=1e-2, rtol=1e-2)
    assert jnp.allclose(out_ir, ref_ir, atol=1e-2, rtol=1e-2)

    # bf16 MXU operands (recommended path on v6e/v7x); LN / softmax / residual
    # math stays in f32 so this is a looser, sanity-level comparison.
    b_rgb, b_ir = transformer_encoder_cross(
        rgb, ir, pos, layer_params, NHEAD, compute_dtype=jnp.bfloat16)
    b_rgb = jax.block_until_ready(b_rgb)
    b_ir = jax.block_until_ready(b_ir)
    assert bool(jnp.all(jnp.isfinite(b_rgb))) and bool(jnp.all(jnp.isfinite(b_ir)))
    assert jnp.allclose(b_rgb, ref_rgb, atol=1e-1, rtol=1e-1)
    assert jnp.allclose(b_ir, ref_ir, atol=1e-1, rtol=1e-1)

    print("KERNEL_OK")
</pallas_src>

<mosaic_0001>
module attributes {stable_mosaic.version = 11 : i64} {
  func.func @_fused_cross_encoder_kernel(%arg0: i32, %arg1: i32, %arg2: memref<1x16x32xf32, #tpu.memory_space<vmem>>, %arg3: memref<1x16x32xf32, #tpu.memory_space<vmem>>, %arg4: memref<16x32xf32, #tpu.memory_space<vmem>>, %arg5: memref<1x32x64xf32, #tpu.memory_space<vmem>>, %arg6: memref<1x1x64xf32, #tpu.memory_space<vmem>>, %arg7: memref<1x32x32xf32, #tpu.memory_space<vmem>>, %arg8: memref<1x1x32xf32, #tpu.memory_space<vmem>>, %arg9: memref<1x4x8x32xf32, #tpu.memory_space<vmem>>, %arg10: memref<1x1x32xf32, #tpu.memory_space<vmem>>, %arg11: memref<1x1x32xf32, #tpu.memory_space<vmem>>, %arg12: memref<1x1x32xf32, #tpu.memory_space<vmem>>, %arg13: memref<1x32x64xf32, #tpu.memory_space<vmem>>, %arg14: memref<1x1x64xf32, #tpu.memory_space<vmem>>, %arg15: memref<1x64x32xf32, #tpu.memory_space<vmem>>, %arg16: memref<1x1x32xf32, #tpu.memory_space<vmem>>, %arg17: memref<1x1x32xf32, #tpu.memory_space<vmem>>, %arg18: memref<1x1x32xf32, #tpu.memory_space<vmem>>, %arg19: memref<1x16x32xf32, #tpu.memory_space<vmem>>, %arg20: memref<1x16x32xf32, #tpu.memory_space<vmem>>, %arg21: memref<2x16x32xf32, #tpu.memory_space<vmem>>) attributes {dimension_semantics = [#tpu.dimension_semantics<parallel>, #tpu.dimension_semantics<arbitrary>], iteration_bounds = array<i64: 2, 2>, scalar_prefetch = 0 : i64, scratch_operands = 1 : i64, tpu.core_type = #tpu.core_type<tc>, window_params = [{transform_indices = @transform_0, window_bounds = array<i64: 1, 16, 32>}, {transform_indices = @transform_1, window_bounds = array<i64: 1, 16, 32>}, {pipeline_mode = #tpu.pipeline_mode<synchronous>, transform_indices = @transform_2, window_bounds = array<i64: 16, 32>}, {transform_indices = @transform_3, window_bounds = array<i64: 1, 32, 64>}, {transform_indices = @transform_4, window_bounds = array<i64: 1, 1, 64>}, {transform_indices = @transform_5, window_bounds = array<i64: 1, 32, 32>}, {transform_indices = @transform_6, window_bounds = array<i64: 1, 1, 32>}, {transform_indices = @transform_7, window_bounds = array<i64: 1, 4, 8, 32>}, {transform_indices = @transform_8, window_bounds = array<i64: 1, 1, 32>}, {transform_indices = @transform_9, window_bounds = array<i64: 1, 1, 32>}, {transform_indices = @transform_10, window_bounds = array<i64: 1, 1, 32>}, {transform_indices = @transform_11, window_bounds = array<i64: 1, 32, 64>}, {transform_indices = @transform_12, window_bounds = array<i64: 1, 1, 64>}, {transform_indices = @transform_13, window_bounds = array<i64: 1, 64, 32>}, {transform_indices = @transform_14, window_bounds = array<i64: 1, 1, 32>}, {transform_indices = @transform_15, window_bounds = array<i64: 1, 1, 32>}, {transform_indices = @transform_16, window_bounds = array<i64: 1, 1, 32>}, {transform_indices = @transform_17, window_bounds = array<i64: 1, 16, 32>}, {transform_indices = @transform_18, window_bounds = array<i64: 1, 16, 32>}]} {
    %c0_i32 = arith.constant 0 : i32
    %0 = arith.cmpi eq, %arg1, %c0_i32 : i32
    %1 = arith.extui %0 : i1 to i32
    %c0_i32_0 = arith.constant 0 : i32
    %2 = arith.cmpi ne, %1, %c0_i32_0 : i32
    scf.if %2 {
      %c0_92 = arith.constant 0 : index
      %c0_93 = arith.constant 0 : index
      %c0_94 = arith.constant 0 : index
      %211 = vector.load %arg2[%c0_92, %c0_93, %c0_94] : memref<1x16x32xf32, #tpu.memory_space<vmem>>, vector<1x16x32xf32>
      %212 = vector.shape_cast %211 : vector<1x16x32xf32> to vector<16x32xf32>
      %c0_95 = arith.constant 0 : index
      %c0_96 = arith.constant 0 : index
      %c0_97 = arith.constant 0 : index
      %213 = vector.load %arg21[%c0_95, %c0_96, %c0_97] : memref<2x16x32xf32, #tpu.memory_space<vmem>>, vector<1x16x32xf32>
      %214 = vector.shape_cast %213 : vector<1x16x32xf32> to vector<16x32xf32>
      %215 = vector.shape_cast %212 : vector<16x32xf32> to vector<1x16x32xf32>
      tpu.vector_store %arg21[%c0_95, %c0_96, %c0_97], %215 {strides = array<i32>} : memref<2x16x32xf32, #tpu.memory_space<vmem>>, vector<1x16x32xf32>,
      %c0_98 = arith.constant 0 : index
      %c0_99 = arith.constant 0 : index
      %c0_100 = arith.constant 0 : index
      %216 = vector.load %arg3[%c0_98, %c0_99, %c0_100] : memref<1x16x32xf32, #tpu.memory_space<vmem>>, vector<1x16x32xf32>
      %217 = vector.shape_cast %216 : vector<1x16x32xf32> to vector<16x32xf32>
      %c1 = arith.constant 1 : index
      %c0_101 = arith.constant 0 : index
      %c0_102 = arith.constant 0 : index
      %218 = vector.load %arg21[%c1, %c0_101, %c0_102] : memref<2x16x32xf32, #tpu.memory_space<vmem>>, vector<1x16x32xf32>
      %219 = vector.shape_cast %218 : vector<1x16x32xf32> to vector<16x32xf32>
      %220 = vector.shape_cast %217 : vector<16x32xf32> to vector<1x16x32xf32>
      tpu.vector_store %arg21[%c1, %c0_101, %c0_102], %220 {strides = array<i32>} : memref<2x16x32xf32, #tpu.memory_space<vmem>>, vector<1x16x32xf32>,
    } else {
    }
    %c0 = arith.constant 0 : index
    %c0_1 = arith.constant 0 : index
    %c0_2 = arith.constant 0 : index
    %3 = vector.load %arg21[%c0, %c0_1, %c0_2] : memref<2x16x32xf32, #tpu.memory_space<vmem>>, vector<2x16x32xf32>
    %c0_3 = arith.constant 0 : index
    %c0_4 = arith.constant 0 : index
    %4 = vector.load %arg4[%c0_3, %c0_4] : memref<16x32xf32, #tpu.memory_space<vmem>>, vector<16x32xf32>
    %5 = vector.shape_cast %4 : vector<16x32xf32> to vector<1x16x32xf32>
    %6 = vector.broadcast %5 : vector<1x16x32xf32> to vector<2x16x32xf32>
    %7 = arith.addf %3, %6 : vector<2x16x32xf32>
    %8 = vector.shape_cast %7 : vector<2x16x32xf32> to vector<32x32xf32>
    %9 = vector.extract_strided_slice %3 {offsets = [1, 0, 0], sizes = [1, 16, 32], strides = [1, 1, 1]} : vector<2x16x32xf32> to vector<1x16x32xf32>
    %10 = vector.shape_cast %9 : vector<1x16x32xf32> to vector<16x32xf32>
    %11 = vector.extract_strided_slice %3 {offsets = [0, 0, 0], sizes = [1, 16, 32], strides = [1, 1, 1]} : vector<2x16x32xf32> to vector<1x16x32xf32>
    %12 = vector.shape_cast %11 : vector<1x16x32xf32> to vector<16x32xf32>
    %13 = tpu.concatenate %10, %12 in 0 : vector<16x32xf32>, vector<16x32xf32> -> vector<32x32xf32>
    %c0_5 = arith.constant 0 : index
    %c0_6 = arith.constant 0 : index
    %c0_7 = arith.constant 0 : index
    %14 = vector.load %arg5[%c0_5, %c0_6, %c0_7] : memref<1x32x64xf32, #tpu.memory_space<vmem>>, vector<1x32x64xf32>
    %15 = vector.shape_cast %14 : vector<1x32x64xf32> to vector<32x64xf32>
    %c0_8 = arith.constant 0 : index
    %c0_9 = arith.constant 0 : index
    %c0_10 = arith.constant 0 : index
    %16 = vector.load %arg6[%c0_8, %c0_9, %c0_10] : memref<1x1x64xf32, #tpu.memory_space<vmem>>, vector<1x1x64xf32>
    %17 = vector.shape_cast %16 : vector<1x1x64xf32> to vector<1x64xf32>
    %cst = arith.constant dense<0.000000e+00> : vector<32x64xf32>
    %18 = tpu.matmul %8, %15, %cst {dimension_numbers = #tpu.dot_dimension_numbers<[1], [0], [0], [1], [0, 0, 1, 1], [], []>} : vector<32x32xf32>, vector<32x64xf32>, vector<32x64xf32> -> vector<32x64xf32>
    %19 = vector.broadcast %17 : vector<1x64xf32> to vector<32x64xf32>
    %20 = arith.addf %18, %19 : vector<32x64xf32>
    %21 = vector.extract_strided_slice %20 {offsets = [0, 0], sizes = [32, 32], strides = [1, 1]} : vector<32x64xf32> to vector<32x32xf32>
    %22 = vector.extract_strided_slice %20 {offsets = [0, 32], sizes = [32, 32], strides = [1, 1]} : vector<32x64xf32> to vector<32x32xf32>
    %23 = vector.extract_strided_slice %22 {offsets = [16, 0], sizes = [16, 32], strides = [1, 1]} : vector<32x32xf32> to vector<16x32xf32>
    %24 = vector.extract_strided_slice %22 {offsets = [0, 0], sizes = [16, 32], strides = [1, 1]} : vector<32x32xf32> to vector<16x32xf32>
    %25 = tpu.concatenate %23, %24 in 0 : vector<16x32xf32>, vector<16x32xf32> -> vector<32x32xf32>
    %c0_11 = arith.constant 0 : index
    %c0_12 = arith.constant 0 : index
    %c0_13 = arith.constant 0 : index
    %26 = vector.load %arg7[%c0_11, %c0_12, %c0_13] : memref<1x32x32xf32, #tpu.memory_space<vmem>>, vector<1x32x32xf32>
    %27 = vector.shape_cast %26 : vector<1x32x32xf32> to vector<32x32xf32>
    %c0_14 = arith.constant 0 : index
    %c0_15 = arith.constant 0 : index
    %c0_16 = arith.constant 0 : index
    %28 = vector.load %arg8[%c0_14, %c0_15, %c0_16] : memref<1x1x32xf32, #tpu.memory_space<vmem>>, vector<1x1x32xf32>
    %29 = vector.shape_cast %28 : vector<1x1x32xf32> to vector<1x32xf32>
    %cst_17 = arith.constant dense<0.000000e+00> : vector<32x32xf32>
    %30 = tpu.matmul %13, %27, %cst_17 {dimension_numbers = #tpu.dot_dimension_numbers<[1], [0], [0], [1], [0, 0, 1, 1], [], []>} : vector<32x32xf32>, vector<32x32xf32>, vector<32x32xf32> -> vector<32x32xf32>
    %31 = vector.broadcast %29 : vector<1x32xf32> to vector<32x32xf32>
    %32 = arith.addf %30, %31 : vector<32x32xf32>
    %c0_18 = arith.constant 0 : index
    %c0_19 = arith.constant 0 : index
    %c0_20 = arith.constant 0 : index
    %c0_21 = arith.constant 0 : index
    %33 = vector.load %arg9[%c0_18, %c0_19, %c0_20, %c0_21] : memref<1x4x8x32xf32, #tpu.memory_space<vmem>>, vector<1x4x8x32xf32>
    %34 = vector.shape_cast %33 : vector<1x4x8x32xf32> to vector<4x8x32xf32>
    %cst_22 = arith.constant 0.000000e+00 : f32
    %35 = vector.broadcast %cst_22 : f32 to vector<32x32xf32>
    %36 = vector.extract_strided_slice %21 {offsets = [0, 0], sizes = [32, 8], strides = [1, 1]} : vector<32x32xf32> to vector<32x8xf32>
    %37 = vector.shape_cast %36 : vector<32x8xf32> to vector<2x16x8xf32>
    %38 = vector.extract_strided_slice %25 {offsets = [0, 0], sizes = [32, 8], strides = [1, 1]} : vector<32x32xf32> to vector<32x8xf32>
    %39 = vector.shape_cast %38 : vector<32x8xf32> to vector<2x16x8xf32>
    %40 = vector.extract_strided_slice %32 {offsets = [0, 0], sizes = [32, 8], strides = [1, 1]} : vector<32x32xf32> to vector<32x8xf32>
    %41 = vector.shape_cast %40 : vector<32x8xf32> to vector<2x16x8xf32>
    "tpu.trace_start"() <{level = 10 : i32, message = "bqd,bkd->bqk"}> : () -> ()
    %cst_23 = arith.constant dense<0.000000e+00> : vector<2x16x16xf32>
    %42 = tpu.matmul %37, %39, %cst_23 {dimension_numbers = #tpu.dot_dimension_numbers<[2], [2], [1], [1], [0, 0, 0, 1, 1, 1], [0], [0]>} : vector<2x16x8xf32>, vector<2x16x8xf32>, vector<2x16x16xf32> -> vector<2x16x16xf32>
    "tpu.trace_stop"() : () -> ()
    %cst_24 = arith.constant dense<0xFF800000> : vector<2x16xf32>
    %43 = vector.multi_reduction <maximumf>, %42, %cst_24 [2] : vector<2x16x16xf32> to vector<2x16xf32>
    %44 = vector.shape_cast %43 : vector<2x16xf32> to vector<2x16x1xf32>
    %45 = vector.broadcast %44 : vector<2x16x1xf32> to vector<2x16x16xf32>
    %46 = arith.subf %42, %45 : vector<2x16x16xf32>
    %47 = math.exp %46 : vector<2x16x16xf32>
    %cst_25 = arith.constant dense<0.000000e+00> : vector<2x16xf32>
    %48 = vector.multi_reduction <add>, %47, %cst_25 [2] : vector<2x16x16xf32> to vector<2x16xf32>
    %49 = vector.shape_cast %48 : vector<2x16xf32> to vector<2x16x1xf32>
    %50 = tpu.reciprocal %49 {approx = true} : vector<2x16x1xf32> -> vector<2x16x1xf32>
    %51 = vector.broadcast %50 : vector<2x16x1xf32> to vector<2x16x16xf32>
    %52 = arith.mulf %47, %51 : vector<2x16x16xf32>
    "tpu.trace_start"() <{level = 10 : i32, message = "bqk,bkd->bqd"}> : () -> ()
    %cst_26 = arith.constant dense<0.000000e+00> : vector<2x16x8xf32>
    %53 = tpu.matmul %52, %41, %cst_26 {dimension_numbers = #tpu.dot_dimension_numbers<[2], [1], [1], [2], [0, 0, 0, 1, 1, 2], [0], [0]>} : vector<2x16x16xf32>, vector<2x16x8xf32>, vector<2x16x8xf32> -> vector<2x16x8xf32>
    "tpu.trace_stop"() : () -> ()
    %54 = vector.shape_cast %53 : vector<2x16x8xf32> to vector<32x8xf32>
    %55 = vector.extract_strided_slice %34 {offsets = [0, 0, 0], sizes = [1, 8, 32], strides = [1, 1, 1]} : vector<4x8x32xf32> to vector<1x8x32xf32>
    %56 = vector.shape_cast %55 : vector<1x8x32xf32> to vector<8x32xf32>
    %cst_27 = arith.constant dense<0.000000e+00> : vector<32x32xf32>
    %57 = tpu.matmul %54, %56, %cst_27 {dimension_numbers = #tpu.dot_dimension_numbers<[1], [0], [0], [1], [0, 0, 1, 1], [], []>} : vector<32x8xf32>, vector<8x32xf32>, vector<32x32xf32> -> vector<32x32xf32>
    %58 = arith.addf %35, %57 : vector<32x32xf32>
    %59 = vector.extract_strided_slice %21 {offsets = [0, 8], sizes = [32, 8], strides = [1, 1]} : vector<32x32xf32> to vector<32x8xf32>
    %60 = vector.shape_cast %59 : vector<32x8xf32> to vector<2x16x8xf32>
    %61 = vector.extract_strided_slice %25 {offsets = [0, 8], sizes = [32, 8], strides = [1, 1]} : vector<32x32xf32> to vector<32x8xf32>
    %62 = vector.shape_cast %61 : vector<32x8xf32> to vector<2x16x8xf32>
    %63 = vector.extract_strided_slice %32 {offsets = [0, 8], sizes = [32, 8], strides = [1, 1]} : vector<32x32xf32> to vector<32x8xf32>
    %64 = vector.shape_cast %63 : vector<32x8xf32> to vector<2x16x8xf32>
    "tpu.trace_start"() <{level = 10 : i32, message = "bqd,bkd->bqk"}> : () -> ()
    %cst_28 = arith.constant dense<0.000000e+00> : vector<2x16x16xf32>
    %65 = tpu.matmul %60, %62, %cst_28 {dimension_numbers = #tpu.dot_dimension_numbers<[2], [2], [1], [1], [0, 0, 0, 1, 1, 1], [0], [0]>} : vector<2x16x8xf32>, vector<2x16x8xf32>, vector<2x16x16xf32> -> vector<2x16x16xf32>
    "tpu.trace_stop"() : () -> ()
    %cst_29 = arith.constant dense<0xFF800000> : vector<2x16xf32>
    %66 = vector.multi_reduction <maximumf>, %65, %cst_29 [2] : vector<2x16x16xf32> to vector<2x16xf32>
    %67 = vector.shape_cast %66 : vector<2x16xf32> to vector<2x16x1xf32>
    %68 = vector.broadcast %67 : vector<2x16x1xf32> to vector<2x16x16xf32>
    %69 = arith.subf %65, %68 : vector<2x16x16xf32>
    %70 = math.exp %69 : vector<2x16x16xf32>
    %cst_30 = arith.constant dense<0.000000e+00> : vector<2x16xf32>
    %71 = vector.multi_reduction <add>, %70, %cst_30 [2] : vector<2x16x16xf32> to vector<2x16xf32>
    %72 = vector.shape_cast %71 : vector<2x16xf32> to vector<2x16x1xf32>
    %73 = tpu.reciprocal %72 {approx = true} : vector<2x16x1xf32> -> vector<2x16x1xf32>
    %74 = vector.broadcast %73 : vector<2x16x1xf32> to vector<2x16x16xf32>
    %75 = arith.mulf %70, %74 : vector<2x16x16xf32>
    "tpu.trace_start"() <{level = 10 : i32, message = "bqk,bkd->bqd"}> : () -> ()
    %cst_31 = arith.constant dense<0.000000e+00> : vector<2x16x8xf32>
    %76 = tpu.matmul %75, %64, %cst_31 {dimension_numbers = #tpu.dot_dimension_numbers<[2], [1], [1], [2], [0, 0, 0, 1, 1, 2], [0], [0]>} : vector<2x16x16xf32>, vector<2x16x8xf32>, vector<2x16x8xf32> -> vector<2x16x8xf32>
    "tpu.trace_stop"() : () -> ()
    %77 = vector.shape_cast %76 : vector<2x16x8xf32> to vector<32x8xf32>
    %78 = vector.extract_strided_slice %34 {offsets = [1, 0, 0], sizes = [1, 8, 32], strides = [1, 1, 1]} : vector<4x8x32xf32> to vector<1x8x32xf32>
    %79 = vector.shape_cast %78 : vector<1x8x32xf32> to vector<8x32xf32>
    %cst_32 = arith.constant dense<0.000000e+00> : vector<32x32xf32>
    %80 = tpu.matmul %77, %79, %cst_32 {dimension_numbers = #tpu.dot_dimension_numbers<[1], [0], [0], [1], [0, 0, 1, 1], [], []>} : vector<32x8xf32>, vector<8x32xf32>, vector<32x32xf32> -> vector<32x32xf32>
    %81 = arith.addf %58, %80 : vector<32x32xf32>
    %82 = vector.extract_strided_slice %21 {offsets = [0, 16], sizes = [32, 8], strides = [1, 1]} : vector<32x32xf32> to vector<32x8xf32>
    %83 = vector.shape_cast %82 : vector<32x8xf32> to vector<2x16x8xf32>
    %84 = vector.extract_strided_slice %25 {offsets = [0, 16], sizes = [32, 8], strides = [1, 1]} : vector<32x32xf32> to vector<32x8xf32>
    %85 = vector.shape_cast %84 : vector<32x8xf32> to vector<2x16x8xf32>
    %86 = vector.extract_strided_slice %32 {offsets = [0, 16], sizes = [32, 8], strides = [1, 1]} : vector<32x32xf32> to vector<32x8xf32>
    %87 = vector.shape_cast %86 : vector<32x8xf32> to vector<2x16x8xf32>
    "tpu.trace_start"() <{level = 10 : i32, message = "bqd,bkd->bqk"}> : () -> ()
    %cst_33 = arith.constant dense<0.000000e+00> : vector<2x16x16xf32>
    %88 = tpu.matmul %83, %85, %cst_33 {dimension_numbers = #tpu.dot_dimension_numbers<[2], [2], [1], [1], [0, 0, 0, 1, 1, 1], [0], [0]>} : vector<2x16x8xf32>, vector<2x16x8xf32>, vector<2x16x16xf32> -> vector<2x16x16xf32>
    "tpu.trace_stop"() : () -> ()
    %cst_34 = arith.constant dense<0xFF800000> : vector<2x16xf32>
    %89 = vector.multi_reduction <maximumf>, %88, %cst_34 [2] : vector<2x16x16xf32> to vector<2x16xf32>
    %90 = vector.shape_cast %89 : vector<2x16xf32> to vector<2x16x1xf32>
    %91 = vector.broadcast %90 : vector<2x16x1xf32> to vector<2x16x16xf32>
    %92 = arith.subf %88, %91 : vector<2x16x16xf32>
    %93 = math.exp %92 : vector<2x16x16xf32>
    %cst_35 = arith.constant dense<0.000000e+00> : vector<2x16xf32>
    %94 = vector.multi_reduction <add>, %93, %cst_35 [2] : vector<2x16x16xf32> to vector<2x16xf32>
    %95 = vector.shape_cast %94 : vector<2x16xf32> to vector<2x16x1xf32>
    %96 = tpu.reciprocal %95 {approx = true} : vector<2x16x1xf32> -> vector<2x16x1xf32>
    %97 = vector.broadcast %96 : vector<2x16x1xf32> to vector<2x16x16xf32>
    %98 = arith.mulf %93, %97 : vector<2x16x16xf32>
    "tpu.trace_start"() <{level = 10 : i32, message = "bqk,bkd->bqd"}> : () -> ()
    %cst_36 = arith.constant dense<0.000000e+00> : vector<2x16x8xf32>
    %99 = tpu.matmul %98, %87, %cst_36 {dimension_numbers = #tpu.dot_dimension_numbers<[2], [1], [1], [2], [0, 0, 0, 1, 1, 2], [0], [0]>} : vector<2x16x16xf32>, vector<2x16x8xf32>, vector<2x16x8xf32> -> vector<2x16x8xf32>
    "tpu.trace_stop"() : () -> ()
    %100 = vector.shape_cast %99 : vector<2x16x8xf32> to vector<32x8xf32>
    %101 = vector.extract_strided_slice %34 {offsets = [2, 0, 0], sizes = [1, 8, 32], strides = [1, 1, 1]} : vector<4x8x32xf32> to vector<1x8x32xf32>
    %102 = vector.shape_cast %101 : vector<1x8x32xf32> to vector<8x32xf32>
    %cst_37 = arith.constant dense<0.000000e+00> : vector<32x32xf32>
    %103 = tpu.matmul %100, %102, %cst_37 {dimension_numbers = #tpu.dot_dimension_numbers<[1], [0], [0], [1], [0, 0, 1, 1], [], []>} : vector<32x8xf32>, vector<8x32xf32>, vector<32x32xf32> -> vector<32x32xf32>
    %104 = arith.addf %81, %103 : vector<32x32xf32>
    %105 = vector.extract_strided_slice %21 {offsets = [0, 24], sizes = [32, 8], strides = [1, 1]} : vector<32x32xf32> to vector<32x8xf32>
    %106 = vector.shape_cast %105 : vector<32x8xf32> to vector<2x16x8xf32>
    %107 = vector.extract_strided_slice %25 {offsets = [0, 24], sizes = [32, 8], strides = [1, 1]} : vector<32x32xf32> to vector<32x8xf32>
    %108 = vector.shape_cast %107 : vector<32x8xf32> to vector<2x16x8xf32>
    %109 = vector.extract_strided_slice %32 {offsets = [0, 24], sizes = [32, 8], strides = [1, 1]} : vector<32x32xf32> to vector<32x8xf32>
    %110 = vector.shape_cast %109 : vector<32x8xf32> to vector<2x16x8xf32>
    "tpu.trace_start"() <{level = 10 : i32, message = "bqd,bkd->bqk"}> : () -> ()
    %cst_38 = arith.constant dense<0.000000e+00> : vector<2x16x16xf32>
    %111 = tpu.matmul %106, %108, %cst_38 {dimension_numbers = #tpu.dot_dimension_numbers<[2], [2], [1], [1], [0, 0, 0, 1, 1, 1], [0], [0]>} : vector<2x16x8xf32>, vector<2x16x8xf32>, vector<2x16x16xf32> -> vector<2x16x16xf32>
    "tpu.trace_stop"() : () -> ()
    %cst_39 = arith.constant dense<0xFF800000> : vector<2x16xf32>
    %112 = vector.multi_reduction <maximumf>, %111, %cst_39 [2] : vector<2x16x16xf32> to vector<2x16xf32>
    %113 = vector.shape_cast %112 : vector<2x16xf32> to vector<2x16x1xf32>
    %114 = vector.broadcast %113 : vector<2x16x1xf32> to vector<2x16x16xf32>
    %115 = arith.subf %111, %114 : vector<2x16x16xf32>
    %116 = math.exp %115 : vector<2x16x16xf32>
    %cst_40 = arith.constant dense<0.000000e+00> : vector<2x16xf32>
    %117 = vector.multi_reduction <add>, %116, %cst_40 [2] : vector<2x16x16xf32> to vector<2x16xf32>
    %118 = vector.shape_cast %117 : vector<2x16xf32> to vector<2x16x1xf32>
    %119 = tpu.reciprocal %118 {approx = true} : vector<2x16x1xf32> -> vector<2x16x1xf32>
    %120 = vector.broadcast %119 : vector<2x16x1xf32> to vector<2x16x16xf32>
    %121 = arith.mulf %116, %120 : vector<2x16x16xf32>
    "tpu.trace_start"() <{level = 10 : i32, message = "bqk,bkd->bqd"}> : () -> ()
    %cst_41 = arith.constant dense<0.000000e+00> : vector<2x16x8xf32>
    %122 = tpu.matmul %121, %110, %cst_41 {dimension_numbers = #tpu.dot_dimension_numbers<[2], [1], [1], [2], [0, 0, 0, 1, 1, 2], [0], [0]>} : vector<2x16x16xf32>, vector<2x16x8xf32>, vector<2x16x8xf32> -> vector<2x16x8xf32>
    "tpu.trace_stop"() : () -> ()
    %123 = vector.shape_cast %122 : vector<2x16x8xf32> to vector<32x8xf32>
    %124 = vector.extract_strided_slice %34 {offsets = [3, 0, 0], sizes = [1, 8, 32], strides = [1, 1, 1]} : vector<4x8x32xf32> to vector<1x8x32xf32>
    %125 = vector.shape_cast %124 : vector<1x8x32xf32> to vector<8x32xf32>
    %cst_42 = arith.constant dense<0.000000e+00> : vector<32x32xf32>
    %126 = tpu.matmul %123, %125, %cst_42 {dimension_numbers = #tpu.dot_dimension_numbers<[1], [0], [0], [1], [0, 0, 1, 1], [], []>} : vector<32x8xf32>, vector<8x32xf32>, vector<32x32xf32> -> vector<32x32xf32>
    %127 = arith.addf %104, %126 : vector<32x32xf32>
    %c0_43 = arith.constant 0 : index
    %c0_44 = arith.constant 0 : index
    %c0_45 = arith.constant 0 : index
    %128 = vector.load %arg10[%c0_43, %c0_44, %c0_45] : memref<1x1x32xf32, #tpu.memory_space<vmem>>, vector<1x1x32xf32>
    %129 = vector.shape_cast %128 : vector<1x1x32xf32> to vector<1x32xf32>
    %130 = vector.broadcast %129 : vector<1x32xf32> to vector<32x32xf32>
    %131 = arith.addf %127, %130 : vector<32x32xf32>
    %132 = vector.shape_cast %3 : vector<2x16x32xf32> to vector<32x32xf32>
    %133 = arith.addf %132, %131 : vector<32x32xf32>
    %c0_46 = arith.constant 0 : index
    %c0_47 = arith.constant 0 : index
    %c0_48 = arith.constant 0 : index
    %134 = vector.load %arg11[%c0_46, %c0_47, %c0_48] : memref<1x1x32xf32, #tpu.memory_space<vmem>>, vector<1x1x32xf32>
    %135 = vector.shape_cast %134 : vector<1x1x32xf32> to vector<1x32xf32>
    %c0_49 = arith.constant 0 : index
    %c0_50 = arith.constant 0 : index
    %c0_51 = arith.constant 0 : index
    %136 = vector.load %arg12[%c0_49, %c0_50, %c0_51] : memref<1x1x32xf32, #tpu.memory_space<vmem>>, vector<1x1x32xf32>
    %137 = vector.shape_cast %136 : vector<1x1x32xf32> to vector<1x32xf32>
    %cst_52 = arith.constant dense<0.000000e+00> : vector<32xf32>
    %138 = vector.multi_reduction <add>, %133, %cst_52 [1] : vector<32x32xf32> to vector<32xf32>
    %139 = vector.shape_cast %138 : vector<32xf32> to vector<32x1xf32>
    %cst_53 = arith.constant 3.200000e+01 : f32
    %140 = vector.broadcast %cst_53 : f32 to vector<32x1xf32>
    %141 = arith.divf %139, %140 : vector<32x1xf32>
    %142 = vector.broadcast %141 : vector<32x1xf32> to vector<32x32xf32>
    %143 = arith.subf %133, %142 : vector<32x32xf32>
    %144 = arith.mulf %143, %143 : vector<32x32xf32>
    %cst_54 = arith.constant dense<0.000000e+00> : vector<32xf32>
    %145 = vector.multi_reduction <add>, %144, %cst_54 [1] : vector<32x32xf32> to vector<32xf32>
    %146 = vector.shape_cast %145 : vector<32xf32> to vector<32x1xf32>
    %cst_55 = arith.constant 3.200000e+01 : f32
    %147 = vector.broadcast %cst_55 : f32 to vector<32x1xf32>
    %148 = arith.divf %146, %147 : vector<32x1xf32>
    %cst_56 = arith.constant 9.99999974E-6 : f32
    %149 = vector.broadcast %cst_56 : f32 to vector<32x1xf32>
    %150 = arith.addf %148, %149 : vector<32x1xf32>
    %151 = math.rsqrt %150 : vector<32x1xf32>
    %152 = vector.broadcast %151 : vector<32x1xf32> to vector<32x32xf32>
    %153 = arith.mulf %143, %152 : vector<32x32xf32>
    %154 = vector.broadcast %135 : vector<1x32xf32> to vector<32x32xf32>
    %155 = arith.mulf %153, %154 : vector<32x32xf32>
    %156 = vector.broadcast %137 : vector<1x32xf32> to vector<32x32xf32>
    %157 = arith.addf %155, %156 : vector<32x32xf32>
    %c0_57 = arith.constant 0 : index
    %c0_58 = arith.constant 0 : index
    %c0_59 = arith.constant 0 : index
    %158 = vector.load %arg13[%c0_57, %c0_58, %c0_59] : memref<1x32x64xf32, #tpu.memory_space<vmem>>, vector<1x32x64xf32>
    %159 = vector.shape_cast %158 : vector<1x32x64xf32> to vector<32x64xf32>
    %c0_60 = arith.constant 0 : index
    %c0_61 = arith.constant 0 : index
    %c0_62 = arith.constant 0 : index
    %160 = vector.load %arg14[%c0_60, %c0_61, %c0_62] : memref<1x1x64xf32, #tpu.memory_space<vmem>>, vector<1x1x64xf32>
    %161 = vector.shape_cast %160 : vector<1x1x64xf32> to vector<1x64xf32>
    %cst_63 = arith.constant dense<0.000000e+00> : vector<32x64xf32>
    %162 = tpu.matmul %157, %159, %cst_63 {dimension_numbers = #tpu.dot_dimension_numbers<[1], [0], [0], [1], [0, 0, 1, 1], [], []>} : vector<32x32xf32>, vector<32x64xf32>, vector<32x64xf32> -> vector<32x64xf32>
    %163 = vector.broadcast %161 : vector<1x64xf32> to vector<32x64xf32>
    %164 = arith.addf %162, %163 : vector<32x64xf32>
    %cst_64 = arith.constant 0.000000e+00 : f32
    %165 = vector.broadcast %cst_64 : f32 to vector<32x64xf32>
    %166 = arith.maximumf %164, %165 : vector<32x64xf32>
    %c0_65 = arith.constant 0 : index
    %c0_66 = arith.constant 0 : index
    %c0_67 = arith.constant 0 : index
    %167 = vector.load %arg15[%c0_65, %c0_66, %c0_67] : memref<1x64x32xf32, #tpu.memory_space<vmem>>, vector<1x64x32xf32>
    %168 = vector.shape_cast %167 : vector<1x64x32xf32> to vector<64x32xf32>
    %c0_68 = arith.constant 0 : index
    %c0_69 = arith.constant 0 : index
    %c0_70 = arith.constant 0 : index
    %169 = vector.load %arg16[%c0_68, %c0_69, %c0_70] : memref<1x1x32xf32, #tpu.memory_space<vmem>>, vector<1x1x32xf32>
    %170 = vector.shape_cast %169 : vector<1x1x32xf32> to vector<1x32xf32>
    %cst_71 = arith.constant dense<0.000000e+00> : vector<32x32xf32>
    %171 = tpu.matmul %166, %168, %cst_71 {dimension_numbers = #tpu.dot_dimension_numbers<[1], [0], [0], [1], [0, 0, 1, 1], [], []>} : vector<32x64xf32>, vector<64x32xf32>, vector<32x32xf32> -> vector<32x32xf32>
    %172 = vector.broadcast %170 : vector<1x32xf32> to vector<32x32xf32>
    %173 = arith.addf %171, %172 : vector<32x32xf32>
    %174 = arith.addf %157, %173 : vector<32x32xf32>
    %c0_72 = arith.constant 0 : index
    %c0_73 = arith.constant 0 : index
    %c0_74 = arith.constant 0 : index
    %175 = vector.load %arg17[%c0_72, %c0_73, %c0_74] : memref<1x1x32xf32, #tpu.memory_space<vmem>>, vector<1x1x32xf32>
    %176 = vector.shape_cast %175 : vector<1x1x32xf32> to vector<1x32xf32>
    %c0_75 = arith.constant 0 : index
    %c0_76 = arith.constant 0 : index
    %c0_77 = arith.constant 0 : index
    %177 = vector.load %arg18[%c0_75, %c0_76, %c0_77] : memref<1x1x32xf32, #tpu.memory_space<vmem>>, vector<1x1x32xf32>
    %178 = vector.shape_cast %177 : vector<1x1x32xf32> to vector<1x32xf32>
    %cst_78 = arith.constant dense<0.000000e+00> : vector<32xf32>
    %179 = vector.multi_reduction <add>, %174, %cst_78 [1] : vector<32x32xf32> to vector<32xf32>
    %180 = vector.shape_cast %179 : vector<32xf32> to vector<32x1xf32>
    %cst_79 = arith.constant 3.200000e+01 : f32
    %181 = vector.broadcast %cst_79 : f32 to vector<32x1xf32>
    %182 = arith.divf %180, %181 : vector<32x1xf32>
    %183 = vector.broadcast %182 : vector<32x1xf32> to vector<32x32xf32>
    %184 = arith.subf %174, %183 : vector<32x32xf32>
    %185 = arith.mulf %184, %184 : vector<32x32xf32>
    %cst_80 = arith.constant dense<0.000000e+00> : vector<32xf32>
    %186 = vector.multi_reduction <add>, %185, %cst_80 [1] : vector<32x32xf32> to vector<32xf32>
    %187 = vector.shape_cast %186 : vector<32xf32> to vector<32x1xf32>
    %cst_81 = arith.constant 3.200000e+01 : f32
    %188 = vector.broadcast %cst_81 : f32 to vector<32x1xf32>
    %189 = arith.divf %187, %188 : vector<32x1xf32>
    %cst_82 = arith.constant 9.99999974E-6 : f32
    %190 = vector.broadcast %cst_82 : f32 to vector<32x1xf32>
    %191 = arith.addf %189, %190 : vector<32x1xf32>
    %192 = math.rsqrt %191 : vector<32x1xf32>
    %193 = vector.broadcast %192 : vector<32x1xf32> to vector<32x32xf32>
    %194 = arith.mulf %184, %193 : vector<32x32xf32>
    %195 = vector.broadcast %176 : vector<1x32xf32> to vector<32x32xf32>
    %196 = arith.mulf %194, %195 : vector<32x32xf32>
    %197 = vector.broadcast %178 : vector<1x32xf32> to vector<32x32xf32>
    %198 = arith.addf %196, %197 : vector<32x32xf32>
    %199 = vector.shape_cast %198 : vector<32x32xf32> to vector<2x16x32xf32>
    %c0_83 = arith.constant 0 : index
    %c0_84 = arith.constant 0 : index
    %c0_85 = arith.constant 0 : index
    %200 = vector.load %arg21[%c0_83, %c0_84, %c0_85] : memref<2x16x32xf32, #tpu.memory_space<vmem>>, vector<2x16x32xf32>
    tpu.vector_store %arg21[%c0_83, %c0_84, %c0_85], %199 {strides = array<i32>} : memref<2x16x32xf32, #tpu.memory_space<vmem>>, vector<2x16x32xf32>,
    %201 = vector.extract_strided_slice %199 {offsets = [0, 0, 0], sizes = [1, 16, 32], strides = [1, 1, 1]} : vector<2x16x32xf32> to vector<1x16x32xf32>
    %202 = vector.shape_cast %201 : vector<1x16x32xf32> to vector<16x32xf32>
    %c0_86 = arith.constant 0 : index
    %c0_87 = arith.constant 0 : index
    %c0_88 = arith.constant 0 : index
    %203 = vector.load %arg19[%c0_86, %c0_87, %c0_88] : memref<1x16x32xf32, #tpu.memory_space<vmem>>, vector<1x16x32xf32>
    %204 = vector.shape_cast %203 : vector<1x16x32xf32> to vector<16x32xf32>
    %205 = vector.shape_cast %202 : vector<16x32xf32> to vector<1x16x32xf32>
    tpu.vector_store %arg19[%c0_86, %c0_87, %c0_88], %205 {strides = array<i32>} : memref<1x16x32xf32, #tpu.memory_space<vmem>>, vector<1x16x32xf32>,
    %206 = vector.extract_strided_slice %199 {offsets = [1, 0, 0], sizes = [1, 16, 32], strides = [1, 1, 1]} : vector<2x16x32xf32> to vector<1x16x32xf32>
    %207 = vector.shape_cast %206 : vector<1x16x32xf32> to vector<16x32xf32>
    %c0_89 = arith.constant 0 : index
    %c0_90 = arith.constant 0 : index
    %c0_91 = arith.constant 0 : index
    %208 = vector.load %arg20[%c0_89, %c0_90, %c0_91] : memref<1x16x32xf32, #tpu.memory_space<vmem>>, vector<1x16x32xf32>
    %209 = vector.shape_cast %208 : vector<1x16x32xf32> to vector<16x32xf32>
    %210 = vector.shape_cast %207 : vector<16x32xf32> to vector<1x16x32xf32>
    tpu.vector_store %arg20[%c0_89, %c0_90, %c0_91], %210 {strides = array<i32>} : memref<1x16x32xf32, #tpu.memory_space<vmem>>, vector<1x16x32xf32>,
    return
  }
  func.func @transform_0(%arg0: i32, %arg1: i32) -> (i32, i32, i32) {
    %c0_i32 = arith.constant 0 : i32
    %c0_i32_0 = arith.constant 0 : i32
    %c0_i32_1 = arith.constant 0 : i32
    return %arg0, %c0_i32, %c0_i32_0 : i32, i32, i32
  }
  func.func @transform_1(%arg0: i32, %arg1: i32) -> (i32, i32, i32) {
    %c0_i32 = arith.constant 0 : i32
    %c0_i32_0 = arith.constant 0 : i32
    %c0_i32_1 = arith.constant 0 : i32
    return %arg0, %c0_i32, %c0_i32_0 : i32, i32, i32
  }
  func.func @transform_2(%arg0: i32, %arg1: i32) -> (i32, i32) {
    %c0_i32 = arith.constant 0 : i32
    %c0_i32_0 = arith.constant 0 : i32
    %c0_i32_1 = arith.constant 0 : i32
    return %c0_i32, %c0_i32_0 : i32, i32
  }
  func.func @transform_3(%arg0: i32, %arg1: i32) -> (i32, i32, i32) {
    %c0_i32 = arith.constant 0 : i32
    %c0_i32_0 = arith.constant 0 : i32
    %c0_i32_1 = arith.constant 0 : i32
    return %arg1, %c0_i32, %c0_i32_0 : i32, i32, i32
  }
  func.func @transform_4(%arg0: i32, %arg1: i32) -> (i32, i32, i32) {
    %c0_i32 = arith.constant 0 : i32
    %c0_i32_0 = arith.constant 0 : i32
    %c0_i32_1 = arith.constant 0 : i32
    return %arg1, %c0_i32, %c0_i32_0 : i32, i32, i32
  }
  func.func @transform_5(%arg0: i32, %arg1: i32) -> (i32, i32, i32) {
    %c0_i32 = arith.constant 0 : i32
    %c0_i32_0 = arith.constant 0 : i32
    %c0_i32_1 = arith.constant 0 : i32
    return %arg1, %c0_i32, %c0_i32_0 : i32, i32, i32
  }
  func.func @transform_6(%arg0: i32, %arg1: i32) -> (i32, i32, i32) {
    %c0_i32 = arith.constant 0 : i32
    %c0_i32_0 = arith.constant 0 : i32
    %c0_i32_1 = arith.constant 0 : i32
    return %arg1, %c0_i32, %c0_i32_0 : i32, i32, i32
  }
  func.func @transform_7(%arg0: i32, %arg1: i32) -> (i32, i32, i32, i32) {
    %c0_i32 = arith.constant 0 : i32
    %c0_i32_0 = arith.constant 0 : i32
    %c0_i32_1 = arith.constant 0 : i32
    %c0_i32_2 = arith.constant 0 : i32
    return %arg1, %c0_i32, %c0_i32_0, %c0_i32_1 : i32, i32, i32, i32
  }
  func.func @transform_8(%arg0: i32, %arg1: i32) -> (i32, i32, i32) {
    %c0_i32 = arith.constant 0 : i32
    %c0_i32_0 = arith.constant 0 : i32
    %c0_i32_1 = arith.constant 0 : i32
    return %arg1, %c0_i32, %c0_i32_0 : i32, i32, i32
  }
  func.func @transform_9(%arg0: i32, %arg1: i32) -> (i32, i32, i32) {
    %c0_i32 = arith.constant 0 : i32
    %c0_i32_0 = arith.constant 0 : i32
    %c0_i32_1 = arith.constant 0 : i32
    return %arg1, %c0_i32, %c0_i32_0 : i32, i32, i32
  }
  func.func @transform_10(%arg0: i32, %arg1: i32) -> (i32, i32, i32) {
    %c0_i32 = arith.constant 0 : i32
    %c0_i32_0 = arith.constant 0 : i32
    %c0_i32_1 = arith.constant 0 : i32
    return %arg1, %c0_i32, %c0_i32_0 : i32, i32, i32
  }
  func.func @transform_11(%arg0: i32, %arg1: i32) -> (i32, i32, i32) {
    %c0_i32 = arith.constant 0 : i32
    %c0_i32_0 = arith.constant 0 : i32
    %c0_i32_1 = arith.constant 0 : i32
    return %arg1, %c0_i32, %c0_i32_0 : i32, i32, i32
  }
  func.func @transform_12(%arg0: i32, %arg1: i32) -> (i32, i32, i32) {
    %c0_i32 = arith.constant 0 : i32
    %c0_i32_0 = arith.constant 0 : i32
    %c0_i32_1 = arith.constant 0 : i32
    return %arg1, %c0_i32, %c0_i32_0 : i32, i32, i32
  }
  func.func @transform_13(%arg0: i32, %arg1: i32) -> (i32, i32, i32) {
    %c0_i32 = arith.constant 0 : i32
    %c0_i32_0 = arith.constant 0 : i32
    %c0_i32_1 = arith.constant 0 : i32
    return %arg1, %c0_i32, %c0_i32_0 : i32, i32, i32
  }
  func.func @transform_14(%arg0: i32, %arg1: i32) -> (i32, i32, i32) {
    %c0_i32 = arith.constant 0 : i32
    %c0_i32_0 = arith.constant 0 : i32
    %c0_i32_1 = arith.constant 0 : i32
    return %arg1, %c0_i32, %c0_i32_0 : i32, i32, i32
  }
  func.func @transform_15(%arg0: i32, %arg1: i32) -> (i32, i32, i32) {
    %c0_i32 = arith.constant 0 : i32
    %c0_i32_0 = arith.constant 0 : i32
    %c0_i32_1 = arith.constant 0 : i32
    return %arg1, %c0_i32, %c0_i32_0 : i32, i32, i32
  }
  func.func @transform_16(%arg0: i32, %arg1: i32) -> (i32, i32, i32) {
    %c0_i32 = arith.constant 0 : i32
    %c0_i32_0 = arith.constant 0 : i32
    %c0_i32_1 = arith.constant 0 : i32
    return %arg1, %c0_i32, %c0_i32_0 : i32, i32, i32
  }
  func.func @transform_17(%arg0: i32, %arg1: i32) -> (i32, i32, i32) {
    %c0_i32 = arith.constant 0 : i32
    %c0_i32_0 = arith.constant 0 : i32
    %c0_i32_1 = arith.constant 0 : i32
    return %arg0, %c0_i32, %c0_i32_0 : i32, i32, i32
  }
  func.func @transform_18(%arg0: i32, %arg1: i32) -> (i32, i32, i32) {
    %c0_i32 = arith.constant 0 : i32
    %c0_i32_0 = arith.constant 0 : i32
    %c0_i32_1 = arith.constant 0 : i32
    return %arg0, %c0_i32, %c0_i32_0 : i32, i32, i32
  }
}

</mosaic_0001>

<llo_original>
// kernel: tpu_custom_call.1
$region0: #{tpu_custom_call.1}
  #allocation0 [shape = 'u32[]', space=smem, size = 0x4, offset = 0x4, fixed_abs, tag = 'smem constant byte address 0x4 - core index']
  #allocation1 [shape = 'u32[144,128]{1,0:T(1,128)}', space=vmem, size = 0x12000, scoped, tag = 'internal scratch']
  #allocation2 [shape = 'f32[2,16,32]{2,1,0:T(8,128)}', space=vmem, size = 0x4000, scoped, tag = 'scratch operand']
  %s0 = inlined_call_operand.hbm [shape: f32[2,16,32], index: 0, kind: input, shape index: {}]
  %s1 = inlined_call_operand.hbm [shape: f32[2,16,32], index: 1, kind: input, shape index: {}]
  %s2 = inlined_call_operand.hbm [shape: f32[16,32], index: 2, kind: input, shape index: {}]
  %s3 = inlined_call_operand.vmem [shape: f32[2,32,64], index: 3, kind: input, shape index: {}]
  %s4 = inlined_call_operand.vmem [shape: f32[2,1,64], index: 4, kind: input, shape index: {}]
  %s5 = inlined_call_operand.vmem [shape: f32[2,32,32], index: 5, kind: input, shape index: {}]
  %s6 = inlined_call_operand.vmem [shape: f32[2,1,32], index: 6, kind: input, shape index: {}]
  %s7 = inlined_call_operand.vmem [shape: f32[2,4,8,32], index: 7, kind: input, shape index: {}]
  %s8 = inlined_call_operand.vmem [shape: f32[2,1,32], index: 8, kind: input, shape index: {}]
  %s9 = inlined_call_operand.vmem [shape: f32[2,1,32], index: 9, kind: input, shape index: {}]
  %s10 = inlined_call_operand.vmem [shape: f32[2,1,32], index: 10, kind: input, shape index: {}]
  %s11 = inlined_call_operand.hbm [shape: f32[2,32,64], index: 11, kind: input, shape index: {}]
  %s12 = inlined_call_operand.vmem [shape: f32[2,1,64], index: 12, kind: input, shape index: {}]
  %s13 = inlined_call_operand.vmem [shape: f32[2,64,32], index: 13, kind: input, shape index: {}]
  %s14 = inlined_call_operand.vmem [shape: f32[2,1,32], index: 14, kind: input, shape index: {}]
  %s15 = inlined_call_operand.vmem [shape: f32[2,1,32], index: 15, kind: input, shape index: {}]
  %s16 = inlined_call_operand.vmem [shape: f32[2,1,32], index: 16, kind: input, shape index: {}]
  %s17 = inlined_call_operand.hbm [shape: f32[2,16,32], index: 17, kind: output, shape index: {0}]
  %s18 = inlined_call_operand.hbm [shape: f32[2,16,32], index: 18, kind: output, shape index: {1}]
  %19 = xla_tuple %s17, %s18
  %s20 = sld [smem:[#allocation0]]
  $region129: #{tpu_custom_call.1} parent=0
    _
  %s22 = ssub.s32 1, %s20
  %s23 = scalar_select 0, %s22, %s20
  $region1: #{tpu_custom_call.1} parent=0
    #allocation3 [shape = 'u8[16384]{0}', space=vmem, size = 0x4000, scoped, tag = 'input window, operand 0']
    #allocation4 [shape = 's32[2]{0}', space=sflag, size = 0x8, scoped, tag = 'scoped memory for tpu_custom_call.1']
    #allocation5 [shape = 's32[2]{0}', space=sflag, size = 0x8, scoped, tag = 'scoped memory for tpu_custom_call.1']
    #allocation6 [shape = 'u8[16384]{0}', space=vmem, size = 0x4000, scoped, tag = 'input window, operand 1']
    #allocation7 [shape = 's32[2]{0}', space=sflag, size = 0x8, scoped, tag = 'scoped memory for tpu_custom_call.1']
    #allocation8 [shape = 'u8[8192]{0}', space=vmem, size = 0x2000, scoped, tag = 'input window, operand 2, single buffered']
    #allocation9 [shape = 'u8[32768]{0}', space=vmem, size = 0x8000, scoped, tag = 'input window, operand 11']
    #allocation10 [shape = 's32[2]{0}', space=sflag, size = 0x8, scoped, tag = 'scoped memory for tpu_custom_call.1']
    #allocation11 [shape = 'u8[16384]{0}', space=vmem, size = 0x4000, scoped, tag = 'output window, operand 0']
    #allocation12 [shape = 'u8[16384]{0}', space=vmem, size = 0x4000, scoped, tag = 'output window, operand 1']
    #allocation13 [shape = 's32[2]{0}', space=sflag, size = 0x8, scoped, tag = 'scoped memory for tpu_custom_call.1']
    %24 = vsyncpa [#allocation4], 0
    %s25 = scalar_lea.sflag [#allocation4], 1
    %26 = vsyncpa %s25, 0
    %27 = vsyncpa [#allocation7], 0
    %s28 = scalar_lea.sflag [#allocation7], 1
    %29 = vsyncpa %s28, 0
    %30 = vsyncpa [#allocation10], 0
    %s31 = scalar_lea.sflag [#allocation10], 1
    %32 = vsyncpa %s31, 0
    %33 = vsyncpa [#allocation5], 0
    %s34 = scalar_lea.sflag [#allocation5], 1
    %35 = vsyncpa %s34, 0
    %36 = vsyncpa [#allocation13], 0
    %s37 = scalar_lea.sflag [#allocation13], 1
    %38 = vsyncpa %s37, 0
    loop: start=0, step=1, limit=6
    $region2: #{tpu_custom_call.1} parent=1 // loop_pre_header
      _
    $region3: #{tpu_custom_call.1} parent=1 // loop_header
      %s40 = sphi 0, %s44
      %p41 = scmp.ge.s32.totalorder %s40, 6
      %s47 = sphi 0, %s59
      %s48 = sphi 0, %s55
      %s49 = sphi 0, %s47
      %s50 = sphi 0, %s48
      %s51 = sphi 0, %s49
      %s52 = sphi 0, %s50
      %s62 = sphi 0, %s64
      %s65 = sphi 0, %s62
      %s66 = sphi 0, %s65
      %s82 = sphi 0, %s66
      %s88 = sphi 0, %s90
      %s91 = sphi 0, %s88
      %s92 = sphi 0, %s91
      %s108 = sphi 0, %s92
      %s112 = sphi 0, %s112
      %s114 = sphi 0, %s112
      %s115 = sphi 0, %s114
      %s129 = sphi 0, %s115
      %s135 = sphi 0, %s137
      %s138 = sphi 0, %s135
      %s139 = sphi 0, %s138
      %s155 = sphi 0, %s139
      %s161 = sphi 0, %s163
      %s164 = sphi 0, %s161
      %s165 = sphi 0, %s164
      %s181 = sphi 0, %s165
      %s187 = sphi 0, %s189
      %s190 = sphi 0, %s187
      %s191 = sphi 0, %s190
      %s207 = sphi 0, %s191
      %s213 = sphi 0, %s215
      %s216 = sphi 0, %s213
      %s217 = sphi 0, %s216
      %s233 = sphi 0, %s217
      %s239 = sphi 0, %s241
      %s242 = sphi 0, %s239
      %s243 = sphi 0, %s242
      %s259 = sphi 0, %s243
      %s265 = sphi 0, %s267
      %s268 = sphi 0, %s265
      %s269 = sphi 0, %s268
      %s285 = sphi 0, %s269
      %s291 = sphi 0, %s293
      %s294 = sphi 0, %s291
      %s295 = sphi 0, %s294
      %s311 = sphi 0, %s295
      %s317 = sphi 0, %s319
      %s320 = sphi 0, %s317
      %s321 = sphi 0, %s320
      %s337 = sphi 0, %s321
      %s343 = sphi 0, %s345
      %s346 = sphi 0, %s343
      %s347 = sphi 0, %s346
      %s363 = sphi 0, %s347
      %s369 = sphi 0, %s371
      %s372 = sphi 0, %s369
      %s373 = sphi 0, %s372
      %s389 = sphi 0, %s373
      %s395 = sphi 0, %s397
      %s398 = sphi 0, %s395
      %s399 = sphi 0, %s398
      %s415 = sphi 0, %s399
      %s421 = sphi 0, %s423
      %s424 = sphi 0, %s421
      %s425 = sphi 0, %s424
      %s441 = sphi 0, %s425
      %s447 = sphi 0, %s449
      %s450 = sphi 0, %s447
      %s451 = sphi 0, %s450
      %s467 = sphi 0, %s451
      %s473 = sphi 0, %s475
      %s476 = sphi 0, %s473
      %s477 = sphi 0, %s476
      %s493 = sphi 0, %s477
      %s499 = sphi 0, %s501
      %s502 = sphi 0, %s499
      %s503 = sphi 0, %s502
      %s519 = sphi 0, %s503
      %s525 = sphi 0, %s527
      %s528 = sphi 0, %s525
      %s529 = sphi 0, %s528
      %s545 = sphi 0, %s529
    $region4: #{tpu_custom_call.1} parent=1 // loop_header_branch
      %43 = sbr.rel (%p41) target = $region8
    $region5: #{tpu_custom_call.1} parent=1 // loop_body
      %s45 = ssub.s32 %s40, 1
      %s46 = ssub.s32 %s40, 2
      %s53 = sadd.s32 1, %s48
      %p54 = scmp.ge.s32.totalorder %s53, 2
      %s55 = scalar_select %p54, 0, %s53
      %s56 = sadd.s32 1, %s47
      %s57 = scalar_select %p54, %s56, %s47
      %p58 = scmp.ge.s32.totalorder %s57, 2
      %s59 = scalar_select %p58, 0, %s57
      %s60 = ssub.s32 %s47, %s59
      %p61 = scmp.eq.s32.totalorder %s60, 0
      %s63 = sadd.s32 %s62, 1
      %s64 = scalar_select %p61, %s62, %s63
      %p67 = pneg %p61
      %p68 = scmp.eq.s32.totalorder %s40, 3
      %p69 = por %p67, %p68
      %p70 = scmp.ne.s32.totalorder %s62, %s65
      %p71 = scmp.eq.s32.totalorder %s40, 0
      %p72 = por %p70, %p71
      %p73 = scmp.ne.s32.totalorder %s62, %s65
      %p74 = scmp.eq.s32.totalorder %s45, 3
      %p75 = por %p73, %p74
      %p76 = scmp.ne.s32.totalorder %s65, %s66
      %p77 = scmp.eq.s32.totalorder %s45, 0
      %p78 = por %p76, %p77
      %p79 = scmp.ne.s32.totalorder %s65, %s66
      %p80 = scmp.eq.s32.totalorder %s46, 3
      %p81 = por %p79, %p80
      %p83 = scmp.ne.s32.totalorder %s66, %s82
      %p84 = scmp.eq.s32.totalorder %s46, 0
      %p85 = por %p83, %p84
      %s86 = ssub.s32 %s47, %s59
      %p87 = scmp.eq.s32.totalorder %s86, 0
      %s89 = sadd.s32 %s88, 1
      %s90 = scalar_select %p87, %s88, %s89
      %p93 = pneg %p87
      %p94 = scmp.eq.s32.totalorder %s40, 3
      %p95 = por %p93, %p94
      %p96 = scmp.ne.s32.totalorder %s88, %s91
      %p97 = scmp.eq.s32.totalorder %s40, 0
      %p98 = por %p96, %p97
      %p99 = scmp.ne.s32.totalorder %s88, %s91
      %p100 = scmp.eq.s32.totalorder %s45, 3
      %p101 = por %p99, %p100
      %p102 = scmp.ne.s32.totalorder %s91, %s92
      %p103 = scmp.eq.s32.totalorder %s45, 0
      %p104 = por %p102, %p103
      %p105 = scmp.ne.s32.totalorder %s91, %s92
      %p106 = scmp.eq.s32.totalorder %s46, 3
      %p107 = por %p105, %p106
      %p109 = scmp.ne.s32.totalorder %s92, %s108
      %p110 = scmp.eq.s32.totalorder %s46, 0
      %p111 = por %p109, %p110
      %s113 = sadd.s32 %s112, 1
      %p116 = scmp.eq.s32.totalorder %s40, 3
      %p117 = scmp.ne.s32.totalorder %s112, %s114
      %p118 = scmp.eq.s32.totalorder %s40, 0
      %p119 = por %p117, %p118
      %p120 = scmp.ne.s32.totalorder %s112, %s114
      %p121 = scmp.eq.s32.totalorder %s45, 3
      %p122 = por %p120, %p121
      %p123 = scmp.ne.s32.totalorder %s114, %s115
      %p124 = scmp.eq.s32.totalorder %s45, 0
      %p125 = por %p123, %p124
      %p126 = scmp.ne.s32.totalorder %s114, %s115
      %p127 = scmp.eq.s32.totalorder %s46, 3
      %p128 = por %p126, %p127
      %p130 = scmp.ne.s32.totalorder %s115, %s129
      %p131 = scmp.eq.s32.totalorder %s46, 0
      %p132 = por %p130, %p131
      %s133 = ssub.s32 %s48, %s55
      %p134 = scmp.eq.s32.totalorder %s133, 0
      %s136 = sadd.s32 %s135, 1
      %s137 = scalar_select %p134, %s135, %s136
      %p140 = pneg %p134
      %p141 = scmp.eq.s32.totalorder %s40, 3
      %p142 = por %p140, %p141
      %p143 = scmp.ne.s32.totalorder %s135, %s138
      %p144 = scmp.eq.s32.totalorder %s40, 0
      %p145 = por %p143, %p144
      %p146 = scmp.ne.s32.totalorder %s135, %s138
      %p147 = scmp.eq.s32.totalorder %s45, 3
      %p148 = por %p146, %p147
      %p149 = scmp.ne.s32.totalorder %s138, %s139
      %p150 = scmp.eq.s32.totalorder %s45, 0
      %p151 = por %p149, %p150
      %p152 = scmp.ne.s32.totalorder %s138, %s139
      %p153 = scmp.eq.s32.totalorder %s46, 3
      %p154 = por %p152, %p153
      %p156 = scmp.ne.s32.totalorder %s139, %s155
      %p157 = scmp.eq.s32.totalorder %s46, 0
      %p158 = por %p156, %p157
      %s159 = ssub.s32 %s48, %s55
      %p160 = scmp.eq.s32.totalorder %s159, 0
      %s162 = sadd.s32 %s161, 1
      %s163 = scalar_select %p160, %s161, %s162
      %p166 = pneg %p160
      %p167 = scmp.eq.s32.totalorder %s40, 3
      %p168 = por %p166, %p167
      %p169 = scmp.ne.s32.totalorder %s161, %s164
      %p170 = scmp.eq.s32.totalorder %s40, 0
      %p171 = por %p169, %p170
      %p172 = scmp.ne.s32.totalorder %s161, %s164
      %p173 = scmp.eq.s32.totalorder %s45, 3
      %p174 = por %p172, %p173
      %p175 = scmp.ne.s32.totalorder %s164, %s165
      %p176 = scmp.eq.s32.totalorder %s45, 0
      %p177 = por %p175, %p176
      %p178 = scmp.ne.s32.totalorder %s164, %s165
      %p179 = scmp.eq.s32.totalorder %s46, 3
      %p180 = por %p178, %p179
      %p182 = scmp.ne.s32.totalorder %s165, %s181
      %p183 = scmp.eq.s32.totalorder %s46, 0
      %p184 = por %p182, %p183
      %s185 = ssub.s32 %s48, %s55
      %p186 = scmp.eq.s32.totalorder %s185, 0
      %s188 = sadd.s32 %s187, 1
      %s189 = scalar_select %p186, %s187, %s188
      %p192 = pneg %p186
      %p193 = scmp.eq.s32.totalorder %s40, 3
      %p194 = por %p192, %p193
      %p195 = scmp.ne.s32.totalorder %s187, %s190
      %p196 = scmp.eq.s32.totalorder %s40, 0
      %p197 = por %p195, %p196
      %p198 = scmp.ne.s32.totalorder %s187, %s190
      %p199 = scmp.eq.s32.totalorder %s45, 3
      %p200 = por %p198, %p199
      %p201 = scmp.ne.s32.totalorder %s190, %s191
      %p202 = scmp.eq.s32.totalorder %s45, 0
      %p203 = por %p201, %p202
      %p204 = scmp.ne.s32.totalorder %s190, %s191
      %p205 = scmp.eq.s32.totalorder %s46, 3
      %p206 = por %p204, %p205
      %p208 = scmp.ne.s32.totalorder %s191, %s207
      %p209 = scmp.eq.s32.totalorder %s46, 0
      %p210 = por %p208, %p209
      %s211 = ssub.s32 %s48, %s55
      %p212 = scmp.eq.s32.totalorder %s211, 0
      %s214 = sadd.s32 %s213, 1
      %s215 = scalar_select %p212, %s213, %s214
      %p218 = pneg %p212
      %p219 = scmp.eq.s32.totalorder %s40, 3
      %p220 = por %p218, %p219
      %p221 = scmp.ne.s32.totalorder %s213, %s216
      %p222 = scmp.eq.s32.totalorder %s40, 0
      %p223 = por %p221, %p222
      %p224 = scmp.ne.s32.totalorder %s213, %s216
      %p225 = scmp.eq.s32.totalorder %s45, 3
      %p226 = por %p224, %p225
      %p227 = scmp.ne.s32.totalorder %s216, %s217
      %p228 = scmp.eq.s32.totalorder %s45, 0
      %p229 = por %p227, %p228
      %p230 = scmp.ne.s32.totalorder %s216, %s217
      %p231 = scmp.eq.s32.totalorder %s46, 3
      %p232 = por %p230, %p231
      %p234 = scmp.ne.s32.totalorder %s217, %s233
      %p235 = scmp.eq.s32.totalorder %s46, 0
      %p236 = por %p234, %p235
      %s237 = ssub.s32 %s48, %s55
      %p238 = scmp.eq.s32.totalorder %s237, 0
      %s240 = sadd.s32 %s239, 1
      %s241 = scalar_select %p238, %s239, %s240
      %p244 = pneg %p238
      %p245 = scmp.eq.s32.totalorder %s40, 3
      %p246 = por %p244, %p245
      %p247 = scmp.ne.s32.totalorder %s239, %s242
      %p248 = scmp.eq.s32.totalorder %s40, 0
      %p249 = por %p247, %p248
      %p250 = scmp.ne.s32.totalorder %s239, %s242
      %p251 = scmp.eq.s32.totalorder %s45, 3
      %p252 = por %p250, %p251
      %p253 = scmp.ne.s32.totalorder %s242, %s243
      %p254 = scmp.eq.s32.totalorder %s45, 0
      %p255 = por %p253, %p254
      %p256 = scmp.ne.s32.totalorder %s242, %s243
      %p257 = scmp.eq.s32.totalorder %s46, 3
      %p258 = por %p256, %p257
      %p260 = scmp.ne.s32.totalorder %s243, %s259
      %p261 = scmp.eq.s32.totalorder %s46, 0
      %p262 = por %p260, %p261
      %s263 = ssub.s32 %s48, %s55
      %p264 = scmp.eq.s32.totalorder %s263, 0
      %s266 = sadd.s32 %s265, 1
      %s267 = scalar_select %p264, %s265, %s266
      %p270 = pneg %p264
      %p271 = scmp.eq.s32.totalorder %s40, 3
      %p272 = por %p270, %p271
      %p273 = scmp.ne.s32.totalorder %s265, %s268
      %p274 = scmp.eq.s32.totalorder %s40, 0
      %p275 = por %p273, %p274
      %p276 = scmp.ne.s32.totalorder %s265, %s268
      %p277 = scmp.eq.s32.totalorder %s45, 3
      %p278 = por %p276, %p277
      %p279 = scmp.ne.s32.totalorder %s268, %s269
      %p280 = scmp.eq.s32.totalorder %s45, 0
      %p281 = por %p279, %p280
      %p282 = scmp.ne.s32.totalorder %s268, %s269
      %p283 = scmp.eq.s32.totalorder %s46, 3
      %p284 = por %p282, %p283
      %p286 = scmp.ne.s32.totalorder %s269, %s285
      %p287 = scmp.eq.s32.totalorder %s46, 0
      %p288 = por %p286, %p287
      %s289 = ssub.s32 %s48, %s55
      %p290 = scmp.eq.s32.totalorder %s289, 0
      %s292 = sadd.s32 %s291, 1
      %s293 = scalar_select %p290, %s291, %s292
      %p296 = pneg %p290
      %p297 = scmp.eq.s32.totalorder %s40, 3
      %p298 = por %p296, %p297
      %p299 = scmp.ne.s32.totalorder %s291, %s294
      %p300 = scmp.eq.s32.totalorder %s40, 0
      %p301 = por %p299, %p300
      %p302 = scmp.ne.s32.totalorder %s291, %s294
      %p303 = scmp.eq.s32.totalorder %s45, 3
      %p304 = por %p302, %p303
      %p305 = scmp.ne.s32.totalorder %s294, %s295
      %p306 = scmp.eq.s32.totalorder %s45, 0
      %p307 = por %p305, %p306
      %p308 = scmp.ne.s32.totalorder %s294, %s295
      %p309 = scmp.eq.s32.totalorder %s46, 3
      %p310 = por %p308, %p309
      %p312 = scmp.ne.s32.totalorder %s295, %s311
      %p313 = scmp.eq.s32.totalorder %s46, 0
      %p314 = por %p312, %p313
      %s315 = ssub.s32 %s48, %s55
      %p316 = scmp.eq.s32.totalorder %s315, 0
      %s318 = sadd.s32 %s317, 1
      %s319 = scalar_select %p316, %s317, %s318
      %p322 = pneg %p316
      %p323 = scmp.eq.s32.totalorder %s40, 3
      %p324 = por %p322, %p323
      %p325 = scmp.ne.s32.totalorder %s317, %s320
      %p326 = scmp.eq.s32.totalorder %s40, 0
      %p327 = por %p325, %p326
      %p328 = scmp.ne.s32.totalorder %s317, %s320
      %p329 = scmp.eq.s32.totalorder %s45, 3
      %p330 = por %p328, %p329
      %p331 = scmp.ne.s32.totalorder %s320, %s321
      %p332 = scmp.eq.s32.totalorder %s45, 0
      %p333 = por %p331, %p332
      %p334 = scmp.ne.s32.totalorder %s320, %s321
      %p335 = scmp.eq.s32.totalorder %s46, 3
      %p336 = por %p334, %p335
      %p338 = scmp.ne.s32.totalorder %s321, %s337
      %p339 = scmp.eq.s32.totalorder %s46, 0
      %p340 = por %p338, %p339
      %s341 = ssub.s32 %s48, %s55
      %p342 = scmp.eq.s32.totalorder %s341, 0
      %s344 = sadd.s32 %s343, 1
      %s345 = scalar_select %p342, %s343, %s344
      %p348 = pneg %p342
      %p349 = scmp.eq.s32.totalorder %s40, 3
      %p350 = por %p348, %p349
      %p351 = scmp.ne.s32.totalorder %s343, %s346
      %p352 = scmp.eq.s32.totalorder %s40, 0
      %p353 = por %p351, %p352
      %p354 = scmp.ne.s32.totalorder %s343, %s346
      %p355 = scmp.eq.s32.totalorder %s45, 3
      %p356 = por %p354, %p355
      %p357 = scmp.ne.s32.totalorder %s346, %s347
      %p358 = scmp.eq.s32.totalorder %s45, 0
      %p359 = por %p357, %p358
      %p360 = scmp.ne.s32.totalorder %s346, %s347
      %p361 = scmp.eq.s32.totalorder %s46, 3
      %p362 = por %p360, %p361
      %p364 = scmp.ne.s32.totalorder %s347, %s363
      %p365 = scmp.eq.s32.totalorder %s46, 0
      %p366 = por %p364, %p365
      %s367 = ssub.s32 %s48, %s55
      %p368 = scmp.eq.s32.totalorder %s367, 0
      %s370 = sadd.s32 %s369, 1
      %s371 = scalar_select %p368, %s369, %s370
      %p374 = pneg %p368
      %p375 = scmp.eq.s32.totalorder %s40, 3
      %p376 = por %p374, %p375
      %p377 = scmp.ne.s32.totalorder %s369, %s372
      %p378 = scmp.eq.s32.totalorder %s40, 0
      %p379 = por %p377, %p378
      %p380 = scmp.ne.s32.totalorder %s369, %s372
      %p381 = scmp.eq.s32.totalorder %s45, 3
      %p382 = por %p380, %p381
      %p383 = scmp.ne.s32.totalorder %s372, %s373
      %p384 = scmp.eq.s32.totalorder %s45, 0
      %p385 = por %p383, %p384
      %p386 = scmp.ne.s32.totalorder %s372, %s373
      %p387 = scmp.eq.s32.totalorder %s46, 3
      %p388 = por %p386, %p387
      %p390 = scmp.ne.s32.totalorder %s373, %s389
      %p391 = scmp.eq.s32.totalorder %s46, 0
      %p392 = por %p390, %p391
      %s393 = ssub.s32 %s48, %s55
      %p394 = scmp.eq.s32.totalorder %s393, 0
      %s396 = sadd.s32 %s395, 1
      %s397 = scalar_select %p394, %s395, %s396
      %p400 = pneg %p394
      %p401 = scmp.eq.s32.totalorder %s40, 3
      %p402 = por %p400, %p401
      %p403 = scmp.ne.s32.totalorder %s395, %s398
      %p404 = scmp.eq.s32.totalorder %s40, 0
      %p405 = por %p403, %p404
      %p406 = scmp.ne.s32.totalorder %s395, %s398
      %p407 = scmp.eq.s32.totalorder %s45, 3
      %p408 = por %p406, %p407
      %p409 = scmp.ne.s32.totalorder %s398, %s399
      %p410 = scmp.eq.s32.totalorder %s45, 0
      %p411 = por %p409, %p410
      %p412 = scmp.ne.s32.totalorder %s398, %s399
      %p413 = scmp.eq.s32.totalorder %s46, 3
      %p414 = por %p412, %p413
      %p416 = scmp.ne.s32.totalorder %s399, %s415
      %p417 = scmp.eq.s32.totalorder %s46, 0
      %p418 = por %p416, %p417
      %s419 = ssub.s32 %s48, %s55
      %p420 = scmp.eq.s32.totalorder %s419, 0
      %s422 = sadd.s32 %s421, 1
      %s423 = scalar_select %p420, %s421, %s422
      %p426 = pneg %p420
      %p427 = scmp.eq.s32.totalorder %s40, 3
      %p428 = por %p426, %p427
      %p429 = scmp.ne.s32.totalorder %s421, %s424
      %p430 = scmp.eq.s32.totalorder %s40, 0
      %p431 = por %p429, %p430
      %p432 = scmp.ne.s32.totalorder %s421, %s424
      %p433 = scmp.eq.s32.totalorder %s45, 3
      %p434 = por %p432, %p433
      %p435 = scmp.ne.s32.totalorder %s424, %s425
      %p436 = scmp.eq.s32.totalorder %s45, 0
      %p437 = por %p435, %p436
      %p438 = scmp.ne.s32.totalorder %s424, %s425
      %p439 = scmp.eq.s32.totalorder %s46, 3
      %p440 = por %p438, %p439
      %p442 = scmp.ne.s32.totalorder %s425, %s441
      %p443 = scmp.eq.s32.totalorder %s46, 0
      %p444 = por %p442, %p443
      %s445 = ssub.s32 %s48, %s55
      %p446 = scmp.eq.s32.totalorder %s445, 0
      %s448 = sadd.s32 %s447, 1
      %s449 = scalar_select %p446, %s447, %s448
      %p452 = pneg %p446
      %p453 = scmp.eq.s32.totalorder %s40, 3
      %p454 = por %p452, %p453
      %p455 = scmp.ne.s32.totalorder %s447, %s450
      %p456 = scmp.eq.s32.totalorder %s40, 0
      %p457 = por %p455, %p456
      %p458 = scmp.ne.s32.totalorder %s447, %s450
      %p459 = scmp.eq.s32.totalorder %s45, 3
      %p460 = por %p458, %p459
      %p461 = scmp.ne.s32.totalorder %s450, %s451
      %p462 = scmp.eq.s32.totalorder %s45, 0
      %p463 = por %p461, %p462
      %p464 = scmp.ne.s32.totalorder %s450, %s451
      %p465 = scmp.eq.s32.totalorder %s46, 3
      %p466 = por %p464, %p465
      %p468 = scmp.ne.s32.totalorder %s451, %s467
      %p469 = scmp.eq.s32.totalorder %s46, 0
      %p470 = por %p468, %p469
      %s471 = ssub.s32 %s48, %s55
      %p472 = scmp.eq.s32.totalorder %s471, 0
      %s474 = sadd.s32 %s473, 1
      %s475 = scalar_select %p472, %s473, %s474
      %p478 = pneg %p472
      %p479 = scmp.eq.s32.totalorder %s40, 3
      %p480 = por %p478, %p479
      %p481 = scmp.ne.s32.totalorder %s473, %s476
      %p482 = scmp.eq.s32.totalorder %s40, 0
      %p483 = por %p481, %p482
      %p484 = scmp.ne.s32.totalorder %s473, %s476
      %p485 = scmp.eq.s32.totalorder %s45, 3
      %p486 = por %p484, %p485
      %p487 = scmp.ne.s32.totalorder %s476, %s477
      %p488 = scmp.eq.s32.totalorder %s45, 0
      %p489 = por %p487, %p488
      %p490 = scmp.ne.s32.totalorder %s476, %s477
      %p491 = scmp.eq.s32.totalorder %s46, 3
      %p492 = por %p490, %p491
      %p494 = scmp.ne.s32.totalorder %s477, %s493
      %p495 = scmp.eq.s32.totalorder %s46, 0
      %p496 = por %p494, %p495
      %s497 = ssub.s32 %s47, %s59
      %p498 = scmp.eq.s32.totalorder %s497, 0
      %s500 = sadd.s32 %s499, 1
      %s501 = scalar_select %p498, %s499, %s500
      %p504 = pneg %p498
      %p505 = scmp.eq.s32.totalorder %s40, 3
      %p506 = por %p504, %p505
      %p507 = scmp.ne.s32.totalorder %s499, %s502
      %p508 = scmp.eq.s32.totalorder %s40, 0
      %p509 = por %p507, %p508
      %p510 = scmp.ne.s32.totalorder %s499, %s502
      %p511 = scmp.eq.s32.totalorder %s45, 3
      %p512 = por %p510, %p511
      %p513 = scmp.ne.s32.totalorder %s502, %s503
      %p514 = scmp.eq.s32.totalorder %s45, 0
      %p515 = por %p513, %p514
      %p516 = scmp.ne.s32.totalorder %s502, %s503
      %p517 = scmp.eq.s32.totalorder %s46, 3
      %p518 = por %p516, %p517
      %p520 = scmp.ne.s32.totalorder %s503, %s519
      %p521 = scmp.eq.s32.totalorder %s46, 0
      %p522 = por %p520, %p521
      %s523 = ssub.s32 %s47, %s59
      %p524 = scmp.eq.s32.totalorder %s523, 0
      %s526 = sadd.s32 %s525, 1
      %s527 = scalar_select %p524, %s525, %s526
      %p530 = pneg %p524
      %p531 = scmp.eq.s32.totalorder %s40, 3
      %p532 = por %p530, %p531
      %p533 = scmp.ne.s32.totalorder %s525, %s528
      %p534 = scmp.eq.s32.totalorder %s40, 0
      %p535 = por %p533, %p534
      %p536 = scmp.ne.s32.totalorder %s525, %s528
      %p537 = scmp.eq.s32.totalorder %s45, 3
      %p538 = por %p536, %p537
      %p539 = scmp.ne.s32.totalorder %s528, %s529
      %p540 = scmp.eq.s32.totalorder %s45, 0
      %p541 = por %p539, %p540
      %p542 = scmp.ne.s32.totalorder %s528, %s529
      %p543 = scmp.eq.s32.totalorder %s46, 3
      %p544 = por %p542, %p543
      %p546 = scmp.ne.s32.totalorder %s529, %s545
      %p547 = scmp.eq.s32.totalorder %s46, 0
      %p548 = por %p546, %p547
      %p549 = scmp.le.s32.totalorder 1, %s40
      %p550 = scmp.lt.s32.totalorder %s40, 5
      %p551 = pnand %p549, %p550
      %p552 = pneg %p551
      // Predicated region
      $region9: #{tpu_custom_call.1} parent=5 // pred_check
        _
      $region10: #{tpu_custom_call.1} parent=5 // pred_check_branch
        %554 = sbr.rel (%p551) target = $region12
      $region11: #{tpu_custom_call.1} parent=5 // pred_region
        %s555 = ssub.s32 %s40, 1
        // Predicated region
        $region13: #{tpu_custom_call.1} parent=11 // pred_check
          %p556 = pneg %p125
        $region14: #{tpu_custom_call.1} parent=11 // pred_check_branch
          %558 = sbr.rel (%p556) target = $region16
        $region15: #{tpu_custom_call.1} parent=11 // pred_region
          %s560 = ssub.s32 256, 256
          %561 = vsyncadd [#allocation7], %s560
          %s562 = sshll.u32 [#allocation8], 4
          %s563 = int_to_ptr.vmem [resolvable:$true] %s562
          %568 = dma.hbm_to_vmem [thread:$0]  %s2, 256, %s563, [#allocation7], 128, 128, 8
        $region16: #{tpu_custom_call.1} parent=11 // pred_fallthru
          _
      $region12: #{tpu_custom_call.1} parent=5 // pred_fallthru
        _
      %p569 = scmp.lt.s32.totalorder %s40, 4
      // Predicated region
      $region17: #{tpu_custom_call.1} parent=5 // pred_check
        %p570 = pneg %p569
      $region18: #{tpu_custom_call.1} parent=5 // pred_check_branch
        %572 = sbr.rel (%p570) target = $region20
      $region19: #{tpu_custom_call.1} parent=5 // pred_region
        // Predicated region
        $region21: #{tpu_custom_call.1} parent=19 // pred_check
          %p573 = pneg %p72
        $region22: #{tpu_custom_call.1} parent=19 // pred_check_branch
          %575 = sbr.rel (%p573) target = $region24
        $region23: #{tpu_custom_call.1} parent=19 // pred_region
          %s576 = sand.u32 %s62, 1
          %s577 = scalar_lea.sflag [#allocation4], %s576
          %s578 = sand.u32 %s62, 1
          %s579 = smul.addr %s578, 16
          %s580 = scalar_lea.vmem [#allocation3], %s579
          %s582 = ssub.s32 256, 256
          %583 = vsyncadd %s577, %s582
          %s584 = smul.addr %s47, 2
          %s585 = smul.addr %s584, 128
          %s586 = scalar_lea.hbm %s0, %s585
          %s587 = sshll.u32 %s580, 4
          %s588 = int_to_ptr.vmem [resolvable:$true] %s587
          %593 = dma.hbm_to_vmem [thread:$0]  %s586, 256, %s588, %s577, 128, 128, 8
        $region24: #{tpu_custom_call.1} parent=19 // pred_fallthru
          _
        // Predicated region
        $region25: #{tpu_custom_call.1} parent=19 // pred_check
          %p594 = pneg %p98
        $region26: #{tpu_custom_call.1} parent=19 // pred_check_branch
          %596 = sbr.rel (%p594) target = $region28
        $region27: #{tpu_custom_call.1} parent=19 // pred_region
          %s597 = sand.u32 %s40, 1
          %s598 = scalar_lea.sflag [#allocation7], %s597
          %s599 = sand.u32 %s88, 1
          %s600 = smul.addr %s599, 16
          %s601 = scalar_lea.vmem [#allocation6], %s600
          %s603 = ssub.s32 256, 256
          %604 = vsyncadd %s598, %s603
          %s605 = smul.addr %s47, 2
          %s606 = smul.addr %s605, 128
          %s607 = scalar_lea.hbm %s1, %s606
          %s608 = sshll.u32 %s601, 4
          %s609 = int_to_ptr.vmem [resolvable:$true] %s608
          %614 = dma.hbm_to_vmem [thread:$0]  %s607, 256, %s609, %s598, 128, 128, 8
        $region28: #{tpu_custom_call.1} parent=19 // pred_fallthru
          _
        // Predicated region
        $region29: #{tpu_custom_call.1} parent=19 // pred_check
          %p615 = pneg %p145
        $region30: #{tpu_custom_call.1} parent=19 // pred_check_branch
          %617 = sbr.rel (%p615) target = $region32
        $region31: #{tpu_custom_call.1} parent=19 // pred_region
          %p618 = scmp.lt.s32.totalorder %s48, 1
          %s619 = scalar_select %p618, %s48, 1
          %s620 = smul.addr %s619, 4
          %s621 = smul.addr %s620, 8
          %s622 = scalar_lea.vmem %s3, %s621
        $region32: #{tpu_custom_call.1} parent=19 // pred_fallthru
          _
        // Predicated region
        $region33: #{tpu_custom_call.1} parent=19 // pred_check
          %p623 = pneg %p171
        $region34: #{tpu_custom_call.1} parent=19 // pred_check_branch
          %625 = sbr.rel (%p623) target = $region36
        $region35: #{tpu_custom_call.1} parent=19 // pred_region
          %p626 = scmp.lt.s32.totalorder %s48, 1
          %s627 = scalar_select %p626, %s48, 1
          %s628 = scalar_lea.vmem %s4, %s627
        $region36: #{tpu_custom_call.1} parent=19 // pred_fallthru
          _
        // Predicated region
        $region37: #{tpu_custom_call.1} parent=19 // pred_check
          %p629 = pneg %p197
        $region38: #{tpu_custom_call.1} parent=19 // pred_check_branch
          %631 = sbr.rel (%p629) target = $region40
        $region39: #{tpu_custom_call.1} parent=19 // pred_region
          %p632 = scmp.lt.s32.totalorder %s48, 1
          %s633 = scalar_select %p632, %s48, 1
          %s634 = smul.addr %s633, 4
          %s635 = smul.addr %s634, 8
          %s636 = scalar_lea.vmem %s5, %s635
        $region40: #{tpu_custom_call.1} parent=19 // pred_fallthru
          _
        // Predicated region
        $region41: #{tpu_custom_call.1} parent=19 // pred_check
          %p637 = pneg %p223
        $region42: #{tpu_custom_call.1} parent=19 // pred_check_branch
          %639 = sbr.rel (%p637) target = $region44
        $region43: #{tpu_custom_call.1} parent=19 // pred_region
          %p640 = scmp.lt.s32.totalorder %s48, 1
          %s641 = scalar_select %p640, %s48, 1
          %s642 = scalar_lea.vmem %s6, %s641
        $region44: #{tpu_custom_call.1} parent=19 // pred_fallthru
          _
        // Predicated region
        $region45: #{tpu_custom_call.1} parent=19 // pred_check
          %p643 = pneg %p249
        $region46: #{tpu_custom_call.1} parent=19 // pred_check_branch
          %645 = sbr.rel (%p643) target = $region48
        $region47: #{tpu_custom_call.1} parent=19 // pred_region
          %p646 = scmp.lt.s32.totalorder %s48, 1
          %s647 = scalar_select %p646, %s48, 1
          %s648 = smul.addr %s647, 4
          %s649 = smul.addr %s648, 8
          %s650 = scalar_lea.vmem %s7, %s649
        $region48: #{tpu_custom_call.1} parent=19 // pred_fallthru
          _
        // Predicated region
        $region49: #{tpu_custom_call.1} parent=19 // pred_check
          %p651 = pneg %p275
        $region50: #{tpu_custom_call.1} parent=19 // pred_check_branch
          %653 = sbr.rel (%p651) target = $region52
        $region51: #{tpu_custom_call.1} parent=19 // pred_region
          %p654 = scmp.lt.s32.totalorder %s48, 1
          %s655 = scalar_select %p654, %s48, 1
          %s656 = scalar_lea.vmem %s8, %s655
        $region52: #{tpu_custom_call.1} parent=19 // pred_fallthru
          _
        // Predicated region
        $region53: #{tpu_custom_call.1} parent=19 // pred_check
          %p657 = pneg %p301
        $region54: #{tpu_custom_call.1} parent=19 // pred_check_branch
          %659 = sbr.rel (%p657) target = $region56
        $region55: #{tpu_custom_call.1} parent=19 // pred_region
          %p660 = scmp.lt.s32.totalorder %s48, 1
          %s661 = scalar_select %p660, %s48, 1
          %s662 = scalar_lea.vmem %s9, %s661
        $region56: #{tpu_custom_call.1} parent=19 // pred_fallthru
          _
        // Predicated region
        $region57: #{tpu_custom_call.1} parent=19 // pred_check
          %p663 = pneg %p327
        $region58: #{tpu_custom_call.1} parent=19 // pred_check_branch
          %665 = sbr.rel (%p663) target = $region60
        $region59: #{tpu_custom_call.1} parent=19 // pred_region
          %p666 = scmp.lt.s32.totalorder %s48, 1
          %s667 = scalar_select %p666, %s48, 1
          %s668 = scalar_lea.vmem %s10, %s667
        $region60: #{tpu_custom_call.1} parent=19 // pred_fallthru
          _
        // Predicated region
        $region61: #{tpu_custom_call.1} parent=19 // pred_check
          %p669 = pneg %p353
        $region62: #{tpu_custom_call.1} parent=19 // pred_check_branch
          %671 = sbr.rel (%p669) target = $region64
        $region63: #{tpu_custom_call.1} parent=19 // pred_region
          %s672 = sand.u32 %s343, 1
          %s673 = scalar_lea.sflag [#allocation10], %s672
          %s674 = sand.u32 %s343, 1
          %s675 = smul.addr %s674, 32
          %s676 = scalar_lea.vmem [#allocation9], %s675
          %s678 = ssub.s32 512, 512
          %679 = vsyncadd %s673, %s678
          %s680 = smul.addr %s48, 4
          %s681 = smul.addr %s680, 128
          %s682 = scalar_lea.hbm %s11, %s681
          %s683 = sshll.u32 %s676, 4
          %s684 = int_to_ptr.vmem [resolvable:$true] %s683
          %689 = dma.hbm_to_vmem [thread:$0]  %s682, 512, %s684, %s673, 128, 128, 8
        $region64: #{tpu_custom_call.1} parent=19 // pred_fallthru
          _
        // Predicated region
        $region65: #{tpu_custom_call.1} parent=19 // pred_check
          %p690 = pneg %p379
        $region66: #{tpu_custom_call.1} parent=19 // pred_check_branch
          %692 = sbr.rel (%p690) target = $region68
        $region67: #{tpu_custom_call.1} parent=19 // pred_region
          %p693 = scmp.lt.s32.totalorder %s48, 1
          %s694 = scalar_select %p693, %s48, 1
          %s695 = scalar_lea.vmem %s12, %s694
        $region68: #{tpu_custom_call.1} parent=19 // pred_fallthru
          _
        // Predicated region
        $region69: #{tpu_custom_call.1} parent=19 // pred_check
          %p696 = pneg %p405
        $region70: #{tpu_custom_call.1} parent=19 // pred_check_branch
          %698 = sbr.rel (%p696) target = $region72
        $region71: #{tpu_custom_call.1} parent=19 // pred_region
          %p699 = scmp.lt.s32.totalorder %s48, 1
          %s700 = scalar_select %p699, %s48, 1
          %s701 = smul.addr %s700, 8
          %s702 = smul.addr %s701, 8
          %s703 = scalar_lea.vmem %s13, %s702
        $region72: #{tpu_custom_call.1} parent=19 // pred_fallthru
          _
        // Predicated region
        $region73: #{tpu_custom_call.1} parent=19 // pred_check
          %p704 = pneg %p431
        $region74: #{tpu_custom_call.1} parent=19 // pred_check_branch
          %706 = sbr.rel (%p704) target = $region76
        $region75: #{tpu_custom_call.1} parent=19 // pred_region
          %p707 = scmp.lt.s32.totalorder %s48, 1
          %s708 = scalar_select %p707, %s48, 1
          %s709 = scalar_lea.vmem %s14, %s708
        $region76: #{tpu_custom_call.1} parent=19 // pred_fallthru
          _
        // Predicated region
        $region77: #{tpu_custom_call.1} parent=19 // pred_check
          %p710 = pneg %p457
        $region78: #{tpu_custom_call.1} parent=19 // pred_check_branch
          %712 = sbr.rel (%p710) target = $region80
        $region79: #{tpu_custom_call.1} parent=19 // pred_region
          %p713 = scmp.lt.s32.totalorder %s48, 1
          %s714 = scalar_select %p713, %s48, 1
          %s715 = scalar_lea.vmem %s15, %s714
        $region80: #{tpu_custom_call.1} parent=19 // pred_fallthru
          _
        // Predicated region
        $region81: #{tpu_custom_call.1} parent=19 // pred_check
          %p716 = pneg %p483
        $region82: #{tpu_custom_call.1} parent=19 // pred_check_branch
          %718 = sbr.rel (%p716) target = $region84
        $region83: #{tpu_custom_call.1} parent=19 // pred_region
          %p719 = scmp.lt.s32.totalorder %s48, 1
          %s720 = scalar_select %p719, %s48, 1
          %s721 = scalar_lea.vmem %s16, %s720
        $region84: #{tpu_custom_call.1} parent=19 // pred_fallthru
          _
      $region20: #{tpu_custom_call.1} parent=5 // pred_fallthru
        _
      %p722 = scmp.le.s32.totalorder 1, %s40
      %p723 = scmp.lt.s32.totalorder %s40, 5
      %p724 = pnand %p722, %p723
      %p725 = pneg %p724
      // Predicated region
      $region85: #{tpu_custom_call.1} parent=5 // pred_check
        _
      $region86: #{tpu_custom_call.1} parent=5 // pred_check_branch
        %727 = sbr.rel (%p724) target = $region88
      $region87: #{tpu_custom_call.1} parent=5 // pred_region
        %s728 = ssub.s32 %s40, 1
        %s729 = sand.u32 %s65, 1
        %s730 = scalar_lea.sflag [#allocation4], %s729
        %s731 = sand.u32 %s65, 1
        %s732 = smul.addr %s731, 16
        %s733 = scalar_lea.vmem [#allocation3], %s732
        // Predicated region
        $region89: #{tpu_custom_call.1} parent=87 // pred_check
          %p734 = pneg %p78
        $region90: #{tpu_custom_call.1} parent=87 // pred_check_branch
          %736 = sbr.rel (%p734) target = $region92
        $region91: #{tpu_custom_call.1} parent=87 // pred_region
          %737 = dma.done %s730, 256
        $region92: #{tpu_custom_call.1} parent=87 // pred_fallthru
          _
        %s738 = sand.u32 %s45, 1
        %s739 = scalar_lea.sflag [#allocation7], %s738
        %s740 = sand.u32 %s91, 1
        %s741 = smul.addr %s740, 16
        %s742 = scalar_lea.vmem [#allocation6], %s741
        // Predicated region
        $region93: #{tpu_custom_call.1} parent=87 // pred_check
          %p743 = pneg %p104
        $region94: #{tpu_custom_call.1} parent=87 // pred_check_branch
          %745 = sbr.rel (%p743) target = $region96
        $region95: #{tpu_custom_call.1} parent=87 // pred_region
          %746 = dma.done %s739, 256
        $region96: #{tpu_custom_call.1} parent=87 // pred_fallthru
          _
        // Predicated region
        $region97: #{tpu_custom_call.1} parent=87 // pred_check
          %p747 = pneg %p125
        $region98: #{tpu_custom_call.1} parent=87 // pred_check_branch
          %749 = sbr.rel (%p747) target = $region100
        $region99: #{tpu_custom_call.1} parent=87 // pred_region
          %750 = dma.done [#allocation7], 256
        $region100: #{tpu_custom_call.1} parent=87 // pred_fallthru
          _
        %s751 = sand.u32 %s346, 1
        %s752 = scalar_lea.sflag [#allocation10], %s751
        %s753 = sand.u32 %s346, 1
        %s754 = smul.addr %s753, 32
        %s755 = scalar_lea.vmem [#allocation9], %s754
        // Predicated region
        $region101: #{tpu_custom_call.1} parent=87 // pred_check
          %p756 = pneg %p359
        $region102: #{tpu_custom_call.1} parent=87 // pred_check_branch
          %758 = sbr.rel (%p756) target = $region104
        $region103: #{tpu_custom_call.1} parent=87 // pred_region
          %759 = dma.done %s752, 512
        $region104: #{tpu_custom_call.1} parent=87 // pred_fallthru
          _
        %s760 = sand.u32 %s65, 1
        %s761 = scalar_lea.sflag [#allocation4], %s760
        %s762 = sand.u32 %s65, 1
        %s763 = smul.addr %s762, 16
        %s764 = scalar_lea.vmem [#allocation3], %s763
        %p765 = pneg %p78
        %p766 = pneg %p75
        %s767 = sand.u32 %s45, 1
        %s768 = scalar_lea.sflag [#allocation7], %s767
        %s769 = sand.u32 %s91, 1
        %s770 = smul.addr %s769, 16
        %s771 = scalar_lea.vmem [#allocation6], %s770
        %p772 = pneg %p104
        %p773 = pneg %p101
        %p774 = pneg %p125
        %p775 = pneg %p122
        %p776 = scmp.lt.s32.totalorder %s50, 1
        %s777 = scalar_select %p776, %s50, 1
        %s778 = smul.addr %s777, 4
        %s779 = smul.addr %s778, 8
        %s780 = scalar_lea.vmem %s3, %s779
        %p781 = pneg %p151
        %p782 = pneg %p148
        %p783 = scmp.lt.s32.totalorder %s50, 1
        %s784 = scalar_select %p783, %s50, 1
        %s785 = scalar_lea.vmem %s4, %s784
        %p786 = pneg %p177
        %p787 = pneg %p174
        %p788 = scmp.lt.s32.totalorder %s50, 1
        %s789 = scalar_select %p788, %s50, 1
        %s790 = smul.addr %s789, 4
        %s791 = smul.addr %s790, 8
        %s792 = scalar_lea.vmem %s5, %s791
        %p793 = pneg %p203
        %p794 = pneg %p200
        %p795 = scmp.lt.s32.totalorder %s50, 1
        %s796 = scalar_select %p795, %s50, 1
        %s797 = scalar_lea.vmem %s6, %s796
        %p798 = pneg %p229
        %p799 = pneg %p226
        %p800 = scmp.lt.s32.totalorder %s50, 1
        %s801 = scalar_select %p800, %s50, 1
        %s802 = smul.addr %s801, 4
        %s803 = smul.addr %s802, 8
        %s804 = scalar_lea.vmem %s7, %s803
        %p805 = pneg %p255
        %p806 = pneg %p252
        %p807 = scmp.lt.s32.totalorder %s50, 1
        %s808 = scalar_select %p807, %s50, 1
        %s809 = scalar_lea.vmem %s8, %s808
        %p810 = pneg %p281
        %p811 = pneg %p278
        %p812 = scmp.lt.s32.totalorder %s50, 1
        %s813 = scalar_select %p812, %s50, 1
        %s814 = scalar_lea.vmem %s9, %s813
        %p815 = pneg %p307
        %p816 = pneg %p304
        %p817 = scmp.lt.s32.totalorder %s50, 1
        %s818 = scalar_select %p817, %s50, 1
        %s819 = scalar_lea.vmem %s10, %s818
        %p820 = pneg %p333
        %p821 = pneg %p330
        %s822 = sand.u32 %s346, 1
        %s823 = scalar_lea.sflag [#allocation10], %s822
        %s824 = sand.u32 %s346, 1
        %s825 = smul.addr %s824, 32
        %s826 = scalar_lea.vmem [#allocation9], %s825
        %p827 = pneg %p359
        %p828 = pneg %p356
        %p829 = scmp.lt.s32.totalorder %s50, 1
        %s830 = scalar_select %p829, %s50, 1
        %s831 = scalar_lea.vmem %s12, %s830
        %p832 = pneg %p385
        %p833 = pneg %p382
        %p834 = scmp.lt.s32.totalorder %s50, 1
        %s835 = scalar_select %p834, %s50, 1
        %s836 = smul.addr %s835, 8
        %s837 = smul.addr %s836, 8
        %s838 = scalar_lea.vmem %s13, %s837
        %p839 = pneg %p411
        %p840 = pneg %p408
        %p841 = scmp.lt.s32.totalorder %s50, 1
        %s842 = scalar_select %p841, %s50, 1
        %s843 = scalar_lea.vmem %s14, %s842
        %p844 = pneg %p437
        %p845 = pneg %p434
        %p846 = scmp.lt.s32.totalorder %s50, 1
        %s847 = scalar_select %p846, %s50, 1
        %s848 = scalar_lea.vmem %s15, %s847
        %p849 = pneg %p463
        %p850 = pneg %p460
        %p851 = scmp.lt.s32.totalorder %s50, 1
        %s852 = scalar_select %p851, %s50, 1
        %s853 = scalar_lea.vmem %s16, %s852
        %p854 = pneg %p489
        %p855 = pneg %p486
        %p856 = pneg %p515
        %p857 = pneg %p512
        %s858 = sand.u32 %s502, 1
        %s859 = scalar_lea.sflag [#allocation5], %s858
        %s860 = sand.u32 %s502, 1
        %s861 = smul.addr %s860, 16
        %s862 = scalar_lea.vmem [#allocation11], %s861
        %p863 = pneg %p541
        %p864 = pneg %p538
        %s865 = sand.u32 %s528, 1
        %s866 = scalar_lea.sflag [#allocation13], %s865
        %s867 = sand.u32 %s528, 1
        %s868 = smul.addr %s867, 16
        %s869 = scalar_lea.vmem [#allocation12], %s868
        %p870 = scmp.lt.s32.totalorder %s50, 1
        %s871 = scalar_select %p870, %s50, 1
        %s872 = smul.addr %s871, 4
        %s873 = smul.addr %s872, 8
        %s874 = scalar_lea.vmem %s3, %s873
        %p875 = scmp.lt.s32.totalorder %s50, 1
        %s876 = scalar_select %p875, %s50, 1
        %s877 = scalar_lea.vmem %s4, %s876
        %p878 = scmp.lt.s32.totalorder %s50, 1
        %s879 = scalar_select %p878, %s50, 1
        %s880 = smul.addr %s879, 4
        %s881 = smul.addr %s880, 8
        %s882 = scalar_lea.vmem %s5, %s881
        %p883 = scmp.lt.s32.totalorder %s50, 1
        %s884 = scalar_select %p883, %s50, 1
        %s885 = scalar_lea.vmem %s6, %s884
        %p886 = scmp.lt.s32.totalorder %s50, 1
        %s887 = scalar_select %p886, %s50, 1
        %s888 = smul.addr %s887, 4
        %s889 = smul.addr %s888, 8
        %s890 = scalar_lea.vmem %s7, %s889
        %p891 = scmp.lt.s32.totalorder %s50, 1
        %s892 = scalar_select %p891, %s50, 1
        %s893 = scalar_lea.vmem %s8, %s892
        %p894 = scmp.lt.s32.totalorder %s50, 1
        %s895 = scalar_select %p894, %s50, 1
        %s896 = scalar_lea.vmem %s9, %s895
        %p897 = scmp.lt.s32.totalorder %s50, 1
        %s898 = scalar_select %p897, %s50, 1
        %s899 = scalar_lea.vmem %s10, %s898
        %p900 = scmp.lt.s32.totalorder %s50, 1
        %s901 = scalar_select %p900, %s50, 1
        %s902 = scalar_lea.vmem %s12, %s901
        %p903 = scmp.lt.s32.totalorder %s50, 1
        %s904 = scalar_select %p903, %s50, 1
        %s905 = smul.addr %s904, 8
        %s906 = smul.addr %s905, 8
        %s907 = scalar_lea.vmem %s13, %s906
        %p908 = scmp.lt.s32.totalorder %s50, 1
        %s909 = scalar_select %p908, %s50, 1
        %s910 = scalar_lea.vmem %s14, %s909
        %p911 = scmp.lt.s32.totalorder %s50, 1
        %s912 = scalar_select %p911, %s50, 1
        %s913 = scalar_lea.vmem %s15, %s912
        %p914 = scmp.lt.s32.totalorder %s50, 1
        %s915 = scalar_select %p914, %s50, 1
        %s916 = scalar_lea.vmem %s16, %s915
        %p917 = scmp.eq.s32.totalorder %s50, 0
        // Predicated region
        $region105: #{tpu_custom_call.1} parent=87 // pred_check
          %p918 = pneg %p917
        $region106: #{tpu_custom_call.1} parent=87 // pred_check_branch
          %920 = sbr.rel (%p918) target = $region108
        $region107: #{tpu_custom_call.1} parent=87 // pred_region
          %v921 = vld [vmem:[%s733] sm:$0xff]
          %v922 = vld [vmem:[%s733 + $0x8] sm:$0xff]
          %vm923 = vcmask 261120
          %924 = vst.msk [vmem:[#allocation2] sm:$0xff] %vm923, %v921
          %925 = vst.msk [vmem:[#allocation2 + $0x8] sm:$0xff] %vm923, %v922
          %v926 = vld [vmem:[%s742] sm:$0xff]
          %v927 = vld [vmem:[%s742 + $0x8] sm:$0xff]
          %s928 = scalar_lea.vmem [#allocation2], 16
          %929 = vst.msk [vmem:[%s928] sm:$0xff] %vm923, %v926
          %930 = vst.msk [vmem:[%s928 + $0x8] sm:$0xff] %vm923, %v927
        $region108: #{tpu_custom_call.1} parent=87 // pred_fallthru
          _
        %v931 = vld [vmem:[#allocation2] sm:$0xff]
        %v932 = vld [vmem:[#allocation2 + $0x8] sm:$0xff]
        %v933 = vld [vmem:[#allocation2 + $0x10] sm:$0xff]
        %v934 = vld [vmem:[#allocation2 + $0x18] sm:$0xff]
        %v935 = vld [vmem:[#allocation8] sm:$0xff]
        %v936 = vld [vmem:[#allocation8 + $0x8] sm:$0xff]
        %v937 = vadd.f32 %v931, %v935
        %v938 = vadd.f32 %v932, %v936
        %v939 = vadd.f32 %v933, %v935
        %v940 = vadd.f32 %v934, %v936
        %v941 = vld [vmem:[%s874] sm:$0xff]
        %v942 = vld [vmem:[%s874 + $0x8] sm:$0xff]
        %v943 = vld [vmem:[%s874 + $0x10] sm:$0xff]
        %v944 = vld [vmem:[%s874 + $0x18] sm:$0xff]
        %v945 = vld [vmem:[%s877] sm:$0x1]
        %v947 = vlaneseq
        %v948 = vshrl.u32 %v947, 7
        %v949 = vsub.s32 0, %v948
        %v950 = vrot.slane %v945, %v949
        %vm952 = vcmask 261120
        %v954 = vsel %vm952, %v937, 0
        %v957 = vsel %vm952, %v938, 0
        %v960 = vsel %vm952, %v939, 0
        %v963 = vsel %vm952, %v940, 0
        %965 = vmatprep.subr.mxu0 0.0
        %966 = vmatpush1.msra.mxu0 0.0
        %967 = vmatprep.subr.mxu0 0.0
        %968 = vmatpush1.msra.mxu0 0.0
        %969 = vmatprep.subr.mxu0 0.0
        %970 = vmatpush1.msra.mxu0 0.0
        %971 = vmatprep.subr.mxu0 0.0
        %972 = vmatpush1.msra.mxu0 0.0
        %973 = vmatprep.subr.mxu0 0.0
        %974 = vmatpush1.msra.mxu0 0.0
        %975 = vmatprep.subr.mxu0 0.0
        %976 = vmatpush1.msra.mxu0 0.0
        %977 = vmatprep.subr.mxu0 0.0
        %978 = vmatpush1.msra.mxu0 0.0
        %979 = vmatprep.subr.mxu0 0.0
        %980 = vmatpush1.msra.mxu0 0.0
        %981 = vmatprep.subr.mxu0 0.0
        %982 = vmatpush1.msra.mxu0 0.0
        %983 = vmatprep.subr.mxu0 0.0
        %984 = vmatpush1.msra.mxu0 0.0
        %985 = vmatprep.subr.mxu0 0.0
        %986 = vmatpush1.msra.mxu0 0.0
        %987 = vmatprep.subr.mxu0 0.0
        %988 = vmatpush1.msra.mxu0 0.0
        %989 = vmatprep.subr.mxu0 0.0
        %990 = vmatpush1.msra.mxu0 %v944
        %991 = vmatprep.subr.mxu0 0.0
        %992 = vmatpush1.msra.mxu0 %v943
        %993 = vmatprep.subr.mxu0 0.0
        %994 = vmatpush1.msra.mxu0 %v942
        %995 = vmatprep.subr.mxu0 0.0
        %996 = vmatpush1.msra.mxu0 %v941
        %997 = vmatprep.subr.mxu0 0.0
        %998 = vmatpush2.msra.mxu0 0.0
        %999 = vmatprep.subr.mxu0 0.0
        %1000 = vmatpush2.msra.mxu0 0.0
        %1001 = vmatprep.subr.mxu0 0.0
        %1002 = vmatpush2.msra.mxu0 0.0
        %1003 = vmatprep.subr.mxu0 0.0
        %1004 = vmatpush2.msra.mxu0 0.0
        %1005 = vmatprep.subr.mxu0 0.0
        %1006 = vmatpush2.msra.mxu0 0.0
        %1007 = vmatprep.subr.mxu0 0.0
        %1008 = vmatpush2.msra.mxu0 0.0
        %1009 = vmatprep.subr.mxu0 0.0
        %1010 = vmatpush2.msra.mxu0 0.0
        %1011 = vmatprep.subr.mxu0 0.0
        %1012 = vmatpush2.msra.mxu0 0.0
        %1013 = vmatprep.subr.mxu0 0.0
        %1014 = vmatpush2.msra.mxu0 0.0
        %1015 = vmatprep.subr.mxu0 0.0
        %1016 = vmatpush2.msra.mxu0 0.0
        %1017 = vmatprep.subr.mxu0 0.0
        %1018 = vmatpush2.msra.mxu0 0.0
        %1019 = vmatprep.subr.mxu0 0.0
        %1020 = vmatpush2.msra.mxu0 0.0
        %1021 = vmatprep.subr.mxu0 0.0
        %1022 = vmatpush2.msra.mxu0 0.0
        %1023 = vmatprep.subr.mxu0 0.0
        %1024 = vmatpush2.msra.mxu0 0.0
        %1025 = vmatprep.subr.mxu0 0.0
        %1026 = vmatpush2.msra.mxu0 0.0
        %1027 = vmatprep.subr.mxu0 0.0
        %1028 = vmatpush2.msra.mxu0 0.0
        %1029 = vmatprep.mubr.f32.mxu0 0.0
        %1030 = vmatmul.mubr.f32.gmra.mxu0 %v954
        %v1031 = vpop.f32.mrf.mxu0
        %v1032 = vadd.f32 %v950, %v1031
        %v1033 = vpop.f32.mrf.mxu0
        %1034 = vmatprep.mubr.f32.mxu0 0.0
        %1035 = vmatmul.mubr.f32.gmra.mxu0 %v957
        %v1036 = vpop.f32.mrf.mxu0
        %v1037 = vadd.f32 %v950, %v1036
        %v1038 = vpop.f32.mrf.mxu0
        %1039 = vmatprep.mubr.f32.mxu0 0.0
        %1040 = vmatmul.mubr.f32.gmra.mxu0 %v960
        %v1041 = vpop.f32.mrf.mxu0
        %v1042 = vadd.f32 %v950, %v1041
        %v1043 = vpop.f32.mrf.mxu0
        %1044 = vmatprep.mubr.f32.mxu0 0.0
        %1045 = vmatmul.mubr.f32.gmra.mxu0 %v963
        %v1046 = vpop.f32.mrf.mxu0
        %v1047 = vadd.f32 %v950, %v1046
        %v1048 = vpop.f32.mrf.mxu0
        %1049 = vdwg.mxu0
        %v1050 = vld [vmem:[%s882] sm:$0xff]
        %v1051 = vld [vmem:[%s882 + $0x8] sm:$0xff]
        %v1052 = vld [vmem:[%s882 + $0x10] sm:$0xff]
        %v1053 = vld [vmem:[%s882 + $0x18] sm:$0xff]
        %v1054 = vld [vmem:[%s885] sm:$0x1]
        %v1056 = vlaneseq
        %v1057 = vshrl.u32 %v1056, 7
        %v1058 = vsub.s32 0, %v1057
        %v1059 = vrot.slane %v1054, %v1058
        %v1062 = vsel %vm952, %v933, 0
        %v1065 = vsel %vm952, %v934, 0
        %v1068 = vsel %vm952, %v931, 0
        %v1071 = vsel %vm952, %v932, 0
        %1073 = vmatprep.subr.mxu0 0.0
        %1074 = vmatpush1.msra.mxu0 0.0
        %1075 = vmatprep.subr.mxu0 0.0
        %1076 = vmatpush1.msra.mxu0 0.0
        %1077 = vmatprep.subr.mxu0 0.0
        %1078 = vmatpush1.msra.mxu0 0.0
        %1079 = vmatprep.subr.mxu0 0.0
        %1080 = vmatpush1.msra.mxu0 0.0
        %1081 = vmatprep.subr.mxu0 0.0
        %1082 = vmatpush1.msra.mxu0 0.0
        %1083 = vmatprep.subr.mxu0 0.0
        %1084 = vmatpush1.msra.mxu0 0.0
        %1085 = vmatprep.subr.mxu0 0.0
        %1086 = vmatpush1.msra.mxu0 0.0
        %1087 = vmatprep.subr.mxu0 0.0
        %1088 = vmatpush1.msra.mxu0 0.0
        %1089 = vmatprep.subr.mxu0 0.0
        %1090 = vmatpush1.msra.mxu0 0.0
        %1091 = vmatprep.subr.mxu0 0.0
        %1092 = vmatpush1.msra.mxu0 0.0
        %1093 = vmatprep.subr.mxu0 0.0
        %1094 = vmatpush1.msra.mxu0 0.0
        %1095 = vmatprep.subr.mxu0 0.0
        %1096 = vmatpush1.msra.mxu0 0.0
        %1097 = vmatprep.subr.mxu0 0.0
        %1098 = vmatpush1.msra.mxu0 %v1053
        %1099 = vmatprep.subr.mxu0 0.0
        %1100 = vmatpush1.msra.mxu0 %v1052
        %1101 = vmatprep.subr.mxu0 0.0
        %1102 = vmatpush1.msra.mxu0 %v1051
        %1103 = vmatprep.subr.mxu0 0.0
        %1104 = vmatpush1.msra.mxu0 %v1050
        %1105 = vmatprep.subr.mxu0 0.0
        %1106 = vmatpush2.msra.mxu0 0.0
        %1107 = vmatprep.subr.mxu0 0.0
        %1108 = vmatpush2.msra.mxu0 0.0
        %1109 = vmatprep.subr.mxu0 0.0
        %1110 = vmatpush2.msra.mxu0 0.0
        %1111 = vmatprep.subr.mxu0 0.0
        %1112 = vmatpush2.msra.mxu0 0.0
        %1113 = vmatprep.subr.mxu0 0.0
        %1114 = vmatpush2.msra.mxu0 0.0
        %1115 = vmatprep.subr.mxu0 0.0
        %1116 = vmatpush2.msra.mxu0 0.0
        %1117 = vmatprep.subr.mxu0 0.0
        %1118 = vmatpush2.msra.mxu0 0.0
        %1119 = vmatprep.subr.mxu0 0.0
        %1120 = vmatpush2.msra.mxu0 0.0
        %1121 = vmatprep.subr.mxu0 0.0
        %1122 = vmatpush2.msra.mxu0 0.0
        %1123 = vmatprep.subr.mxu0 0.0
        %1124 = vmatpush2.msra.mxu0 0.0
        %1125 = vmatprep.subr.mxu0 0.0
        %1126 = vmatpush2.msra.mxu0 0.0
        %1127 = vmatprep.subr.mxu0 0.0
        %1128 = vmatpush2.msra.mxu0 0.0
        %1129 = vmatprep.subr.mxu0 0.0
        %1130 = vmatpush2.msra.mxu0 0.0
        %1131 = vmatprep.subr.mxu0 0.0
        %1132 = vmatpush2.msra.mxu0 0.0
        %1133 = vmatprep.subr.mxu0 0.0
        %1134 = vmatpush2.msra.mxu0 0.0
        %1135 = vmatprep.subr.mxu0 0.0
        %1136 = vmatpush2.msra.mxu0 0.0
        %1137 = vmatprep.mubr.f32.mxu0 0.0
        %1138 = vmatmul.mubr.f32.gmra.mxu0 %v1062
        %v1139 = vpop.f32.mrf.mxu0
        %v1140 = vadd.f32 %v1059, %v1139
        %v1141 = vpop.f32.mrf.mxu0
        %1142 = vmatprep.mubr.f32.mxu0 0.0
        %1143 = vmatmul.mubr.f32.gmra.mxu0 %v1065
        %v1144 = vpop.f32.mrf.mxu0
        %v1145 = vadd.f32 %v1059, %v1144
        %v1146 = vpop.f32.mrf.mxu0
        %1147 = vmatprep.mubr.f32.mxu0 0.0
        %1148 = vmatmul.mubr.f32.gmra.mxu0 %v1068
        %v1149 = vpop.f32.mrf.mxu0
        %v1150 = vadd.f32 %v1059, %v1149
        %v1151 = vpop.f32.mrf.mxu0
        %1152 = vmatprep.mubr.f32.mxu0 0.0
        %1153 = vmatmul.mubr.f32.gmra.mxu0 %v1071
        %v1154 = vpop.f32.mrf.mxu0
        %v1155 = vadd.f32 %v1059, %v1154
        %v1156 = vpop.f32.mrf.mxu0
        %1157 = vdwg.mxu0
        %v1158 = vld [vmem:[%s890] sm:$0xff]
        %v1159 = vld [vmem:[%s890 + $0x8] sm:$0xff]
        %v1160 = vld [vmem:[%s890 + $0x10] sm:$0xff]
        %v1161 = vld [vmem:[%s890 + $0x18] sm:$0xff]
        %1164 = vrot.lane.b32.xlu0 %v1042, 96
        %v1165 = vpop.permute.xlu0 %1164
        %1166 = vrot.lane.b32.xlu0 %v1047, 96
        %v1167 = vpop.permute.xlu0 %1166
        %vm1168 = vcmask 64512
        %v1170 = vsel %vm1168, %v1032, 0
        %v1173 = vsel %vm1168, %v1037, 0
        %v1175 = vsel %vm1168, %v1165, 0
        %v1177 = vsel %vm1168, %v1167, 0
        %1179 = vmatprep.subr.mxu0 0.0
        %1180 = vmatpush1.xpose.msra.mxu0 0.0
        %1181 = vmatprep.subr.mxu0 0.0
        %1182 = vmatpush1.xpose.msra.mxu0 0.0
        %1183 = vmatprep.subr.mxu0 0.0
        %1184 = vmatpush1.xpose.msra.mxu0 0.0
        %1185 = vmatprep.subr.mxu0 0.0
        %1186 = vmatpush1.xpose.msra.mxu0 0.0
        %1187 = vmatprep.subr.mxu0 0.0
        %1188 = vmatpush1.xpose.msra.mxu0 0.0
        %1189 = vmatprep.subr.mxu0 0.0
        %1190 = vmatpush1.xpose.msra.mxu0 0.0
        %1191 = vmatprep.subr.mxu0 0.0
        %1192 = vmatpush1.xpose.msra.mxu0 0.0
        %1193 = vmatprep.subr.mxu0 0.0
        %1194 = vmatpush1.xpose.msra.mxu0 0.0
        %1195 = vmatprep.subr.mxu0 0.0
        %1196 = vmatpush1.xpose.msra.mxu0 0.0
        %1197 = vmatprep.subr.mxu0 0.0
        %1198 = vmatpush1.xpose.msra.mxu0 0.0
        %1199 = vmatprep.subr.mxu0 0.0
        %1200 = vmatpush1.xpose.msra.mxu0 0.0
        %1201 = vmatprep.subr.mxu0 0.0
        %1202 = vmatpush1.xpose.msra.mxu0 0.0
        %1203 = vmatprep.subr.mxu0 0.0
        %1204 = vmatpush1.xpose.msra.mxu0 0.0
        %1205 = vmatprep.subr.mxu0 0.0
        %1206 = vmatpush1.xpose.msra.mxu0 0.0
        %1207 = vmatprep.subr.mxu0 0.0
        %1208 = vmatpush1.xpose.msra.mxu0 %v1177
        %1209 = vmatprep.subr.mxu0 0.0
        %1210 = vmatpush1.xpose.msra.mxu0 %v1175
        %1211 = vmatprep.subr.mxu0 0.0
        %1212 = vmatpush2.xpose.msra.mxu0 0.0
        %1213 = vmatprep.subr.mxu0 0.0
        %1214 = vmatpush2.xpose.msra.mxu0 0.0
        %1215 = vmatprep.subr.mxu0 0.0
        %1216 = vmatpush2.xpose.msra.mxu0 0.0
        %1217 = vmatprep.subr.mxu0 0.0
        %1218 = vmatpush2.xpose.msra.mxu0 0.0
        %1219 = vmatprep.subr.mxu0 0.0
        %1220 = vmatpush2.xpose.msra.mxu0 0.0
        %1221 = vmatprep.subr.mxu0 0.0
        %1222 = vmatpush2.xpose.msra.mxu0 0.0
        %1223 = vmatprep.subr.mxu0 0.0
        %1224 = vmatpush2.xpose.msra.mxu0 0.0
        %1225 = vmatprep.subr.mxu0 0.0
        %1226 = vmatpush2.xpose.msra.mxu0 0.0
        %1227 = vmatprep.subr.mxu0 0.0
        %1228 = vmatpush2.xpose.msra.mxu0 0.0
        %1229 = vmatprep.subr.mxu0 0.0
        %1230 = vmatpush2.xpose.msra.mxu0 0.0
        %1231 = vmatprep.subr.mxu0 0.0
        %1232 = vmatpush2.xpose.msra.mxu0 0.0
        %1233 = vmatprep.subr.mxu0 0.0
        %1234 = vmatpush2.xpose.msra.mxu0 0.0
        %1235 = vmatprep.subr.mxu0 0.0
        %1236 = vmatpush2.xpose.msra.mxu0 0.0
        %1237 = vmatprep.subr.mxu0 0.0
        %1238 = vmatpush2.xpose.msra.mxu0 0.0
        %1239 = vmatprep.subr.mxu0 0.0
        %1240 = vmatpush2.xpose.msra.mxu0 0.0
        %1241 = vmatprep.subr.mxu0 0.0
        %1242 = vmatpush2.xpose.msra.mxu0 0.0
        %1243 = vmatprep.mubr.f32.mxu0 0.0
        %1244 = vmatmul.mubr.f32.gmra.mxu0 %v1170
        %v1245 = vpop.f32.mrf.mxu0
        %v1246 = vadd.f32 0.0, %v1245
        %v1247 = vpop.f32.mrf.mxu0
        %1248 = vmatprep.mubr.f32.mxu0 0.0
        %1249 = vmatmul.mubr.f32.gmra.mxu0 %v1173
        %v1250 = vpop.f32.mrf.mxu0
        %v1251 = vadd.f32 0.0, %v1250
        %v1252 = vpop.f32.mrf.mxu0
        %1253 = vdwg.mxu0
        %1254 = vrot.lane.b32.xlu0 %v1032, 96
        %v1255 = vpop.permute.xlu0 %1254
        %1256 = vrot.lane.b32.xlu0 %v1037, 96
        %v1257 = vpop.permute.xlu0 %1256
        %v1258 = vsel %vm1168, %v1042, 0
        %v1260 = vsel %vm1168, %v1047, 0
        %v1262 = vsel %vm1168, %v1255, 0
        %v1264 = vsel %vm1168, %v1257, 0
        %1266 = vmatprep.subr.mxu0 0.0
        %1267 = vmatpush1.xpose.msra.mxu0 0.0
        %1268 = vmatprep.subr.mxu0 0.0
        %1269 = vmatpush1.xpose.msra.mxu0 0.0
        %1270 = vmatprep.subr.mxu0 0.0
        %1271 = vmatpush1.xpose.msra.mxu0 0.0
        %1272 = vmatprep.subr.mxu0 0.0
        %1273 = vmatpush1.xpose.msra.mxu0 0.0
        %1274 = vmatprep.subr.mxu0 0.0
        %1275 = vmatpush1.xpose.msra.mxu0 0.0
        %1276 = vmatprep.subr.mxu0 0.0
        %1277 = vmatpush1.xpose.msra.mxu0 0.0
        %1278 = vmatprep.subr.mxu0 0.0
        %1279 = vmatpush1.xpose.msra.mxu0 0.0
        %1280 = vmatprep.subr.mxu0 0.0
        %1281 = vmatpush1.xpose.msra.mxu0 0.0
        %1282 = vmatprep.subr.mxu0 0.0
        %1283 = vmatpush1.xpose.msra.mxu0 0.0
        %1284 = vmatprep.subr.mxu0 0.0
        %1285 = vmatpush1.xpose.msra.mxu0 0.0
        %1286 = vmatprep.subr.mxu0 0.0
        %1287 = vmatpush1.xpose.msra.mxu0 0.0
        %1288 = vmatprep.subr.mxu0 0.0
        %1289 = vmatpush1.xpose.msra.mxu0 0.0
        %1290 = vmatprep.subr.mxu0 0.0
        %1291 = vmatpush1.xpose.msra.mxu0 0.0
        %1292 = vmatprep.subr.mxu0 0.0
        %1293 = vmatpush1.xpose.msra.mxu0 0.0
        %1294 = vmatprep.subr.mxu0 0.0
        %1295 = vmatpush1.xpose.msra.mxu0 %v1264
        %1296 = vmatprep.subr.mxu0 0.0
        %1297 = vmatpush1.xpose.msra.mxu0 %v1262
        %1298 = vmatprep.subr.mxu0 0.0
        %1299 = vmatpush2.xpose.msra.mxu0 0.0
        %1300 = vmatprep.subr.mxu0 0.0
        %1301 = vmatpush2.xpose.msra.mxu0 0.0
        %1302 = vmatprep.subr.mxu0 0.0
        %1303 = vmatpush2.xpose.msra.mxu0 0.0
        %1304 = vmatprep.subr.mxu0 0.0
        %1305 = vmatpush2.xpose.msra.mxu0 0.0
        %1306 = vmatprep.subr.mxu0 0.0
        %1307 = vmatpush2.xpose.msra.mxu0 0.0
        %1308 = vmatprep.subr.mxu0 0.0
        %1309 = vmatpush2.xpose.msra.mxu0 0.0
        %1310 = vmatprep.subr.mxu0 0.0
        %1311 = vmatpush2.xpose.msra.mxu0 0.0
        %1312 = vmatprep.subr.mxu0 0.0
        %1313 = vmatpush2.xpose.msra.mxu0 0.0
        %1314 = vmatprep.subr.mxu0 0.0
        %1315 = vmatpush2.xpose.msra.mxu0 0.0
        %1316 = vmatprep.subr.mxu0 0.0
        %1317 = vmatpush2.xpose.msra.mxu0 0.0
        %1318 = vmatprep.subr.mxu0 0.0
        %1319 = vmatpush2.xpose.msra.mxu0 0.0
        %1320 = vmatprep.subr.mxu0 0.0
        %1321 = vmatpush2.xpose.msra.mxu0 0.0
        %1322 = vmatprep.subr.mxu0 0.0
        %1323 = vmatpush2.xpose.msra.mxu0 0.0
        %1324 = vmatprep.subr.mxu0 0.0
        %1325 = vmatpush2.xpose.msra.mxu0 0.0
        %1326 = vmatprep.subr.mxu0 0.0
        %1327 = vmatpush2.xpose.msra.mxu0 0.0
        %1328 = vmatprep.subr.mxu0 0.0
        %1329 = vmatpush2.xpose.msra.mxu0 0.0
        %1330 = vmatprep.mubr.f32.mxu0 0.0
        %1331 = vmatmul.mubr.f32.gmra.mxu0 %v1258
        %v1332 = vpop.f32.mrf.mxu0
        %v1333 = vadd.f32 0.0, %v1332
        %v1334 = vpop.f32.mrf.mxu0
        %1335 = vmatprep.mubr.f32.mxu0 0.0
        %1336 = vmatmul.mubr.f32.gmra.mxu0 %v1260
        %v1337 = vpop.f32.mrf.mxu0
        %v1338 = vadd.f32 0.0, %v1337
        %v1339 = vpop.f32.mrf.mxu0
        %1340 = vdwg.mxu0
        %vm1341 = vcmask 130048
        %v1342 = vsel %vm1341, %v1246, -inf
        %1343 = vmax.xlane.f32.xlu0 %v1342
        %v1344 = vpop.xlane.xlu0 %1343
        %v1345 = vsel %vm1341, %v1251, -inf
        %1346 = vmax.xlane.f32.xlu0 %v1345
        %v1347 = vpop.xlane.xlu0 %1346
        %v1348 = vsel %vm1341, %v1333, -inf
        %1349 = vmax.xlane.f32.xlu0 %v1348
        %v1350 = vpop.xlane.xlu0 %1349
        %v1351 = vsel %vm1341, %v1338, -inf
        %1352 = vmax.xlane.f32.xlu0 %v1351
        %v1353 = vpop.xlane.xlu0 %1352
        %v1354 = vsub.f32 %v1246, %v1344
        %v1355 = vsub.f32 %v1251, %v1347
        %v1356 = vsub.f32 %v1333, %v1350
        %v1357 = vsub.f32 %v1338, %v1353
        %v1358 = vmul.f32 %v1354, 1.442695
        %v1359 = vpow.pop %v1358
        %v1360 = vmul.f32 %v1355, 1.442695
        %v1361 = vpow.pop %v1360
        %v1362 = vmul.f32 %v1356, 1.442695
        %v1363 = vpow.pop %v1362
        %v1364 = vmul.f32 %v1357, 1.442695
        %v1365 = vpow.pop %v1364
        %v1366 = vsel %vm1341, %v1359, 0.0
        %1367 = vadd.xlane.f32.xlu0 %v1366
        %v1368 = vpop.xlane.xlu0 %1367
        %v1369 = vsel %vm1341, %v1361, 0.0
        %1370 = vadd.xlane.f32.xlu0 %v1369
        %v1371 = vpop.xlane.xlu0 %1370
        %v1372 = vsel %vm1341, %v1363, 0.0
        %1373 = vadd.xlane.f32.xlu0 %v1372
        %v1374 = vpop.xlane.xlu0 %1373
        %v1375 = vsel %vm1341, %v1365, 0.0
        %1376 = vadd.xlane.f32.xlu0 %v1375
        %v1377 = vpop.xlane.xlu0 %1376
        %v1378 = vrcp.pop %v1368
        %v1379 = vrcp.pop %v1371
        %v1380 = vrcp.pop %v1374
        %v1381 = vrcp.pop %v1377
        %v1382 = vmul.f32 %v1359, %v1378
        %v1383 = vmul.f32 %v1361, %v1379
        %v1384 = vmul.f32 %v1363, %v1380
        %v1385 = vmul.f32 %v1365, %v1381
        %v1387 = vsel %vm1341, %v1382, 0
        %v1390 = vsel %vm1341, %v1383, 0
        %1392 = vmatprep.subr.mxu0 0.0
        %1393 = vmatpush1.msra.mxu0 0.0
        %1394 = vmatprep.subr.mxu0 0.0
        %1395 = vmatpush1.msra.mxu0 0.0
        %1396 = vmatprep.subr.mxu0 0.0
        %1397 = vmatpush1.msra.mxu0 0.0
        %1398 = vmatprep.subr.mxu0 0.0
        %1399 = vmatpush1.msra.mxu0 0.0
        %1400 = vmatprep.subr.mxu0 0.0
        %1401 = vmatpush1.msra.mxu0 0.0
        %1402 = vmatprep.subr.mxu0 0.0
        %1403 = vmatpush1.msra.mxu0 0.0
        %1404 = vmatprep.subr.mxu0 0.0
        %1405 = vmatpush1.msra.mxu0 0.0
        %1406 = vmatprep.subr.mxu0 0.0
        %1407 = vmatpush1.msra.mxu0 0.0
        %1408 = vmatprep.subr.mxu0 0.0
        %1409 = vmatpush1.msra.mxu0 0.0
        %1410 = vmatprep.subr.mxu0 0.0
        %1411 = vmatpush1.msra.mxu0 0.0
        %1412 = vmatprep.subr.mxu0 0.0
        %1413 = vmatpush1.msra.mxu0 0.0
        %1414 = vmatprep.subr.mxu0 0.0
        %1415 = vmatpush1.msra.mxu0 0.0
        %1416 = vmatprep.subr.mxu0 0.0
        %1417 = vmatpush1.msra.mxu0 0.0
        %1418 = vmatprep.subr.mxu0 0.0
        %1419 = vmatpush1.msra.mxu0 0.0
        %1420 = vmatprep.subr.mxu0 0.0
        %1421 = vmatpush1.msra.mxu0 %v1145
        %1422 = vmatprep.subr.mxu0 0.0
        %1423 = vmatpush1.msra.mxu0 %v1140
        %1424 = vmatprep.subr.mxu0 0.0
        %1425 = vmatpush2.msra.mxu0 0.0
        %1426 = vmatprep.subr.mxu0 0.0
        %1427 = vmatpush2.msra.mxu0 0.0
        %1428 = vmatprep.subr.mxu0 0.0
        %1429 = vmatpush2.msra.mxu0 0.0
        %1430 = vmatprep.subr.mxu0 0.0
        %1431 = vmatpush2.msra.mxu0 0.0
        %1432 = vmatprep.subr.mxu0 0.0
        %1433 = vmatpush2.msra.mxu0 0.0
        %1434 = vmatprep.subr.mxu0 0.0
        %1435 = vmatpush2.msra.mxu0 0.0
        %1436 = vmatprep.subr.mxu0 0.0
        %1437 = vmatpush2.msra.mxu0 0.0
        %1438 = vmatprep.subr.mxu0 0.0
        %1439 = vmatpush2.msra.mxu0 0.0
        %1440 = vmatprep.subr.mxu0 0.0
        %1441 = vmatpush2.msra.mxu0 0.0
        %1442 = vmatprep.subr.mxu0 0.0
        %1443 = vmatpush2.msra.mxu0 0.0
        %1444 = vmatprep.subr.mxu0 0.0
        %1445 = vmatpush2.msra.mxu0 0.0
        %1446 = vmatprep.subr.mxu0 0.0
        %1447 = vmatpush2.msra.mxu0 0.0
        %1448 = vmatprep.subr.mxu0 0.0
        %1449 = vmatpush2.msra.mxu0 0.0
        %1450 = vmatprep.subr.mxu0 0.0
        %1451 = vmatpush2.msra.mxu0 0.0
        %1452 = vmatprep.subr.mxu0 0.0
        %1453 = vmatpush2.msra.mxu0 0.0
        %1454 = vmatprep.subr.mxu0 0.0
        %1455 = vmatpush2.msra.mxu0 0.0
        %1456 = vmatprep.mubr.f32.mxu0 0.0
        %1457 = vmatmul.mubr.f32.gmra.mxu0 %v1387
        %v1458 = vpop.f32.mrf.mxu0
        %v1459 = vadd.f32 0.0, %v1458
        %v1460 = vpop.f32.mrf.mxu0
        %1461 = vmatprep.mubr.f32.mxu0 0.0
        %1462 = vmatmul.mubr.f32.gmra.mxu0 %v1390
        %v1463 = vpop.f32.mrf.mxu0
        %v1464 = vadd.f32 0.0, %v1463
        %v1465 = vpop.f32.mrf.mxu0
        %1466 = vdwg.mxu0
        %v1468 = vsel %vm1341, %v1384, 0
        %v1471 = vsel %vm1341, %v1385, 0
        %1473 = vmatprep.subr.mxu0 0.0
        %1474 = vmatpush1.msra.mxu0 0.0
        %1475 = vmatprep.subr.mxu0 0.0
        %1476 = vmatpush1.msra.mxu0 0.0
        %1477 = vmatprep.subr.mxu0 0.0
        %1478 = vmatpush1.msra.mxu0 0.0
        %1479 = vmatprep.subr.mxu0 0.0
        %1480 = vmatpush1.msra.mxu0 0.0
        %1481 = vmatprep.subr.mxu0 0.0
        %1482 = vmatpush1.msra.mxu0 0.0
        %1483 = vmatprep.subr.mxu0 0.0
        %1484 = vmatpush1.msra.mxu0 0.0
        %1485 = vmatprep.subr.mxu0 0.0
        %1486 = vmatpush1.msra.mxu0 0.0
        %1487 = vmatprep.subr.mxu0 0.0
        %1488 = vmatpush1.msra.mxu0 0.0
        %1489 = vmatprep.subr.mxu0 0.0
        %1490 = vmatpush1.msra.mxu0 0.0
        %1491 = vmatprep.subr.mxu0 0.0
        %1492 = vmatpush1.msra.mxu0 0.0
        %1493 = vmatprep.subr.mxu0 0.0
        %1494 = vmatpush1.msra.mxu0 0.0
        %1495 = vmatprep.subr.mxu0 0.0
        %1496 = vmatpush1.msra.mxu0 0.0
        %1497 = vmatprep.subr.mxu0 0.0
        %1498 = vmatpush1.msra.mxu0 0.0
        %1499 = vmatprep.subr.mxu0 0.0
        %1500 = vmatpush1.msra.mxu0 0.0
        %1501 = vmatprep.subr.mxu0 0.0
        %1502 = vmatpush1.msra.mxu0 %v1155
        %1503 = vmatprep.subr.mxu0 0.0
        %1504 = vmatpush1.msra.mxu0 %v1150
        %1505 = vmatprep.subr.mxu0 0.0
        %1506 = vmatpush2.msra.mxu0 0.0
        %1507 = vmatprep.subr.mxu0 0.0
        %1508 = vmatpush2.msra.mxu0 0.0
        %1509 = vmatprep.subr.mxu0 0.0
        %1510 = vmatpush2.msra.mxu0 0.0
        %1511 = vmatprep.subr.mxu0 0.0
        %1512 = vmatpush2.msra.mxu0 0.0
        %1513 = vmatprep.subr.mxu0 0.0
        %1514 = vmatpush2.msra.mxu0 0.0
        %1515 = vmatprep.subr.mxu0 0.0
        %1516 = vmatpush2.msra.mxu0 0.0
        %1517 = vmatprep.subr.mxu0 0.0
        %1518 = vmatpush2.msra.mxu0 0.0
        %1519 = vmatprep.subr.mxu0 0.0
        %1520 = vmatpush2.msra.mxu0 0.0
        %1521 = vmatprep.subr.mxu0 0.0
        %1522 = vmatpush2.msra.mxu0 0.0
        %1523 = vmatprep.subr.mxu0 0.0
        %1524 = vmatpush2.msra.mxu0 0.0
        %1525 = vmatprep.subr.mxu0 0.0
        %1526 = vmatpush2.msra.mxu0 0.0
        %1527 = vmatprep.subr.mxu0 0.0
        %1528 = vmatpush2.msra.mxu0 0.0
        %1529 = vmatprep.subr.mxu0 0.0
        %1530 = vmatpush2.msra.mxu0 0.0
        %1531 = vmatprep.subr.mxu0 0.0
        %1532 = vmatpush2.msra.mxu0 0.0
        %1533 = vmatprep.subr.mxu0 0.0
        %1534 = vmatpush2.msra.mxu0 0.0
        %1535 = vmatprep.subr.mxu0 0.0
        %1536 = vmatpush2.msra.mxu0 0.0
        %1537 = vmatprep.mubr.f32.mxu0 0.0
        %1538 = vmatmul.mubr.f32.gmra.mxu0 %v1468
        %v1539 = vpop.f32.mrf.mxu0
        %v1540 = vadd.f32 0.0, %v1539
        %v1541 = vpop.f32.mrf.mxu0
        %1542 = vmatprep.mubr.f32.mxu0 0.0
        %1543 = vmatmul.mubr.f32.gmra.mxu0 %v1471
        %v1544 = vpop.f32.mrf.mxu0
        %v1545 = vadd.f32 0.0, %v1544
        %v1546 = vpop.f32.mrf.mxu0
        %1547 = vdwg.mxu0
        %1548 = vrot.lane.b32.xlu0 %v1032, 120
        %v1549 = vpop.permute.xlu0 %1548
        %1550 = vrot.lane.b32.xlu0 %v1037, 120
        %v1551 = vpop.permute.xlu0 %1550
        %1552 = vrot.lane.b32.xlu0 %v1042, 88
        %v1553 = vpop.permute.xlu0 %1552
        %1554 = vrot.lane.b32.xlu0 %v1047, 88
        %v1555 = vpop.permute.xlu0 %1554
        %v1556 = vsel %vm1168, %v1549, 0
        %v1558 = vsel %vm1168, %v1551, 0
        %v1560 = vsel %vm1168, %v1553, 0
        %v1562 = vsel %vm1168, %v1555, 0
        %1564 = vmatprep.subr.mxu0 0.0
        %1565 = vmatpush1.xpose.msra.mxu0 0.0
        %1566 = vmatprep.subr.mxu0 0.0
        %1567 = vmatpush1.xpose.msra.mxu0 0.0
        %1568 = vmatprep.subr.mxu0 0.0
        %1569 = vmatpush1.xpose.msra.mxu0 0.0
        %1570 = vmatprep.subr.mxu0 0.0
        %1571 = vmatpush1.xpose.msra.mxu0 0.0
        %1572 = vmatprep.subr.mxu0 0.0
        %1573 = vmatpush1.xpose.msra.mxu0 0.0
        %1574 = vmatprep.subr.mxu0 0.0
        %1575 = vmatpush1.xpose.msra.mxu0 0.0
        %1576 = vmatprep.subr.mxu0 0.0
        %1577 = vmatpush1.xpose.msra.mxu0 0.0
        %1578 = vmatprep.subr.mxu0 0.0
        %1579 = vmatpush1.xpose.msra.mxu0 0.0
        %1580 = vmatprep.subr.mxu0 0.0
        %1581 = vmatpush1.xpose.msra.mxu0 0.0
        %1582 = vmatprep.subr.mxu0 0.0
        %1583 = vmatpush1.xpose.msra.mxu0 0.0
        %1584 = vmatprep.subr.mxu0 0.0
        %1585 = vmatpush1.xpose.msra.mxu0 0.0
        %1586 = vmatprep.subr.mxu0 0.0
        %1587 = vmatpush1.xpose.msra.mxu0 0.0
        %1588 = vmatprep.subr.mxu0 0.0
        %1589 = vmatpush1.xpose.msra.mxu0 0.0
        %1590 = vmatprep.subr.mxu0 0.0
        %1591 = vmatpush1.xpose.msra.mxu0 0.0
        %1592 = vmatprep.subr.mxu0 0.0
        %1593 = vmatpush1.xpose.msra.mxu0 %v1562
        %1594 = vmatprep.subr.mxu0 0.0
        %1595 = vmatpush1.xpose.msra.mxu0 %v1560
        %1596 = vmatprep.subr.mxu0 0.0
        %1597 = vmatpush2.xpose.msra.mxu0 0.0
        %1598 = vmatprep.subr.mxu0 0.0
        %1599 = vmatpush2.xpose.msra.mxu0 0.0
        %1600 = vmatprep.subr.mxu0 0.0
        %1601 = vmatpush2.xpose.msra.mxu0 0.0
        %1602 = vmatprep.subr.mxu0 0.0
        %1603 = vmatpush2.xpose.msra.mxu0 0.0
        %1604 = vmatprep.subr.mxu0 0.0
        %1605 = vmatpush2.xpose.msra.mxu0 0.0
        %1606 = vmatprep.subr.mxu0 0.0
        %1607 = vmatpush2.xpose.msra.mxu0 0.0
        %1608 = vmatprep.subr.mxu0 0.0
        %1609 = vmatpush2.xpose.msra.mxu0 0.0
        %1610 = vmatprep.subr.mxu0 0.0
        %1611 = vmatpush2.xpose.msra.mxu0 0.0
        %1612 = vmatprep.subr.mxu0 0.0
        %1613 = vmatpush2.xpose.msra.mxu0 0.0
        %1614 = vmatprep.subr.mxu0 0.0
        %1615 = vmatpush2.xpose.msra.mxu0 0.0
        %1616 = vmatprep.subr.mxu0 0.0
        %1617 = vmatpush2.xpose.msra.mxu0 0.0
        %1618 = vmatprep.subr.mxu0 0.0
        %1619 = vmatpush2.xpose.msra.mxu0 0.0
        %1620 = vmatprep.subr.mxu0 0.0
        %1621 = vmatpush2.xpose.msra.mxu0 0.0
        %1622 = vmatprep.subr.mxu0 0.0
        %1623 = vmatpush2.xpose.msra.mxu0 0.0
        %1624 = vmatprep.subr.mxu0 0.0
        %1625 = vmatpush2.xpose.msra.mxu0 0.0
        %1626 = vmatprep.subr.mxu0 0.0
        %1627 = vmatpush2.xpose.msra.mxu0 0.0
        %1628 = vmatprep.mubr.f32.mxu0 0.0
        %1629 = vmatmul.mubr.f32.gmra.mxu0 %v1556
        %v1630 = vpop.f32.mrf.mxu0
        %v1631 = vadd.f32 0.0, %v1630
        %v1632 = vpop.f32.mrf.mxu0
        %1633 = vmatprep.mubr.f32.mxu0 0.0
        %1634 = vmatmul.mubr.f32.gmra.mxu0 %v1558
        %v1635 = vpop.f32.mrf.mxu0
        %v1636 = vadd.f32 0.0, %v1635
        %v1637 = vpop.f32.mrf.mxu0
        %1638 = vdwg.mxu0
        %1639 = vrot.lane.b32.xlu0 %v1042, 120
        %v1640 = vpop.permute.xlu0 %1639
        %1641 = vrot.lane.b32.xlu0 %v1047, 120
        %v1642 = vpop.permute.xlu0 %1641
        %1643 = vrot.lane.b32.xlu0 %v1032, 88
        %v1644 = vpop.permute.xlu0 %1643
        %1645 = vrot.lane.b32.xlu0 %v1037, 88
        %v1646 = vpop.permute.xlu0 %1645
        %v1647 = vsel %vm1168, %v1640, 0
        %v1649 = vsel %vm1168, %v1642, 0
        %v1651 = vsel %vm1168, %v1644, 0
        %v1653 = vsel %vm1168, %v1646, 0
        %1655 = vmatprep.subr.mxu0 0.0
        %1656 = vmatpush1.xpose.msra.mxu0 0.0
        %1657 = vmatprep.subr.mxu0 0.0
        %1658 = vmatpush1.xpose.msra.mxu0 0.0
        %1659 = vmatprep.subr.mxu0 0.0
        %1660 = vmatpush1.xpose.msra.mxu0 0.0
        %1661 = vmatprep.subr.mxu0 0.0
        %1662 = vmatpush1.xpose.msra.mxu0 0.0
        %1663 = vmatprep.subr.mxu0 0.0
        %1664 = vmatpush1.xpose.msra.mxu0 0.0
        %1665 = vmatprep.subr.mxu0 0.0
        %1666 = vmatpush1.xpose.msra.mxu0 0.0
        %1667 = vmatprep.subr.mxu0 0.0
        %1668 = vmatpush1.xpose.msra.mxu0 0.0
        %1669 = vmatprep.subr.mxu0 0.0
        %1670 = vmatpush1.xpose.msra.mxu0 0.0
        %1671 = vmatprep.subr.mxu0 0.0
        %1672 = vmatpush1.xpose.msra.mxu0 0.0
        %1673 = vmatprep.subr.mxu0 0.0
        %1674 = vmatpush1.xpose.msra.mxu0 0.0
        %1675 = vmatprep.subr.mxu0 0.0
        %1676 = vmatpush1.xpose.msra.mxu0 0.0
        %1677 = vmatprep.subr.mxu0 0.0
        %1678 = vmatpush1.xpose.msra.mxu0 0.0
        %1679 = vmatprep.subr.mxu0 0.0
        %1680 = vmatpush1.xpose.msra.mxu0 0.0
        %1681 = vmatprep.subr.mxu0 0.0
        %1682 = vmatpush1.xpose.msra.mxu0 0.0
        %1683 = vmatprep.subr.mxu0 0.0
        %1684 = vmatpush1.xpose.msra.mxu0 %v1653
        %1685 = vmatprep.subr.mxu0 0.0
        %1686 = vmatpush1.xpose.msra.mxu0 %v1651
        %1687 = vmatprep.subr.mxu0 0.0
        %1688 = vmatpush2.xpose.msra.mxu0 0.0
        %1689 = vmatprep.subr.mxu0 0.0
        %1690 = vmatpush2.xpose.msra.mxu0 0.0
        %1691 = vmatprep.subr.mxu0 0.0
        %1692 = vmatpush2.xpose.msra.mxu0 0.0
        %1693 = vmatprep.subr.mxu0 0.0
        %1694 = vmatpush2.xpose.msra.mxu0 0.0
        %1695 = vmatprep.subr.mxu0 0.0
        %1696 = vmatpush2.xpose.msra.mxu0 0.0
        %1697 = vmatprep.subr.mxu0 0.0
        %1698 = vmatpush2.xpose.msra.mxu0 0.0
        %1699 = vmatprep.subr.mxu0 0.0
        %1700 = vmatpush2.xpose.msra.mxu0 0.0
        %1701 = vmatprep.subr.mxu0 0.0
        %1702 = vmatpush2.xpose.msra.mxu0 0.0
        %1703 = vmatprep.subr.mxu0 0.0
        %1704 = vmatpush2.xpose.msra.mxu0 0.0
        %1705 = vmatprep.subr.mxu0 0.0
        %1706 = vmatpush2.xpose.msra.mxu0 0.0
        %1707 = vmatprep.subr.mxu0 0.0
        %1708 = vmatpush2.xpose.msra.mxu0 0.0
        %1709 = vmatprep.subr.mxu0 0.0
        %1710 = vmatpush2.xpose.msra.mxu0 0.0
        %1711 = vmatprep.subr.mxu0 0.0
        %1712 = vmatpush2.xpose.msra.mxu0 0.0
        %1713 = vmatprep.subr.mxu0 0.0
        %1714 = vmatpush2.xpose.msra.mxu0 0.0
        %1715 = vmatprep.subr.mxu0 0.0
        %1716 = vmatpush2.xpose.msra.mxu0 0.0
        %1717 = vmatprep.subr.mxu0 0.0
        %1718 = vmatpush2.xpose.msra.mxu0 0.0
        %1719 = vmatprep.mubr.f32.mxu0 0.0
        %1720 = vmatmul.mubr.f32.gmra.mxu0 %v1647
        %v1721 = vpop.f32.mrf.mxu0
        %v1722 = vadd.f32 0.0, %v1721
        %v1723 = vpop.f32.mrf.mxu0
        %1724 = vmatprep.mubr.f32.mxu0 0.0
        %1725 = vmatmul.mubr.f32.gmra.mxu0 %v1649
        %v1726 = vpop.f32.mrf.mxu0
        %v1727 = vadd.f32 0.0, %v1726
        %v1728 = vpop.f32.mrf.mxu0
        %1729 = vdwg.mxu0
        %v1730 = vsel %vm1341, %v1631, -inf
        %1731 = vmax.xlane.f32.xlu0 %v1730
        %v1732 = vpop.xlane.xlu0 %1731
        %v1733 = vsel %vm1341, %v1636, -inf
        %1734 = vmax.xlane.f32.xlu0 %v1733
        %v1735 = vpop.xlane.xlu0 %1734
        %v1736 = vsel %vm1341, %v1722, -inf
        %1737 = vmax.xlane.f32.xlu0 %v1736
        %v1738 = vpop.xlane.xlu0 %1737
        %v1739 = vsel %vm1341, %v1727, -inf
        %1740 = vmax.xlane.f32.xlu0 %v1739
        %v1741 = vpop.xlane.xlu0 %1740
        %v1742 = vsub.f32 %v1631, %v1732
        %v1743 = vsub.f32 %v1636, %v1735
        %v1744 = vsub.f32 %v1722, %v1738
        %v1745 = vsub.f32 %v1727, %v1741
        %v1746 = vmul.f32 %v1742, 1.442695
        %v1747 = vpow.pop %v1746
        %v1748 = vmul.f32 %v1743, 1.442695
        %v1749 = vpow.pop %v1748
        %v1750 = vmul.f32 %v1744, 1.442695
        %v1751 = vpow.pop %v1750
        %v1752 = vmul.f32 %v1745, 1.442695
        %v1753 = vpow.pop %v1752
        %v1754 = vsel %vm1341, %v1747, 0.0
        %1755 = vadd.xlane.f32.xlu0 %v1754
        %v1756 = vpop.xlane.xlu0 %1755
        %v1757 = vsel %vm1341, %v1749, 0.0
        %1758 = vadd.xlane.f32.xlu0 %v1757
        %v1759 = vpop.xlane.xlu0 %1758
        %v1760 = vsel %vm1341, %v1751, 0.0
        %1761 = vadd.xlane.f32.xlu0 %v1760
        %v1762 = vpop.xlane.xlu0 %1761
        %v1763 = vsel %vm1341, %v1753, 0.0
        %1764 = vadd.xlane.f32.xlu0 %v1763
        %v1765 = vpop.xlane.xlu0 %1764
        %v1766 = vrcp.pop %v1756
        %v1767 = vrcp.pop %v1759
        %v1768 = vrcp.pop %v1762
        %v1769 = vrcp.pop %v1765
        %v1770 = vmul.f32 %v1747, %v1766
        %v1771 = vmul.f32 %v1749, %v1767
        %v1772 = vmul.f32 %v1751, %v1768
        %v1773 = vmul.f32 %v1753, %v1769
        %1776 = vrot.lane.b32.xlu0 %v1140, 120
        %v1777 = vpop.permute.xlu0 %1776
        %1778 = vrot.lane.b32.xlu0 %v1145, 120
        %v1779 = vpop.permute.xlu0 %1778
        %v1783 = vsel %vm1341, %v1770, 0
        %v1786 = vsel %vm1341, %v1771, 0
        %1788 = vmatprep.subr.mxu0 0.0
        %1789 = vmatpush1.msra.mxu0 0.0
        %1790 = vmatprep.subr.mxu0 0.0
        %1791 = vmatpush1.msra.mxu0 0.0
        %1792 = vmatprep.subr.mxu0 0.0
        %1793 = vmatpush1.msra.mxu0 0.0
        %1794 = vmatprep.subr.mxu0 0.0
        %1795 = vmatpush1.msra.mxu0 0.0
        %1796 = vmatprep.subr.mxu0 0.0
        %1797 = vmatpush1.msra.mxu0 0.0
        %1798 = vmatprep.subr.mxu0 0.0
        %1799 = vmatpush1.msra.mxu0 0.0
        %1800 = vmatprep.subr.mxu0 0.0
        %1801 = vmatpush1.msra.mxu0 0.0
        %1802 = vmatprep.subr.mxu0 0.0
        %1803 = vmatpush1.msra.mxu0 0.0
        %1804 = vmatprep.subr.mxu0 0.0
        %1805 = vmatpush1.msra.mxu0 0.0
        %1806 = vmatprep.subr.mxu0 0.0
        %1807 = vmatpush1.msra.mxu0 0.0
        %1808 = vmatprep.subr.mxu0 0.0
        %1809 = vmatpush1.msra.mxu0 0.0
        %1810 = vmatprep.subr.mxu0 0.0
        %1811 = vmatpush1.msra.mxu0 0.0
        %1812 = vmatprep.subr.mxu0 0.0
        %1813 = vmatpush1.msra.mxu0 0.0
        %1814 = vmatprep.subr.mxu0 0.0
        %1815 = vmatpush1.msra.mxu0 0.0
        %1816 = vmatprep.subr.mxu0 0.0
        %1817 = vmatpush1.msra.mxu0 %v1779
        %1818 = vmatprep.subr.mxu0 0.0
        %1819 = vmatpush1.msra.mxu0 %v1777
        %1820 = vmatprep.subr.mxu0 0.0
        %1821 = vmatpush2.msra.mxu0 0.0
        %1822 = vmatprep.subr.mxu0 0.0
        %1823 = vmatpush2.msra.mxu0 0.0
        %1824 = vmatprep.subr.mxu0 0.0
        %1825 = vmatpush2.msra.mxu0 0.0
        %1826 = vmatprep.subr.mxu0 0.0
        %1827 = vmatpush2.msra.mxu0 0.0
        %1828 = vmatprep.subr.mxu0 0.0
        %1829 = vmatpush2.msra.mxu0 0.0
        %1830 = vmatprep.subr.mxu0 0.0
        %1831 = vmatpush2.msra.mxu0 0.0
        %1832 = vmatprep.subr.mxu0 0.0
        %1833 = vmatpush2.msra.mxu0 0.0
        %1834 = vmatprep.subr.mxu0 0.0
        %1835 = vmatpush2.msra.mxu0 0.0
        %1836 = vmatprep.subr.mxu0 0.0
        %1837 = vmatpush2.msra.mxu0 0.0
        %1838 = vmatprep.subr.mxu0 0.0
        %1839 = vmatpush2.msra.mxu0 0.0
        %1840 = vmatprep.subr.mxu0 0.0
        %1841 = vmatpush2.msra.mxu0 0.0
        %1842 = vmatprep.subr.mxu0 0.0
        %1843 = vmatpush2.msra.mxu0 0.0
        %1844 = vmatprep.subr.mxu0 0.0
        %1845 = vmatpush2.msra.mxu0 0.0
        %1846 = vmatprep.subr.mxu0 0.0
        %1847 = vmatpush2.msra.mxu0 0.0
        %1848 = vmatprep.subr.mxu0 0.0
        %1849 = vmatpush2.msra.mxu0 0.0
        %1850 = vmatprep.subr.mxu0 0.0
        %1851 = vmatpush2.msra.mxu0 0.0
        %1852 = vmatprep.mubr.f32.mxu0 0.0
        %1853 = vmatmul.mubr.f32.gmra.mxu0 %v1783
        %v1854 = vpop.f32.mrf.mxu0
        %v1855 = vadd.f32 0.0, %v1854
        %v1856 = vpop.f32.mrf.mxu0
        %1857 = vmatprep.mubr.f32.mxu0 0.0
        %1858 = vmatmul.mubr.f32.gmra.mxu0 %v1786
        %v1859 = vpop.f32.mrf.mxu0
        %v1860 = vadd.f32 0.0, %v1859
        %v1861 = vpop.f32.mrf.mxu0
        %1862 = vdwg.mxu0
        %1865 = vrot.lane.b32.xlu0 %v1150, 120
        %v1866 = vpop.permute.xlu0 %1865
        %1867 = vrot.lane.b32.xlu0 %v1155, 120
        %v1868 = vpop.permute.xlu0 %1867
        %v1872 = vsel %vm1341, %v1772, 0
        %v1875 = vsel %vm1341, %v1773, 0
        %1877 = vmatprep.subr.mxu0 0.0
        %1878 = vmatpush1.msra.mxu0 0.0
        %1879 = vmatprep.subr.mxu0 0.0
        %1880 = vmatpush1.msra.mxu0 0.0
        %1881 = vmatprep.subr.mxu0 0.0
        %1882 = vmatpush1.msra.mxu0 0.0
        %1883 = vmatprep.subr.mxu0 0.0
        %1884 = vmatpush1.msra.mxu0 0.0
        %1885 = vmatprep.subr.mxu0 0.0
        %1886 = vmatpush1.msra.mxu0 0.0
        %1887 = vmatprep.subr.mxu0 0.0
        %1888 = vmatpush1.msra.mxu0 0.0
        %1889 = vmatprep.subr.mxu0 0.0
        %1890 = vmatpush1.msra.mxu0 0.0
        %1891 = vmatprep.subr.mxu0 0.0
        %1892 = vmatpush1.msra.mxu0 0.0
        %1893 = vmatprep.subr.mxu0 0.0
        %1894 = vmatpush1.msra.mxu0 0.0
        %1895 = vmatprep.subr.mxu0 0.0
        %1896 = vmatpush1.msra.mxu0 0.0
        %1897 = vmatprep.subr.mxu0 0.0
        %1898 = vmatpush1.msra.mxu0 0.0
        %1899 = vmatprep.subr.mxu0 0.0
        %1900 = vmatpush1.msra.mxu0 0.0
        %1901 = vmatprep.subr.mxu0 0.0
        %1902 = vmatpush1.msra.mxu0 0.0
        %1903 = vmatprep.subr.mxu0 0.0
        %1904 = vmatpush1.msra.mxu0 0.0
        %1905 = vmatprep.subr.mxu0 0.0
        %1906 = vmatpush1.msra.mxu0 %v1868
        %1907 = vmatprep.subr.mxu0 0.0
        %1908 = vmatpush1.msra.mxu0 %v1866
        %1909 = vmatprep.subr.mxu0 0.0
        %1910 = vmatpush2.msra.mxu0 0.0
        %1911 = vmatprep.subr.mxu0 0.0
        %1912 = vmatpush2.msra.mxu0 0.0
        %1913 = vmatprep.subr.mxu0 0.0
        %1914 = vmatpush2.msra.mxu0 0.0
        %1915 = vmatprep.subr.mxu0 0.0
        %1916 = vmatpush2.msra.mxu0 0.0
        %1917 = vmatprep.subr.mxu0 0.0
        %1918 = vmatpush2.msra.mxu0 0.0
        %1919 = vmatprep.subr.mxu0 0.0
        %1920 = vmatpush2.msra.mxu0 0.0
        %1921 = vmatprep.subr.mxu0 0.0
        %1922 = vmatpush2.msra.mxu0 0.0
        %1923 = vmatprep.subr.mxu0 0.0
        %1924 = vmatpush2.msra.mxu0 0.0
        %1925 = vmatprep.subr.mxu0 0.0
        %1926 = vmatpush2.msra.mxu0 0.0
        %1927 = vmatprep.subr.mxu0 0.0
        %1928 = vmatpush2.msra.mxu0 0.0
        %1929 = vmatprep.subr.mxu0 0.0
        %1930 = vmatpush2.msra.mxu0 0.0
        %1931 = vmatprep.subr.mxu0 0.0
        %1932 = vmatpush2.msra.mxu0 0.0
        %1933 = vmatprep.subr.mxu0 0.0
        %1934 = vmatpush2.msra.mxu0 0.0
        %1935 = vmatprep.subr.mxu0 0.0
        %1936 = vmatpush2.msra.mxu0 0.0
        %1937 = vmatprep.subr.mxu0 0.0
        %1938 = vmatpush2.msra.mxu0 0.0
        %1939 = vmatprep.subr.mxu0 0.0
        %1940 = vmatpush2.msra.mxu0 0.0
        %1941 = vmatprep.mubr.f32.mxu0 0.0
        %1942 = vmatmul.mubr.f32.gmra.mxu0 %v1872
        %v1943 = vpop.f32.mrf.mxu0
        %v1944 = vadd.f32 0.0, %v1943
        %v1945 = vpop.f32.mrf.mxu0
        %1946 = vmatprep.mubr.f32.mxu0 0.0
        %1947 = vmatmul.mubr.f32.gmra.mxu0 %v1875
        %v1948 = vpop.f32.mrf.mxu0
        %v1949 = vadd.f32 0.0, %v1948
        %v1950 = vpop.f32.mrf.mxu0
        %1951 = vdwg.mxu0
        %v1953 = vsel %vm1168, %v1855, 0
        %v1956 = vsel %vm1168, %v1860, 0
        %v1959 = vsel %vm1168, %v1944, 0
        %v1962 = vsel %vm1168, %v1949, 0
        %1964 = vmatprep.subr.mxu0 0.0
        %1965 = vmatpush1.msra.mxu0 0.0
        %1966 = vmatprep.subr.mxu0 0.0
        %1967 = vmatpush1.msra.mxu0 0.0
        %1968 = vmatprep.subr.mxu0 0.0
        %1969 = vmatpush1.msra.mxu0 0.0
        %1970 = vmatprep.subr.mxu0 0.0
        %1971 = vmatpush1.msra.mxu0 0.0
        %1972 = vmatprep.subr.mxu0 0.0
        %1973 = vmatpush1.msra.mxu0 0.0
        %1974 = vmatprep.subr.mxu0 0.0
        %1975 = vmatpush1.msra.mxu0 0.0
        %1976 = vmatprep.subr.mxu0 0.0
        %1977 = vmatpush1.msra.mxu0 0.0
        %1978 = vmatprep.subr.mxu0 0.0
        %1979 = vmatpush1.msra.mxu0 0.0
        %1980 = vmatprep.subr.mxu0 0.0
        %1981 = vmatpush1.msra.mxu0 0.0
        %1982 = vmatprep.subr.mxu0 0.0
        %1983 = vmatpush1.msra.mxu0 0.0
        %1984 = vmatprep.subr.mxu0 0.0
        %1985 = vmatpush1.msra.mxu0 0.0
        %1986 = vmatprep.subr.mxu0 0.0
        %1987 = vmatpush1.msra.mxu0 0.0
        %1988 = vmatprep.subr.mxu0 0.0
        %1989 = vmatpush1.msra.mxu0 0.0
        %1990 = vmatprep.subr.mxu0 0.0
        %1991 = vmatpush1.msra.mxu0 0.0
        %1992 = vmatprep.subr.mxu0 0.0
        %1993 = vmatpush1.msra.mxu0 0.0
        %1994 = vmatprep.subr.mxu0 0.0
        %1995 = vmatpush1.msra.mxu0 %v1159
        %1996 = vmatprep.subr.mxu0 0.0
        %1997 = vmatpush2.msra.mxu0 0.0
        %1998 = vmatprep.subr.mxu0 0.0
        %1999 = vmatpush2.msra.mxu0 0.0
        %2000 = vmatprep.subr.mxu0 0.0
        %2001 = vmatpush2.msra.mxu0 0.0
        %2002 = vmatprep.subr.mxu0 0.0
        %2003 = vmatpush2.msra.mxu0 0.0
        %2004 = vmatprep.subr.mxu0 0.0
        %2005 = vmatpush2.msra.mxu0 0.0
        %2006 = vmatprep.subr.mxu0 0.0
        %2007 = vmatpush2.msra.mxu0 0.0
        %2008 = vmatprep.subr.mxu0 0.0
        %2009 = vmatpush2.msra.mxu0 0.0
        %2010 = vmatprep.subr.mxu0 0.0
        %2011 = vmatpush2.msra.mxu0 0.0
        %2012 = vmatprep.subr.mxu0 0.0
        %2013 = vmatpush2.msra.mxu0 0.0
        %2014 = vmatprep.subr.mxu0 0.0
        %2015 = vmatpush2.msra.mxu0 0.0
        %2016 = vmatprep.subr.mxu0 0.0
        %2017 = vmatpush2.msra.mxu0 0.0
        %2018 = vmatprep.subr.mxu0 0.0
        %2019 = vmatpush2.msra.mxu0 0.0
        %2020 = vmatprep.subr.mxu0 0.0
        %2021 = vmatpush2.msra.mxu0 0.0
        %2022 = vmatprep.subr.mxu0 0.0
        %2023 = vmatpush2.msra.mxu0 0.0
        %2024 = vmatprep.subr.mxu0 0.0
        %2025 = vmatpush2.msra.mxu0 0.0
        %2026 = vmatprep.subr.mxu0 0.0
        %2027 = vmatpush2.msra.mxu0 0.0
        %2028 = vmatprep.mubr.f32.mxu0 0.0
        %2029 = vmatmul.mubr.f32.gmra.mxu0 %v1953
        %v2030 = vpop.f32.mrf.mxu0
        %v2031 = vadd.f32 0.0, %v2030
        %v2032 = vpop.f32.mrf.mxu0
        %2033 = vmatprep.mubr.f32.mxu0 0.0
        %2034 = vmatmul.mubr.f32.gmra.mxu0 %v1956
        %v2035 = vpop.f32.mrf.mxu0
        %v2036 = vadd.f32 0.0, %v2035
        %v2037 = vpop.f32.mrf.mxu0
        %2038 = vmatprep.mubr.f32.mxu0 0.0
        %2039 = vmatmul.mubr.f32.gmra.mxu0 %v1959
        %v2040 = vpop.f32.mrf.mxu0
        %v2041 = vadd.f32 0.0, %v2040
        %v2042 = vpop.f32.mrf.mxu0
        %2043 = vmatprep.mubr.f32.mxu0 0.0
        %2044 = vmatmul.mubr.f32.gmra.mxu0 %v1962
        %v2045 = vpop.f32.mrf.mxu0
        %v2046 = vadd.f32 0.0, %v2045
        %v2047 = vpop.f32.mrf.mxu0
        %2048 = vdwg.mxu0
        %v2050 = vsel %vm1168, %v1459, 0
        %v2053 = vsel %vm1168, %v1464, 0
        %v2056 = vsel %vm1168, %v1540, 0
        %v2059 = vsel %vm1168, %v1545, 0
        %2061 = vmatprep.subr.mxu0 0.0
        %2062 = vmatpush1.msra.mxu0 0.0
        %2063 = vmatprep.subr.mxu0 0.0
        %2064 = vmatpush1.msra.mxu0 0.0
        %2065 = vmatprep.subr.mxu0 0.0
        %2066 = vmatpush1.msra.mxu0 0.0
        %2067 = vmatprep.subr.mxu0 0.0
        %2068 = vmatpush1.msra.mxu0 0.0
        %2069 = vmatprep.subr.mxu0 0.0
        %2070 = vmatpush1.msra.mxu0 0.0
        %2071 = vmatprep.subr.mxu0 0.0
        %2072 = vmatpush1.msra.mxu0 0.0
        %2073 = vmatprep.subr.mxu0 0.0
        %2074 = vmatpush1.msra.mxu0 0.0
        %2075 = vmatprep.subr.mxu0 0.0
        %2076 = vmatpush1.msra.mxu0 0.0
        %2077 = vmatprep.subr.mxu0 0.0
        %2078 = vmatpush1.msra.mxu0 0.0
        %2079 = vmatprep.subr.mxu0 0.0
        %2080 = vmatpush1.msra.mxu0 0.0
        %2081 = vmatprep.subr.mxu0 0.0
        %2082 = vmatpush1.msra.mxu0 0.0
        %2083 = vmatprep.subr.mxu0 0.0
        %2084 = vmatpush1.msra.mxu0 0.0
        %2085 = vmatprep.subr.mxu0 0.0
        %2086 = vmatpush1.msra.mxu0 0.0
        %2087 = vmatprep.subr.mxu0 0.0
        %2088 = vmatpush1.msra.mxu0 0.0
        %2089 = vmatprep.subr.mxu0 0.0
        %2090 = vmatpush1.msra.mxu0 0.0
        %2091 = vmatprep.subr.mxu0 0.0
        %2092 = vmatpush1.msra.mxu0 %v1158
        %2093 = vmatprep.subr.mxu0 0.0
        %2094 = vmatpush2.msra.mxu0 0.0
        %2095 = vmatprep.subr.mxu0 0.0
        %2096 = vmatpush2.msra.mxu0 0.0
        %2097 = vmatprep.subr.mxu0 0.0
        %2098 = vmatpush2.msra.mxu0 0.0
        %2099 = vmatprep.subr.mxu0 0.0
        %2100 = vmatpush2.msra.mxu0 0.0
        %2101 = vmatprep.subr.mxu0 0.0
        %2102 = vmatpush2.msra.mxu0 0.0
        %2103 = vmatprep.subr.mxu0 0.0
        %2104 = vmatpush2.msra.mxu0 0.0
        %2105 = vmatprep.subr.mxu0 0.0
        %2106 = vmatpush2.msra.mxu0 0.0
        %2107 = vmatprep.subr.mxu0 0.0
        %2108 = vmatpush2.msra.mxu0 0.0
        %2109 = vmatprep.subr.mxu0 0.0
        %2110 = vmatpush2.msra.mxu0 0.0
        %2111 = vmatprep.subr.mxu0 0.0
        %2112 = vmatpush2.msra.mxu0 0.0
        %2113 = vmatprep.subr.mxu0 0.0
        %2114 = vmatpush2.msra.mxu0 0.0
        %2115 = vmatprep.subr.mxu0 0.0
        %2116 = vmatpush2.msra.mxu0 0.0
        %2117 = vmatprep.subr.mxu0 0.0
        %2118 = vmatpush2.msra.mxu0 0.0
        %2119 = vmatprep.subr.mxu0 0.0
        %2120 = vmatpush2.msra.mxu0 0.0
        %2121 = vmatprep.subr.mxu0 0.0
        %2122 = vmatpush2.msra.mxu0 0.0
        %2123 = vmatprep.subr.mxu0 0.0
        %2124 = vmatpush2.msra.mxu0 0.0
        %2125 = vmatprep.mubr.f32.mxu0 0.0
        %2126 = vmatmul.mubr.f32.gmra.mxu0 %v2050
        %v2127 = vpop.f32.mrf.mxu0
        %v2128 = vadd.f32 %v2031, %v2127
        %v2129 = vpop.f32.mrf.mxu0
        %2130 = vmatprep.mubr.f32.mxu0 0.0
        %2131 = vmatmul.mubr.f32.gmra.mxu0 %v2053
        %v2132 = vpop.f32.mrf.mxu0
        %v2133 = vadd.f32 %v2036, %v2132
        %v2134 = vpop.f32.mrf.mxu0
        %2135 = vmatprep.mubr.f32.mxu0 0.0
        %2136 = vmatmul.mubr.f32.gmra.mxu0 %v2056
        %v2137 = vpop.f32.mrf.mxu0
        %v2138 = vadd.f32 %v2041, %v2137
        %v2139 = vpop.f32.mrf.mxu0
        %2140 = vmatprep.mubr.f32.mxu0 0.0
        %2141 = vmatmul.mubr.f32.gmra.mxu0 %v2059
        %v2142 = vpop.f32.mrf.mxu0
        %v2143 = vadd.f32 %v2046, %v2142
        %v2144 = vpop.f32.mrf.mxu0
        %2145 = vdwg.mxu0
        %2146 = vrot.lane.b32.xlu0 %v1032, 112
        %v2147 = vpop.permute.xlu0 %2146
        %2148 = vrot.lane.b32.xlu0 %v1037, 112
        %v2149 = vpop.permute.xlu0 %2148
        %2150 = vrot.lane.b32.xlu0 %v1042, 80
        %v2151 = vpop.permute.xlu0 %2150
        %2152 = vrot.lane.b32.xlu0 %v1047, 80
        %v2153 = vpop.permute.xlu0 %2152
        %v2154 = vsel %vm1168, %v2147, 0
        %v2156 = vsel %vm1168, %v2149, 0
        %v2158 = vsel %vm1168, %v2151, 0
        %v2160 = vsel %vm1168, %v2153, 0
        %2162 = vmatprep.subr.mxu0 0.0
        %2163 = vmatpush1.xpose.msra.mxu0 0.0
        %2164 = vmatprep.subr.mxu0 0.0
        %2165 = vmatpush1.xpose.msra.mxu0 0.0
        %2166 = vmatprep.subr.mxu0 0.0
        %2167 = vmatpush1.xpose.msra.mxu0 0.0
        %2168 = vmatprep.subr.mxu0 0.0
        %2169 = vmatpush1.xpose.msra.mxu0 0.0
        %2170 = vmatprep.subr.mxu0 0.0
        %2171 = vmatpush1.xpose.msra.mxu0 0.0
        %2172 = vmatprep.subr.mxu0 0.0
        %2173 = vmatpush1.xpose.msra.mxu0 0.0
        %2174 = vmatprep.subr.mxu0 0.0
        %2175 = vmatpush1.xpose.msra.mxu0 0.0
        %2176 = vmatprep.subr.mxu0 0.0
        %2177 = vmatpush1.xpose.msra.mxu0 0.0
        %2178 = vmatprep.subr.mxu0 0.0
        %2179 = vmatpush1.xpose.msra.mxu0 0.0
        %2180 = vmatprep.subr.mxu0 0.0
        %2181 = vmatpush1.xpose.msra.mxu0 0.0
        %2182 = vmatprep.subr.mxu0 0.0
        %2183 = vmatpush1.xpose.msra.mxu0 0.0
        %2184 = vmatprep.subr.mxu0 0.0
        %2185 = vmatpush1.xpose.msra.mxu0 0.0
        %2186 = vmatprep.subr.mxu0 0.0
        %2187 = vmatpush1.xpose.msra.mxu0 0.0
        %2188 = vmatprep.subr.mxu0 0.0
        %2189 = vmatpush1.xpose.msra.mxu0 0.0
        %2190 = vmatprep.subr.mxu0 0.0
        %2191 = vmatpush1.xpose.msra.mxu0 %v2160
        %2192 = vmatprep.subr.mxu0 0.0
        %2193 = vmatpush1.xpose.msra.mxu0 %v2158
        %2194 = vmatprep.subr.mxu0 0.0
        %2195 = vmatpush2.xpose.msra.mxu0 0.0
        %2196 = vmatprep.subr.mxu0 0.0
        %2197 = vmatpush2.xpose.msra.mxu0 0.0
        %2198 = vmatprep.subr.mxu0 0.0
        %2199 = vmatpush2.xpose.msra.mxu0 0.0
        %2200 = vmatprep.subr.mxu0 0.0
        %2201 = vmatpush2.xpose.msra.mxu0 0.0
        %2202 = vmatprep.subr.mxu0 0.0
        %2203 = vmatpush2.xpose.msra.mxu0 0.0
        %2204 = vmatprep.subr.mxu0 0.0
        %2205 = vmatpush2.xpose.msra.mxu0 0.0
        %2206 = vmatprep.subr.mxu0 0.0
        %2207 = vmatpush2.xpose.msra.mxu0 0.0
        %2208 = vmatprep.subr.mxu0 0.0
        %2209 = vmatpush2.xpose.msra.mxu0 0.0
        %2210 = vmatprep.subr.mxu0 0.0
        %2211 = vmatpush2.xpose.msra.mxu0 0.0
        %2212 = vmatprep.subr.mxu0 0.0
        %2213 = vmatpush2.xpose.msra.mxu0 0.0
        %2214 = vmatprep.subr.mxu0 0.0
        %2215 = vmatpush2.xpose.msra.mxu0 0.0
        %2216 = vmatprep.subr.mxu0 0.0
        %2217 = vmatpush2.xpose.msra.mxu0 0.0
        %2218 = vmatprep.subr.mxu0 0.0
        %2219 = vmatpush2.xpose.msra.mxu0 0.0
        %2220 = vmatprep.subr.mxu0 0.0
        %2221 = vmatpush2.xpose.msra.mxu0 0.0
        %2222 = vmatprep.subr.mxu0 0.0
        %2223 = vmatpush2.xpose.msra.mxu0 0.0
        %2224 = vmatprep.subr.mxu0 0.0
        %2225 = vmatpush2.xpose.msra.mxu0 0.0
        %2226 = vmatprep.mubr.f32.mxu0 0.0
        %2227 = vmatmul.mubr.f32.gmra.mxu0 %v2154
        %v2228 = vpop.f32.mrf.mxu0
        %v2229 = vadd.f32 0.0, %v2228
        %v2230 = vpop.f32.mrf.mxu0
        %2231 = vmatprep.mubr.f32.mxu0 0.0
        %2232 = vmatmul.mubr.f32.gmra.mxu0 %v2156
        %v2233 = vpop.f32.mrf.mxu0
        %v2234 = vadd.f32 0.0, %v2233
        %v2235 = vpop.f32.mrf.mxu0
        %2236 = vdwg.mxu0
        %2237 = vrot.lane.b32.xlu0 %v1042, 112
        %v2238 = vpop.permute.xlu0 %2237
        %2239 = vrot.lane.b32.xlu0 %v1047, 112
        %v2240 = vpop.permute.xlu0 %2239
        %2241 = vrot.lane.b32.xlu0 %v1032, 80
        %v2242 = vpop.permute.xlu0 %2241
        %2243 = vrot.lane.b32.xlu0 %v1037, 80
        %v2244 = vpop.permute.xlu0 %2243
        %v2245 = vsel %vm1168, %v2238, 0
        %v2247 = vsel %vm1168, %v2240, 0
        %v2249 = vsel %vm1168, %v2242, 0
        %v2251 = vsel %vm1168, %v2244, 0
        %2253 = vmatprep.subr.mxu0 0.0
        %2254 = vmatpush1.xpose.msra.mxu0 0.0
        %2255 = vmatprep.subr.mxu0 0.0
        %2256 = vmatpush1.xpose.msra.mxu0 0.0
        %2257 = vmatprep.subr.mxu0 0.0
        %2258 = vmatpush1.xpose.msra.mxu0 0.0
        %2259 = vmatprep.subr.mxu0 0.0
        %2260 = vmatpush1.xpose.msra.mxu0 0.0
        %2261 = vmatprep.subr.mxu0 0.0
        %2262 = vmatpush1.xpose.msra.mxu0 0.0
        %2263 = vmatprep.subr.mxu0 0.0
        %2264 = vmatpush1.xpose.msra.mxu0 0.0
        %2265 = vmatprep.subr.mxu0 0.0
        %2266 = vmatpush1.xpose.msra.mxu0 0.0
        %2267 = vmatprep.subr.mxu0 0.0
        %2268 = vmatpush1.xpose.msra.mxu0 0.0
        %2269 = vmatprep.subr.mxu0 0.0
        %2270 = vmatpush1.xpose.msra.mxu0 0.0
        %2271 = vmatprep.subr.mxu0 0.0
        %2272 = vmatpush1.xpose.msra.mxu0 0.0
        %2273 = vmatprep.subr.mxu0 0.0
        %2274 = vmatpush1.xpose.msra.mxu0 0.0
        %2275 = vmatprep.subr.mxu0 0.0
        %2276 = vmatpush1.xpose.msra.mxu0 0.0
        %2277 = vmatprep.subr.mxu0 0.0
        %2278 = vmatpush1.xpose.msra.mxu0 0.0
        %2279 = vmatprep.subr.mxu0 0.0
        %2280 = vmatpush1.xpose.msra.mxu0 0.0
        %2281 = vmatprep.subr.mxu0 0.0
        %2282 = vmatpush1.xpose.msra.mxu0 %v2251
        %2283 = vmatprep.subr.mxu0 0.0
        %2284 = vmatpush1.xpose.msra.mxu0 %v2249
        %2285 = vmatprep.subr.mxu0 0.0
        %2286 = vmatpush2.xpose.msra.mxu0 0.0
        %2287 = vmatprep.subr.mxu0 0.0
        %2288 = vmatpush2.xpose.msra.mxu0 0.0
        %2289 = vmatprep.subr.mxu0 0.0
        %2290 = vmatpush2.xpose.msra.mxu0 0.0
        %2291 = vmatprep.subr.mxu0 0.0
        %2292 = vmatpush2.xpose.msra.mxu0 0.0
        %2293 = vmatprep.subr.mxu0 0.0
        %2294 = vmatpush2.xpose.msra.mxu0 0.0
        %2295 = vmatprep.subr.mxu0 0.0
        %2296 = vmatpush2.xpose.msra.mxu0 0.0
        %2297 = vmatprep.subr.mxu0 0.0
        %2298 = vmatpush2.xpose.msra.mxu0 0.0
        %2299 = vmatprep.subr.mxu0 0.0
        %2300 = vmatpush2.xpose.msra.mxu0 0.0
        %2301 = vmatprep.subr.mxu0 0.0
        %2302 = vmatpush2.xpose.msra.mxu0 0.0
        %2303 = vmatprep.subr.mxu0 0.0
        %2304 = vmatpush2.xpose.msra.mxu0 0.0
        %2305 = vmatprep.subr.mxu0 0.0
        %2306 = vmatpush2.xpose.msra.mxu0 0.0
        %2307 = vmatprep.subr.mxu0 0.0
        %2308 = vmatpush2.xpose.msra.mxu0 0.0
        %2309 = vmatprep.subr.mxu0 0.0
        %2310 = vmatpush2.xpose.msra.mxu0 0.0
        %2311 = vmatprep.subr.mxu0 0.0
        %2312 = vmatpush2.xpose.msra.mxu0 0.0
        %2313 = vmatprep.subr.mxu0 0.0
        %2314 = vmatpush2.xpose.msra.mxu0 0.0
        %2315 = vmatprep.subr.mxu0 0.0
        %2316 = vmatpush2.xpose.msra.mxu0 0.0
        %2317 = vmatprep.mubr.f32.mxu0 0.0
        %2318 = vmatmul.mubr.f32.gmra.mxu0 %v2245
        %v2319 = vpop.f32.mrf.mxu0
        %v2320 = vadd.f32 0.0, %v2319
        %v2321 = vpop.f32.mrf.mxu0
        %2322 = vmatprep.mubr.f32.mxu0 0.0
        %2323 = vmatmul.mubr.f32.gmra.mxu0 %v2247
        %v2324 = vpop.f32.mrf.mxu0
        %v2325 = vadd.f32 0.0, %v2324
        %v2326 = vpop.f32.mrf.mxu0
        %2327 = vdwg.mxu0
        %v2328 = vsel %vm1341, %v2229, -inf
        %2329 = vmax.xlane.f32.xlu0 %v2328
        %v2330 = vpop.xlane.xlu0 %2329
        %v2331 = vsel %vm1341, %v2234, -inf
        %2332 = vmax.xlane.f32.xlu0 %v2331
        %v2333 = vpop.xlane.xlu0 %2332
        %v2334 = vsel %vm1341, %v2320, -inf
        %2335 = vmax.xlane.f32.xlu0 %v2334
        %v2336 = vpop.xlane.xlu0 %2335
        %v2337 = vsel %vm1341, %v2325, -inf
        %2338 = vmax.xlane.f32.xlu0 %v2337
        %v2339 = vpop.xlane.xlu0 %2338
        %v2340 = vsub.f32 %v2229, %v2330
        %v2341 = vsub.f32 %v2234, %v2333
        %v2342 = vsub.f32 %v2320, %v2336
        %v2343 = vsub.f32 %v2325, %v2339
        %v2344 = vmul.f32 %v2340, 1.442695
        %v2345 = vpow.pop %v2344
        %v2346 = vmul.f32 %v2341, 1.442695
        %v2347 = vpow.pop %v2346
        %v2348 = vmul.f32 %v2342, 1.442695
        %v2349 = vpow.pop %v2348
        %v2350 = vmul.f32 %v2343, 1.442695
        %v2351 = vpow.pop %v2350
        %v2352 = vsel %vm1341, %v2345, 0.0
        %2353 = vadd.xlane.f32.xlu0 %v2352
        %v2354 = vpop.xlane.xlu0 %2353
        %v2355 = vsel %vm1341, %v2347, 0.0
        %2356 = vadd.xlane.f32.xlu0 %v2355
        %v2357 = vpop.xlane.xlu0 %2356
        %v2358 = vsel %vm1341, %v2349, 0.0
        %2359 = vadd.xlane.f32.xlu0 %v2358
        %v2360 = vpop.xlane.xlu0 %2359
        %v2361 = vsel %vm1341, %v2351, 0.0
        %2362 = vadd.xlane.f32.xlu0 %v2361
        %v2363 = vpop.xlane.xlu0 %2362
        %v2364 = vrcp.pop %v2354
        %v2365 = vrcp.pop %v2357
        %v2366 = vrcp.pop %v2360
        %v2367 = vrcp.pop %v2363
        %v2368 = vmul.f32 %v2345, %v2364
        %v2369 = vmul.f32 %v2347, %v2365
        %v2370 = vmul.f32 %v2349, %v2366
        %v2371 = vmul.f32 %v2351, %v2367
        %2372 = vrot.lane.b32.xlu0 %v1140, 112
        %v2373 = vpop.permute.xlu0 %2372
        %2374 = vrot.lane.b32.xlu0 %v1145, 112
        %v2375 = vpop.permute.xlu0 %2374
        %v2379 = vsel %vm1341, %v2368, 0
        %v2382 = vsel %vm1341, %v2369, 0
        %2384 = vmatprep.subr.mxu0 0.0
        %2385 = vmatpush1.msra.mxu0 0.0
        %2386 = vmatprep.subr.mxu0 0.0
        %2387 = vmatpush1.msra.mxu0 0.0
        %2388 = vmatprep.subr.mxu0 0.0
        %2389 = vmatpush1.msra.mxu0 0.0
        %2390 = vmatprep.subr.mxu0 0.0
        %2391 = vmatpush1.msra.mxu0 0.0
        %2392 = vmatprep.subr.mxu0 0.0
        %2393 = vmatpush1.msra.mxu0 0.0
        %2394 = vmatprep.subr.mxu0 0.0
        %2395 = vmatpush1.msra.mxu0 0.0
        %2396 = vmatprep.subr.mxu0 0.0
        %2397 = vmatpush1.msra.mxu0 0.0
        %2398 = vmatprep.subr.mxu0 0.0
        %2399 = vmatpush1.msra.mxu0 0.0
        %2400 = vmatprep.subr.mxu0 0.0
        %2401 = vmatpush1.msra.mxu0 0.0
        %2402 = vmatprep.subr.mxu0 0.0
        %2403 = vmatpush1.msra.mxu0 0.0
        %2404 = vmatprep.subr.mxu0 0.0
        %2405 = vmatpush1.msra.mxu0 0.0
        %2406 = vmatprep.subr.mxu0 0.0
        %2407 = vmatpush1.msra.mxu0 0.0
        %2408 = vmatprep.subr.mxu0 0.0
        %2409 = vmatpush1.msra.mxu0 0.0
        %2410 = vmatprep.subr.mxu0 0.0
        %2411 = vmatpush1.msra.mxu0 0.0
        %2412 = vmatprep.subr.mxu0 0.0
        %2413 = vmatpush1.msra.mxu0 %v2375
        %2414 = vmatprep.subr.mxu0 0.0
        %2415 = vmatpush1.msra.mxu0 %v2373
        %2416 = vmatprep.subr.mxu0 0.0
        %2417 = vmatpush2.msra.mxu0 0.0
        %2418 = vmatprep.subr.mxu0 0.0
        %2419 = vmatpush2.msra.mxu0 0.0
        %2420 = vmatprep.subr.mxu0 0.0
        %2421 = vmatpush2.msra.mxu0 0.0
        %2422 = vmatprep.subr.mxu0 0.0
        %2423 = vmatpush2.msra.mxu0 0.0
        %2424 = vmatprep.subr.mxu0 0.0
        %2425 = vmatpush2.msra.mxu0 0.0
        %2426 = vmatprep.subr.mxu0 0.0
        %2427 = vmatpush2.msra.mxu0 0.0
        %2428 = vmatprep.subr.mxu0 0.0
        %2429 = vmatpush2.msra.mxu0 0.0
        %2430 = vmatprep.subr.mxu0 0.0
        %2431 = vmatpush2.msra.mxu0 0.0
        %2432 = vmatprep.subr.mxu0 0.0
        %2433 = vmatpush2.msra.mxu0 0.0
        %2434 = vmatprep.subr.mxu0 0.0
        %2435 = vmatpush2.msra.mxu0 0.0
        %2436 = vmatprep.subr.mxu0 0.0
        %2437 = vmatpush2.msra.mxu0 0.0
        %2438 = vmatprep.subr.mxu0 0.0
        %2439 = vmatpush2.msra.mxu0 0.0
        %2440 = vmatprep.subr.mxu0 0.0
        %2441 = vmatpush2.msra.mxu0 0.0
        %2442 = vmatprep.subr.mxu0 0.0
        %2443 = vmatpush2.msra.mxu0 0.0
        %2444 = vmatprep.subr.mxu0 0.0
        %2445 = vmatpush2.msra.mxu0 0.0
        %2446 = vmatprep.subr.mxu0 0.0
        %2447 = vmatpush2.msra.mxu0 0.0
        %2448 = vmatprep.mubr.f32.mxu0 0.0
        %2449 = vmatmul.mubr.f32.gmra.mxu0 %v2379
        %v2450 = vpop.f32.mrf.mxu0
        %v2451 = vadd.f32 0.0, %v2450
        %v2452 = vpop.f32.mrf.mxu0
        %2453 = vmatprep.mubr.f32.mxu0 0.0
        %2454 = vmatmul.mubr.f32.gmra.mxu0 %v2382
        %v2455 = vpop.f32.mrf.mxu0
        %v2456 = vadd.f32 0.0, %v2455
        %v2457 = vpop.f32.mrf.mxu0
        %2458 = vdwg.mxu0
        %2459 = vrot.lane.b32.xlu0 %v1150, 112
        %v2460 = vpop.permute.xlu0 %2459
        %2461 = vrot.lane.b32.xlu0 %v1155, 112
        %v2462 = vpop.permute.xlu0 %2461
        %v2466 = vsel %vm1341, %v2370, 0
        %v2469 = vsel %vm1341, %v2371, 0
        %2471 = vmatprep.subr.mxu0 0.0
        %2472 = vmatpush1.msra.mxu0 0.0
        %2473 = vmatprep.subr.mxu0 0.0
        %2474 = vmatpush1.msra.mxu0 0.0
        %2475 = vmatprep.subr.mxu0 0.0
        %2476 = vmatpush1.msra.mxu0 0.0
        %2477 = vmatprep.subr.mxu0 0.0
        %2478 = vmatpush1.msra.mxu0 0.0
        %2479 = vmatprep.subr.mxu0 0.0
        %2480 = vmatpush1.msra.mxu0 0.0
        %2481 = vmatprep.subr.mxu0 0.0
        %2482 = vmatpush1.msra.mxu0 0.0
        %2483 = vmatprep.subr.mxu0 0.0
        %2484 = vmatpush1.msra.mxu0 0.0
        %2485 = vmatprep.subr.mxu0 0.0
        %2486 = vmatpush1.msra.mxu0 0.0
        %2487 = vmatprep.subr.mxu0 0.0
        %2488 = vmatpush1.msra.mxu0 0.0
        %2489 = vmatprep.subr.mxu0 0.0
        %2490 = vmatpush1.msra.mxu0 0.0
        %2491 = vmatprep.subr.mxu0 0.0
        %2492 = vmatpush1.msra.mxu0 0.0
        %2493 = vmatprep.subr.mxu0 0.0
        %2494 = vmatpush1.msra.mxu0 0.0
        %2495 = vmatprep.subr.mxu0 0.0
        %2496 = vmatpush1.msra.mxu0 0.0
        %2497 = vmatprep.subr.mxu0 0.0
        %2498 = vmatpush1.msra.mxu0 0.0
        %2499 = vmatprep.subr.mxu0 0.0
        %2500 = vmatpush1.msra.mxu0 %v2462
        %2501 = vmatprep.subr.mxu0 0.0
        %2502 = vmatpush1.msra.mxu0 %v2460
        %2503 = vmatprep.subr.mxu0 0.0
        %2504 = vmatpush2.msra.mxu0 0.0
        %2505 = vmatprep.subr.mxu0 0.0
        %2506 = vmatpush2.msra.mxu0 0.0
        %2507 = vmatprep.subr.mxu0 0.0
        %2508 = vmatpush2.msra.mxu0 0.0
        %2509 = vmatprep.subr.mxu0 0.0
        %2510 = vmatpush2.msra.mxu0 0.0
        %2511 = vmatprep.subr.mxu0 0.0
        %2512 = vmatpush2.msra.mxu0 0.0
        %2513 = vmatprep.subr.mxu0 0.0
        %2514 = vmatpush2.msra.mxu0 0.0
        %2515 = vmatprep.subr.mxu0 0.0
        %2516 = vmatpush2.msra.mxu0 0.0
        %2517 = vmatprep.subr.mxu0 0.0
        %2518 = vmatpush2.msra.mxu0 0.0
        %2519 = vmatprep.subr.mxu0 0.0
        %2520 = vmatpush2.msra.mxu0 0.0
        %2521 = vmatprep.subr.mxu0 0.0
        %2522 = vmatpush2.msra.mxu0 0.0
        %2523 = vmatprep.subr.mxu0 0.0
        %2524 = vmatpush2.msra.mxu0 0.0
        %2525 = vmatprep.subr.mxu0 0.0
        %2526 = vmatpush2.msra.mxu0 0.0
        %2527 = vmatprep.subr.mxu0 0.0
        %2528 = vmatpush2.msra.mxu0 0.0
        %2529 = vmatprep.subr.mxu0 0.0
        %2530 = vmatpush2.msra.mxu0 0.0
        %2531 = vmatprep.subr.mxu0 0.0
        %2532 = vmatpush2.msra.mxu0 0.0
        %2533 = vmatprep.subr.mxu0 0.0
        %2534 = vmatpush2.msra.mxu0 0.0
        %2535 = vmatprep.mubr.f32.mxu0 0.0
        %2536 = vmatmul.mubr.f32.gmra.mxu0 %v2466
        %v2537 = vpop.f32.mrf.mxu0
        %v2538 = vadd.f32 0.0, %v2537
        %v2539 = vpop.f32.mrf.mxu0
        %2540 = vmatprep.mubr.f32.mxu0 0.0
        %2541 = vmatmul.mubr.f32.gmra.mxu0 %v2469
        %v2542 = vpop.f32.mrf.mxu0
        %v2543 = vadd.f32 0.0, %v2542
        %v2544 = vpop.f32.mrf.mxu0
        %2545 = vdwg.mxu0
        %v2547 = vsel %vm1168, %v2451, 0
        %v2550 = vsel %vm1168, %v2456, 0
        %v2553 = vsel %vm1168, %v2538, 0
        %v2556 = vsel %vm1168, %v2543, 0
        %2558 = vmatprep.subr.mxu0 0.0
        %2559 = vmatpush1.msra.mxu0 0.0
        %2560 = vmatprep.subr.mxu0 0.0
        %2561 = vmatpush1.msra.mxu0 0.0
        %2562 = vmatprep.subr.mxu0 0.0
        %2563 = vmatpush1.msra.mxu0 0.0
        %2564 = vmatprep.subr.mxu0 0.0
        %2565 = vmatpush1.msra.mxu0 0.0
        %2566 = vmatprep.subr.mxu0 0.0
        %2567 = vmatpush1.msra.mxu0 0.0
        %2568 = vmatprep.subr.mxu0 0.0
        %2569 = vmatpush1.msra.mxu0 0.0
        %2570 = vmatprep.subr.mxu0 0.0
        %2571 = vmatpush1.msra.mxu0 0.0
        %2572 = vmatprep.subr.mxu0 0.0
        %2573 = vmatpush1.msra.mxu0 0.0
        %2574 = vmatprep.subr.mxu0 0.0
        %2575 = vmatpush1.msra.mxu0 0.0
        %2576 = vmatprep.subr.mxu0 0.0
        %2577 = vmatpush1.msra.mxu0 0.0
        %2578 = vmatprep.subr.mxu0 0.0
        %2579 = vmatpush1.msra.mxu0 0.0
        %2580 = vmatprep.subr.mxu0 0.0
        %2581 = vmatpush1.msra.mxu0 0.0
        %2582 = vmatprep.subr.mxu0 0.0
        %2583 = vmatpush1.msra.mxu0 0.0
        %2584 = vmatprep.subr.mxu0 0.0
        %2585 = vmatpush1.msra.mxu0 0.0
        %2586 = vmatprep.subr.mxu0 0.0
        %2587 = vmatpush1.msra.mxu0 0.0
        %2588 = vmatprep.subr.mxu0 0.0
        %2589 = vmatpush1.msra.mxu0 %v1160
        %2590 = vmatprep.subr.mxu0 0.0
        %2591 = vmatpush2.msra.mxu0 0.0
        %2592 = vmatprep.subr.mxu0 0.0
        %2593 = vmatpush2.msra.mxu0 0.0
        %2594 = vmatprep.subr.mxu0 0.0
        %2595 = vmatpush2.msra.mxu0 0.0
        %2596 = vmatprep.subr.mxu0 0.0
        %2597 = vmatpush2.msra.mxu0 0.0
        %2598 = vmatprep.subr.mxu0 0.0
        %2599 = vmatpush2.msra.mxu0 0.0
        %2600 = vmatprep.subr.mxu0 0.0
        %2601 = vmatpush2.msra.mxu0 0.0
        %2602 = vmatprep.subr.mxu0 0.0
        %2603 = vmatpush2.msra.mxu0 0.0
        %2604 = vmatprep.subr.mxu0 0.0
        %2605 = vmatpush2.msra.mxu0 0.0
        %2606 = vmatprep.subr.mxu0 0.0
        %2607 = vmatpush2.msra.mxu0 0.0
        %2608 = vmatprep.subr.mxu0 0.0
        %2609 = vmatpush2.msra.mxu0 0.0
        %2610 = vmatprep.subr.mxu0 0.0
        %2611 = vmatpush2.msra.mxu0 0.0
        %2612 = vmatprep.subr.mxu0 0.0
        %2613 = vmatpush2.msra.mxu0 0.0
        %2614 = vmatprep.subr.mxu0 0.0
        %2615 = vmatpush2.msra.mxu0 0.0
        %2616 = vmatprep.subr.mxu0 0.0
        %2617 = vmatpush2.msra.mxu0 0.0
        %2618 = vmatprep.subr.mxu0 0.0
        %2619 = vmatpush2.msra.mxu0 0.0
        %2620 = vmatprep.subr.mxu0 0.0
        %2621 = vmatpush2.msra.mxu0 0.0
        %2622 = vmatprep.mubr.f32.mxu0 0.0
        %2623 = vmatmul.mubr.f32.gmra.mxu0 %v2547
        %v2624 = vpop.f32.mrf.mxu0
        %v2625 = vadd.f32 0.0, %v2624
        %v2626 = vpop.f32.mrf.mxu0
        %2627 = vmatprep.mubr.f32.mxu0 0.0
        %2628 = vmatmul.mubr.f32.gmra.mxu0 %v2550
        %v2629 = vpop.f32.mrf.mxu0
        %v2630 = vadd.f32 0.0, %v2629
        %v2631 = vpop.f32.mrf.mxu0
        %2632 = vmatprep.mubr.f32.mxu0 0.0
        %2633 = vmatmul.mubr.f32.gmra.mxu0 %v2553
        %v2634 = vpop.f32.mrf.mxu0
        %v2635 = vadd.f32 0.0, %v2634
        %v2636 = vpop.f32.mrf.mxu0
        %2637 = vmatprep.mubr.f32.mxu0 0.0
        %2638 = vmatmul.mubr.f32.gmra.mxu0 %v2556
        %v2639 = vpop.f32.mrf.mxu0
        %v2640 = vadd.f32 0.0, %v2639
        %v2641 = vpop.f32.mrf.mxu0
        %2642 = vdwg.mxu0
        %v2643 = vadd.f32 %v2128, %v2625
        %v2644 = vadd.f32 %v2133, %v2630
        %v2645 = vadd.f32 %v2138, %v2635
        %v2646 = vadd.f32 %v2143, %v2640
        %2647 = vrot.lane.b32.xlu0 %v1032, 104
        %v2648 = vpop.permute.xlu0 %2647
        %2649 = vrot.lane.b32.xlu0 %v1037, 104
        %v2650 = vpop.permute.xlu0 %2649
        %2651 = vrot.lane.b32.xlu0 %v1042, 72
        %v2652 = vpop.permute.xlu0 %2651
        %2653 = vrot.lane.b32.xlu0 %v1047, 72
        %v2654 = vpop.permute.xlu0 %2653
        %v2655 = vsel %vm1168, %v2648, 0
        %v2657 = vsel %vm1168, %v2650, 0
        %v2659 = vsel %vm1168, %v2652, 0
        %v2661 = vsel %vm1168, %v2654, 0
        %2663 = vmatprep.subr.mxu0 0.0
        %2664 = vmatpush1.xpose.msra.mxu0 0.0
        %2665 = vmatprep.subr.mxu0 0.0
        %2666 = vmatpush1.xpose.msra.mxu0 0.0
        %2667 = vmatprep.subr.mxu0 0.0
        %2668 = vmatpush1.xpose.msra.mxu0 0.0
        %2669 = vmatprep.subr.mxu0 0.0
        %2670 = vmatpush1.xpose.msra.mxu0 0.0
        %2671 = vmatprep.subr.mxu0 0.0
        %2672 = vmatpush1.xpose.msra.mxu0 0.0
        %2673 = vmatprep.subr.mxu0 0.0
        %2674 = vmatpush1.xpose.msra.mxu0 0.0
        %2675 = vmatprep.subr.mxu0 0.0
        %2676 = vmatpush1.xpose.msra.mxu0 0.0
        %2677 = vmatprep.subr.mxu0 0.0
        %2678 = vmatpush1.xpose.msra.mxu0 0.0
        %2679 = vmatprep.subr.mxu0 0.0
        %2680 = vmatpush1.xpose.msra.mxu0 0.0
        %2681 = vmatprep.subr.mxu0 0.0
        %2682 = vmatpush1.xpose.msra.mxu0 0.0
        %2683 = vmatprep.subr.mxu0 0.0
        %2684 = vmatpush1.xpose.msra.mxu0 0.0
        %2685 = vmatprep.subr.mxu0 0.0
        %2686 = vmatpush1.xpose.msra.mxu0 0.0
        %2687 = vmatprep.subr.mxu0 0.0
        %2688 = vmatpush1.xpose.msra.mxu0 0.0
        %2689 = vmatprep.subr.mxu0 0.0
        %2690 = vmatpush1.xpose.msra.mxu0 0.0
        %2691 = vmatprep.subr.mxu0 0.0
        %2692 = vmatpush1.xpose.msra.mxu0 %v2661
        %2693 = vmatprep.subr.mxu0 0.0
        %2694 = vmatpush1.xpose.msra.mxu0 %v2659
        %2695 = vmatprep.subr.mxu0 0.0
        %2696 = vmatpush2.xpose.msra.mxu0 0.0
        %2697 = vmatprep.subr.mxu0 0.0
        %2698 = vmatpush2.xpose.msra.mxu0 0.0
        %2699 = vmatprep.subr.mxu0 0.0
        %2700 = vmatpush2.xpose.msra.mxu0 0.0
        %2701 = vmatprep.subr.mxu0 0.0
        %2702 = vmatpush2.xpose.msra.mxu0 0.0
        %2703 = vmatprep.subr.mxu0 0.0
        %2704 = vmatpush2.xpose.msra.mxu0 0.0
        %2705 = vmatprep.subr.mxu0 0.0
        %2706 = vmatpush2.xpose.msra.mxu0 0.0
        %2707 = vmatprep.subr.mxu0 0.0
        %2708 = vmatpush2.xpose.msra.mxu0 0.0
        %2709 = vmatprep.subr.mxu0 0.0
        %2710 = vmatpush2.xpose.msra.mxu0 0.0
        %2711 = vmatprep.subr.mxu0 0.0
        %2712 = vmatpush2.xpose.msra.mxu0 0.0
        %2713 = vmatprep.subr.mxu0 0.0
        %2714 = vmatpush2.xpose.msra.mxu0 0.0
        %2715 = vmatprep.subr.mxu0 0.0
        %2716 = vmatpush2.xpose.msra.mxu0 0.0
        %2717 = vmatprep.subr.mxu0 0.0
        %2718 = vmatpush2.xpose.msra.mxu0 0.0
        %2719 = vmatprep.subr.mxu0 0.0
        %2720 = vmatpush2.xpose.msra.mxu0 0.0
        %2721 = vmatprep.subr.mxu0 0.0
        %2722 = vmatpush2.xpose.msra.mxu0 0.0
        %2723 = vmatprep.subr.mxu0 0.0
        %2724 = vmatpush2.xpose.msra.mxu0 0.0
        %2725 = vmatprep.subr.mxu0 0.0
        %2726 = vmatpush2.xpose.msra.mxu0 0.0
        %2727 = vmatprep.mubr.f32.mxu0 0.0
        %2728 = vmatmul.mubr.f32.gmra.mxu0 %v2655
        %v2729 = vpop.f32.mrf.mxu0
        %v2730 = vadd.f32 0.0, %v2729
        %v2731 = vpop.f32.mrf.mxu0
        %2732 = vmatprep.mubr.f32.mxu0 0.0
        %2733 = vmatmul.mubr.f32.gmra.mxu0 %v2657
        %v2734 = vpop.f32.mrf.mxu0
        %v2735 = vadd.f32 0.0, %v2734
        %v2736 = vpop.f32.mrf.mxu0
        %2737 = vdwg.mxu0
        %2738 = vrot.lane.b32.xlu0 %v1042, 104
        %v2739 = vpop.permute.xlu0 %2738
        %2740 = vrot.lane.b32.xlu0 %v1047, 104
        %v2741 = vpop.permute.xlu0 %2740
        %2742 = vrot.lane.b32.xlu0 %v1032, 72
        %v2743 = vpop.permute.xlu0 %2742
        %2744 = vrot.lane.b32.xlu0 %v1037, 72
        %v2745 = vpop.permute.xlu0 %2744
        %v2746 = vsel %vm1168, %v2739, 0
        %v2748 = vsel %vm1168, %v2741, 0
        %v2750 = vsel %vm1168, %v2743, 0
        %v2752 = vsel %vm1168, %v2745, 0
        %2754 = vmatprep.subr.mxu0 0.0
        %2755 = vmatpush1.xpose.msra.mxu0 0.0
        %2756 = vmatprep.subr.mxu0 0.0
        %2757 = vmatpush1.xpose.msra.mxu0 0.0
        %2758 = vmatprep.subr.mxu0 0.0
        %2759 = vmatpush1.xpose.msra.mxu0 0.0
        %2760 = vmatprep.subr.mxu0 0.0
        %2761 = vmatpush1.xpose.msra.mxu0 0.0
        %2762 = vmatprep.subr.mxu0 0.0
        %2763 = vmatpush1.xpose.msra.mxu0 0.0
        %2764 = vmatprep.subr.mxu0 0.0
        %2765 = vmatpush1.xpose.msra.mxu0 0.0
        %2766 = vmatprep.subr.mxu0 0.0
        %2767 = vmatpush1.xpose.msra.mxu0 0.0
        %2768 = vmatprep.subr.mxu0 0.0
        %2769 = vmatpush1.xpose.msra.mxu0 0.0
        %2770 = vmatprep.subr.mxu0 0.0
        %2771 = vmatpush1.xpose.msra.mxu0 0.0
        %2772 = vmatprep.subr.mxu0 0.0
        %2773 = vmatpush1.xpose.msra.mxu0 0.0
        %2774 = vmatprep.subr.mxu0 0.0
        %2775 = vmatpush1.xpose.msra.mxu0 0.0
        %2776 = vmatprep.subr.mxu0 0.0
        %2777 = vmatpush1.xpose.msra.mxu0 0.0
        %2778 = vmatprep.subr.mxu0 0.0
        %2779 = vmatpush1.xpose.msra.mxu0 0.0
        %2780 = vmatprep.subr.mxu0 0.0
        %2781 = vmatpush1.xpose.msra.mxu0 0.0
        %2782 = vmatprep.subr.mxu0 0.0
        %2783 = vmatpush1.xpose.msra.mxu0 %v2752
        %2784 = vmatprep.subr.mxu0 0.0
        %2785 = vmatpush1.xpose.msra.mxu0 %v2750
        %2786 = vmatprep.subr.mxu0 0.0
        %2787 = vmatpush2.xpose.msra.mxu0 0.0
        %2788 = vmatprep.subr.mxu0 0.0
        %2789 = vmatpush2.xpose.msra.mxu0 0.0
        %2790 = vmatprep.subr.mxu0 0.0
        %2791 = vmatpush2.xpose.msra.mxu0 0.0
        %2792 = vmatprep.subr.mxu0 0.0
        %2793 = vmatpush2.xpose.msra.mxu0 0.0
        %2794 = vmatprep.subr.mxu0 0.0
        %2795 = vmatpush2.xpose.msra.mxu0 0.0
        %2796 = vmatprep.subr.mxu0 0.0
        %2797 = vmatpush2.xpose.msra.mxu0 0.0
        %2798 = vmatprep.subr.mxu0 0.0
        %2799 = vmatpush2.xpose.msra.mxu0 0.0
        %2800 = vmatprep.subr.mxu0 0.0
        %2801 = vmatpush2.xpose.msra.mxu0 0.0
        %2802 = vmatprep.subr.mxu0 0.0
        %2803 = vmatpush2.xpose.msra.mxu0 0.0
        %2804 = vmatprep.subr.mxu0 0.0
        %2805 = vmatpush2.xpose.msra.mxu0 0.0
        %2806 = vmatprep.subr.mxu0 0.0
        %2807 = vmatpush2.xpose.msra.mxu0 0.0
        %2808 = vmatprep.subr.mxu0 0.0
        %2809 = vmatpush2.xpose.msra.mxu0 0.0
        %2810 = vmatprep.subr.mxu0 0.0
        %2811 = vmatpush2.xpose.msra.mxu0 0.0
        %2812 = vmatprep.subr.mxu0 0.0
        %2813 = vmatpush2.xpose.msra.mxu0 0.0
        %2814 = vmatprep.subr.mxu0 0.0
        %2815 = vmatpush2.xpose.msra.mxu0 0.0
        %2816 = vmatprep.subr.mxu0 0.0
        %2817 = vmatpush2.xpose.msra.mxu0 0.0
        %2818 = vmatprep.mubr.f32.mxu0 0.0
        %2819 = vmatmul.mubr.f32.gmra.mxu0 %v2746
        %v2820 = vpop.f32.mrf.mxu0
        %v2821 = vadd.f32 0.0, %v2820
        %v2822 = vpop.f32.mrf.mxu0
        %2823 = vmatprep.mubr.f32.mxu0 0.0
        %2824 = vmatmul.mubr.f32.gmra.mxu0 %v2748
        %v2825 = vpop.f32.mrf.mxu0
        %v2826 = vadd.f32 0.0, %v2825
        %v2827 = vpop.f32.mrf.mxu0
        %2828 = vdwg.mxu0
        %v2829 = vsel %vm1341, %v2730, -inf
        %2830 = vmax.xlane.f32.xlu0 %v2829
        %v2831 = vpop.xlane.xlu0 %2830
        %v2832 = vsel %vm1341, %v2735, -inf
        %2833 = vmax.xlane.f32.xlu0 %v2832
        %v2834 = vpop.xlane.xlu0 %2833
        %v2835 = vsel %vm1341, %v2821, -inf
        %2836 = vmax.xlane.f32.xlu0 %v2835
        %v2837 = vpop.xlane.xlu0 %2836
        %v2838 = vsel %vm1341, %v2826, -inf
        %2839 = vmax.xlane.f32.xlu0 %v2838
        %v2840 = vpop.xlane.xlu0 %2839
        %v2841 = vsub.f32 %v2730, %v2831
        %v2842 = vsub.f32 %v2735, %v2834
        %v2843 = vsub.f32 %v2821, %v2837
        %v2844 = vsub.f32 %v2826, %v2840
        %v2845 = vmul.f32 %v2841, 1.442695
        %v2846 = vpow.pop %v2845
        %v2847 = vmul.f32 %v2842, 1.442695
        %v2848 = vpow.pop %v2847
        %v2849 = vmul.f32 %v2843, 1.442695
        %v2850 = vpow.pop %v2849
        %v2851 = vmul.f32 %v2844, 1.442695
        %v2852 = vpow.pop %v2851
        %v2853 = vsel %vm1341, %v2846, 0.0
        %2854 = vadd.xlane.f32.xlu0 %v2853
        %v2855 = vpop.xlane.xlu0 %2854
        %v2856 = vsel %vm1341, %v2848, 0.0
        %2857 = vadd.xlane.f32.xlu0 %v2856
        %v2858 = vpop.xlane.xlu0 %2857
        %v2859 = vsel %vm1341, %v2850, 0.0
        %2860 = vadd.xlane.f32.xlu0 %v2859
        %v2861 = vpop.xlane.xlu0 %2860
        %v2862 = vsel %vm1341, %v2852, 0.0
        %2863 = vadd.xlane.f32.xlu0 %v2862
        %v2864 = vpop.xlane.xlu0 %2863
        %v2865 = vrcp.pop %v2855
        %v2866 = vrcp.pop %v2858
        %v2867 = vrcp.pop %v2861
        %v2868 = vrcp.pop %v2864
        %v2869 = vmul.f32 %v2846, %v2865
        %v2870 = vmul.f32 %v2848, %v2866
        %v2871 = vmul.f32 %v2850, %v2867
        %v2872 = vmul.f32 %v2852, %v2868
        %2873 = vrot.lane.b32.xlu0 %v1140, 104
        %v2874 = vpop.permute.xlu0 %2873
        %2875 = vrot.lane.b32.xlu0 %v1145, 104
        %v2876 = vpop.permute.xlu0 %2875
        %v2880 = vsel %vm1341, %v2869, 0
        %v2883 = vsel %vm1341, %v2870, 0
        %2885 = vmatprep.subr.mxu0 0.0
        %2886 = vmatpush1.msra.mxu0 0.0
        %2887 = vmatprep.subr.mxu0 0.0
        %2888 = vmatpush1.msra.mxu0 0.0
        %2889 = vmatprep.subr.mxu0 0.0
        %2890 = vmatpush1.msra.mxu0 0.0
        %2891 = vmatprep.subr.mxu0 0.0
        %2892 = vmatpush1.msra.mxu0 0.0
        %2893 = vmatprep.subr.mxu0 0.0
        %2894 = vmatpush1.msra.mxu0 0.0
        %2895 = vmatprep.subr.mxu0 0.0
        %2896 = vmatpush1.msra.mxu0 0.0
        %2897 = vmatprep.subr.mxu0 0.0
        %2898 = vmatpush1.msra.mxu0 0.0
        %2899 = vmatprep.subr.mxu0 0.0
        %2900 = vmatpush1.msra.mxu0 0.0
        %2901 = vmatprep.subr.mxu0 0.0
        %2902 = vmatpush1.msra.mxu0 0.0
        %2903 = vmatprep.subr.mxu0 0.0
        %2904 = vmatpush1.msra.mxu0 0.0
        %2905 = vmatprep.subr.mxu0 0.0
        %2906 = vmatpush1.msra.mxu0 0.0
        %2907 = vmatprep.subr.mxu0 0.0
        %2908 = vmatpush1.msra.mxu0 0.0
        %2909 = vmatprep.subr.mxu0 0.0
        %2910 = vmatpush1.msra.mxu0 0.0
        %2911 = vmatprep.subr.mxu0 0.0
        %2912 = vmatpush1.msra.mxu0 0.0
        %2913 = vmatprep.subr.mxu0 0.0
        %2914 = vmatpush1.msra.mxu0 %v2876
        %2915 = vmatprep.subr.mxu0 0.0
        %2916 = vmatpush1.msra.mxu0 %v2874
        %2917 = vmatprep.subr.mxu0 0.0
        %2918 = vmatpush2.msra.mxu0 0.0
        %2919 = vmatprep.subr.mxu0 0.0
        %2920 = vmatpush2.msra.mxu0 0.0
        %2921 = vmatprep.subr.mxu0 0.0
        %2922 = vmatpush2.msra.mxu0 0.0
        %2923 = vmatprep.subr.mxu0 0.0
        %2924 = vmatpush2.msra.mxu0 0.0
        %2925 = vmatprep.subr.mxu0 0.0
        %2926 = vmatpush2.msra.mxu0 0.0
        %2927 = vmatprep.subr.mxu0 0.0
        %2928 = vmatpush2.msra.mxu0 0.0
        %2929 = vmatprep.subr.mxu0 0.0
        %2930 = vmatpush2.msra.mxu0 0.0
        %2931 = vmatprep.subr.mxu0 0.0
        %2932 = vmatpush2.msra.mxu0 0.0
        %2933 = vmatprep.subr.mxu0 0.0
        %2934 = vmatpush2.msra.mxu0 0.0
        %2935 = vmatprep.subr.mxu0 0.0
        %2936 = vmatpush2.msra.mxu0 0.0
        %2937 = vmatprep.subr.mxu0 0.0
        %2938 = vmatpush2.msra.mxu0 0.0
        %2939 = vmatprep.subr.mxu0 0.0
        %2940 = vmatpush2.msra.mxu0 0.0
        %2941 = vmatprep.subr.mxu0 0.0
        %2942 = vmatpush2.msra.mxu0 0.0
        %2943 = vmatprep.subr.mxu0 0.0
        %2944 = vmatpush2.msra.mxu0 0.0
        %2945 = vmatprep.subr.mxu0 0.0
        %2946 = vmatpush2.msra.mxu0 0.0
        %2947 = vmatprep.subr.mxu0 0.0
        %2948 = vmatpush2.msra.mxu0 0.0
        %2949 = vmatprep.mubr.f32.mxu0 0.0
        %2950 = vmatmul.mubr.f32.gmra.mxu0 %v2880
        %v2951 = vpop.f32.mrf.mxu0
        %v2952 = vadd.f32 0.0, %v2951
        %v2953 = vpop.f32.mrf.mxu0
        %2954 = vmatprep.mubr.f32.mxu0 0.0
        %2955 = vmatmul.mubr.f32.gmra.mxu0 %v2883
        %v2956 = vpop.f32.mrf.mxu0
        %v2957 = vadd.f32 0.0, %v2956
        %v2958 = vpop.f32.mrf.mxu0
        %2959 = vdwg.mxu0
        %2960 = vrot.lane.b32.xlu0 %v1150, 104
        %v2961 = vpop.permute.xlu0 %2960
        %2962 = vrot.lane.b32.xlu0 %v1155, 104
        %v2963 = vpop.permute.xlu0 %2962
        %v2967 = vsel %vm1341, %v2871, 0
        %v2970 = vsel %vm1341, %v2872, 0
        %2972 = vmatprep.subr.mxu0 0.0
        %2973 = vmatpush1.msra.mxu0 0.0
        %2974 = vmatprep.subr.mxu0 0.0
        %2975 = vmatpush1.msra.mxu0 0.0
        %2976 = vmatprep.subr.mxu0 0.0
        %2977 = vmatpush1.msra.mxu0 0.0
        %2978 = vmatprep.subr.mxu0 0.0
        %2979 = vmatpush1.msra.mxu0 0.0
        %2980 = vmatprep.subr.mxu0 0.0
        %2981 = vmatpush1.msra.mxu0 0.0
        %2982 = vmatprep.subr.mxu0 0.0
        %2983 = vmatpush1.msra.mxu0 0.0
        %2984 = vmatprep.subr.mxu0 0.0
        %2985 = vmatpush1.msra.mxu0 0.0
        %2986 = vmatprep.subr.mxu0 0.0
        %2987 = vmatpush1.msra.mxu0 0.0
        %2988 = vmatprep.subr.mxu0 0.0
        %2989 = vmatpush1.msra.mxu0 0.0
        %2990 = vmatprep.subr.mxu0 0.0
        %2991 = vmatpush1.msra.mxu0 0.0
        %2992 = vmatprep.subr.mxu0 0.0
        %2993 = vmatpush1.msra.mxu0 0.0
        %2994 = vmatprep.subr.mxu0 0.0
        %2995 = vmatpush1.msra.mxu0 0.0
        %2996 = vmatprep.subr.mxu0 0.0
        %2997 = vmatpush1.msra.mxu0 0.0
        %2998 = vmatprep.subr.mxu0 0.0
        %2999 = vmatpush1.msra.mxu0 0.0
        %3000 = vmatprep.subr.mxu0 0.0
        %3001 = vmatpush1.msra.mxu0 %v2963
        %3002 = vmatprep.subr.mxu0 0.0
        %3003 = vmatpush1.msra.mxu0 %v2961
        %3004 = vmatprep.subr.mxu0 0.0
        %3005 = vmatpush2.msra.mxu0 0.0
        %3006 = vmatprep.subr.mxu0 0.0
        %3007 = vmatpush2.msra.mxu0 0.0
        %3008 = vmatprep.subr.mxu0 0.0
        %3009 = vmatpush2.msra.mxu0 0.0
        %3010 = vmatprep.subr.mxu0 0.0
        %3011 = vmatpush2.msra.mxu0 0.0
        %3012 = vmatprep.subr.mxu0 0.0
        %3013 = vmatpush2.msra.mxu0 0.0
        %3014 = vmatprep.subr.mxu0 0.0
        %3015 = vmatpush2.msra.mxu0 0.0
        %3016 = vmatprep.subr.mxu0 0.0
        %3017 = vmatpush2.msra.mxu0 0.0
        %3018 = vmatprep.subr.mxu0 0.0
        %3019 = vmatpush2.msra.mxu0 0.0
        %3020 = vmatprep.subr.mxu0 0.0
        %3021 = vmatpush2.msra.mxu0 0.0
        %3022 = vmatprep.subr.mxu0 0.0
        %3023 = vmatpush2.msra.mxu0 0.0
        %3024 = vmatprep.subr.mxu0 0.0
        %3025 = vmatpush2.msra.mxu0 0.0
        %3026 = vmatprep.subr.mxu0 0.0
        %3027 = vmatpush2.msra.mxu0 0.0
        %3028 = vmatprep.subr.mxu0 0.0
        %3029 = vmatpush2.msra.mxu0 0.0
        %3030 = vmatprep.subr.mxu0 0.0
        %3031 = vmatpush2.msra.mxu0 0.0
        %3032 = vmatprep.subr.mxu0 0.0
        %3033 = vmatpush2.msra.mxu0 0.0
        %3034 = vmatprep.subr.mxu0 0.0
        %3035 = vmatpush2.msra.mxu0 0.0
        %3036 = vmatprep.mubr.f32.mxu0 0.0
        %3037 = vmatmul.mubr.f32.gmra.mxu0 %v2967
        %v3038 = vpop.f32.mrf.mxu0
        %v3039 = vadd.f32 0.0, %v3038
        %v3040 = vpop.f32.mrf.mxu0
        %3041 = vmatprep.mubr.f32.mxu0 0.0
        %3042 = vmatmul.mubr.f32.gmra.mxu0 %v2970
        %v3043 = vpop.f32.mrf.mxu0
        %v3044 = vadd.f32 0.0, %v3043
        %v3045 = vpop.f32.mrf.mxu0
        %3046 = vdwg.mxu0
        %v3048 = vsel %vm1168, %v2952, 0
        %v3051 = vsel %vm1168, %v2957, 0
        %v3054 = vsel %vm1168, %v3039, 0
        %v3057 = vsel %vm1168, %v3044, 0
        %3059 = vmatprep.subr.mxu0 0.0
        %3060 = vmatpush1.msra.mxu0 0.0
        %3061 = vmatprep.subr.mxu0 0.0
        %3062 = vmatpush1.msra.mxu0 0.0
        %3063 = vmatprep.subr.mxu0 0.0
        %3064 = vmatpush1.msra.mxu0 0.0
        %3065 = vmatprep.subr.mxu0 0.0
        %3066 = vmatpush1.msra.mxu0 0.0
        %3067 = vmatprep.subr.mxu0 0.0
        %3068 = vmatpush1.msra.mxu0 0.0
        %3069 = vmatprep.subr.mxu0 0.0
        %3070 = vmatpush1.msra.mxu0 0.0
        %3071 = vmatprep.subr.mxu0 0.0
        %3072 = vmatpush1.msra.mxu0 0.0
        %3073 = vmatprep.subr.mxu0 0.0
        %3074 = vmatpush1.msra.mxu0 0.0
        %3075 = vmatprep.subr.mxu0 0.0
        %3076 = vmatpush1.msra.mxu0 0.0
        %3077 = vmatprep.subr.mxu0 0.0
        %3078 = vmatpush1.msra.mxu0 0.0
        %3079 = vmatprep.subr.mxu0 0.0
        %3080 = vmatpush1.msra.mxu0 0.0
        %3081 = vmatprep.subr.mxu0 0.0
        %3082 = vmatpush1.msra.mxu0 0.0
        %3083 = vmatprep.subr.mxu0 0.0
        %3084 = vmatpush1.msra.mxu0 0.0
        %3085 = vmatprep.subr.mxu0 0.0
        %3086 = vmatpush1.msra.mxu0 0.0
        %3087 = vmatprep.subr.mxu0 0.0
        %3088 = vmatpush1.msra.mxu0 0.0
        %3089 = vmatprep.subr.mxu0 0.0
        %3090 = vmatpush1.msra.mxu0 %v1161
        %3091 = vmatprep.subr.mxu0 0.0
        %3092 = vmatpush2.msra.mxu0 0.0
        %3093 = vmatprep.subr.mxu0 0.0
        %3094 = vmatpush2.msra.mxu0 0.0
        %3095 = vmatprep.subr.mxu0 0.0
        %3096 = vmatpush2.msra.mxu0 0.0
        %3097 = vmatprep.subr.mxu0 0.0
        %3098 = vmatpush2.msra.mxu0 0.0
        %3099 = vmatprep.subr.mxu0 0.0
        %3100 = vmatpush2.msra.mxu0 0.0
        %3101 = vmatprep.subr.mxu0 0.0
        %3102 = vmatpush2.msra.mxu0 0.0
        %3103 = vmatprep.subr.mxu0 0.0
        %3104 = vmatpush2.msra.mxu0 0.0
        %3105 = vmatprep.subr.mxu0 0.0
        %3106 = vmatpush2.msra.mxu0 0.0
        %3107 = vmatprep.subr.mxu0 0.0
        %3108 = vmatpush2.msra.mxu0 0.0
        %3109 = vmatprep.subr.mxu0 0.0
        %3110 = vmatpush2.msra.mxu0 0.0
        %3111 = vmatprep.subr.mxu0 0.0
        %3112 = vmatpush2.msra.mxu0 0.0
        %3113 = vmatprep.subr.mxu0 0.0
        %3114 = vmatpush2.msra.mxu0 0.0
        %3115 = vmatprep.subr.mxu0 0.0
        %3116 = vmatpush2.msra.mxu0 0.0
        %3117 = vmatprep.subr.mxu0 0.0
        %3118 = vmatpush2.msra.mxu0 0.0
        %3119 = vmatprep.subr.mxu0 0.0
        %3120 = vmatpush2.msra.mxu0 0.0
        %3121 = vmatprep.subr.mxu0 0.0
        %3122 = vmatpush2.msra.mxu0 0.0
        %3123 = vmatprep.mubr.f32.mxu0 0.0
        %3124 = vmatmul.mubr.f32.gmra.mxu0 %v3048
        %v3125 = vpop.f32.mrf.mxu0
        %v3126 = vadd.f32 0.0, %v3125
        %v3127 = vpop.f32.mrf.mxu0
        %3128 = vmatprep.mubr.f32.mxu0 0.0
        %3129 = vmatmul.mubr.f32.gmra.mxu0 %v3051
        %v3130 = vpop.f32.mrf.mxu0
        %v3131 = vadd.f32 0.0, %v3130
        %v3132 = vpop.f32.mrf.mxu0
        %3133 = vmatprep.mubr.f32.mxu0 0.0
        %3134 = vmatmul.mubr.f32.gmra.mxu0 %v3054
        %v3135 = vpop.f32.mrf.mxu0
        %v3136 = vadd.f32 0.0, %v3135
        %v3137 = vpop.f32.mrf.mxu0
        %3138 = vmatprep.mubr.f32.mxu0 0.0
        %3139 = vmatmul.mubr.f32.gmra.mxu0 %v3057
        %v3140 = vpop.f32.mrf.mxu0
        %v3141 = vadd.f32 0.0, %v3140
        %v3142 = vpop.f32.mrf.mxu0
        %3143 = vdwg.mxu0
        %v3144 = vadd.f32 %v2643, %v3126
        %v3145 = vadd.f32 %v2644, %v3131
        %v3146 = vadd.f32 %v2645, %v3136
        %v3147 = vadd.f32 %v2646, %v3141
        %v3148 = vld [vmem:[%s893] sm:$0x1]
        %v3150 = vlaneseq
        %v3151 = vshrl.u32 %v3150, 7
        %v3152 = vsub.s32 0, %v3151
        %v3153 = vrot.slane %v3148, %v3152
        %v3155 = vadd.f32 %v3144, %v3153
        %v3156 = vadd.f32 %v3145, %v3153
        %v3157 = vadd.f32 %v3146, %v3153
        %v3158 = vadd.f32 %v3147, %v3153
        %v3159 = vadd.f32 %v931, %v3155
        %v3160 = vadd.f32 %v932, %v3156
        %v3161 = vadd.f32 %v933, %v3157
        %v3162 = vadd.f32 %v934, %v3158
        %v3163 = vld [vmem:[%s896] sm:$0x1]
        %v3164 = vld [vmem:[%s899] sm:$0x1]
        %v3165 = vsel %vm952, %v3159, 0.0
        %3166 = vadd.xlane.f32.xlu0 %v3165
        %v3167 = vpop.xlane.xlu0 %3166
        %v3168 = vsel %vm952, %v3160, 0.0
        %3169 = vadd.xlane.f32.xlu0 %v3168
        %v3170 = vpop.xlane.xlu0 %3169
        %v3171 = vsel %vm952, %v3161, 0.0
        %3172 = vadd.xlane.f32.xlu0 %v3171
        %v3173 = vpop.xlane.xlu0 %3172
        %v3174 = vsel %vm952, %v3162, 0.0
        %3175 = vadd.xlane.f32.xlu0 %v3174
        %v3176 = vpop.xlane.xlu0 %3175
        %v3177 = vrcp.pop 32.0
        %v3178 = vmul.f32 %v3167, %v3177
        %v3179 = vmul.f32 %v3170, %v3177
        %v3180 = vmul.f32 %v3173, %v3177
        %v3181 = vmul.f32 %v3176, %v3177
        %v3182 = vsub.f32 %v3159, %v3178
        %v3183 = vsub.f32 %v3160, %v3179
        %v3184 = vsub.f32 %v3161, %v3180
        %v3185 = vsub.f32 %v3162, %v3181
        %v3186 = vmul.f32 %v3182, %v3182
        %v3187 = vmul.f32 %v3183, %v3183
        %v3188 = vmul.f32 %v3184, %v3184
        %v3189 = vmul.f32 %v3185, %v3185
        %v3190 = vsel %vm952, %v3186, 0.0
        %3191 = vadd.xlane.f32.xlu0 %v3190
        %v3192 = vpop.xlane.xlu0 %3191
        %v3193 = vsel %vm952, %v3187, 0.0
        %3194 = vadd.xlane.f32.xlu0 %v3193
        %v3195 = vpop.xlane.xlu0 %3194
        %v3196 = vsel %vm952, %v3188, 0.0
        %3197 = vadd.xlane.f32.xlu0 %v3196
        %v3198 = vpop.xlane.xlu0 %3197
        %v3199 = vsel %vm952, %v3189, 0.0
        %3200 = vadd.xlane.f32.xlu0 %v3199
        %v3201 = vpop.xlane.xlu0 %3200
        %v3202 = vmul.f32 %v3192, %v3177
        %v3203 = vmul.f32 %v3195, %v3177
        %v3204 = vmul.f32 %v3198, %v3177
        %v3205 = vmul.f32 %v3201, %v3177
        %v3206 = vadd.f32 %v3202, 1e-05
        %v3207 = vadd.f32 %v3203, 1e-05
        %v3208 = vadd.f32 %v3204, 1e-05
        %v3209 = vadd.f32 %v3205, 1e-05
        %v3210 = vrsqrt.pop %v3206
        %v3211 = vrsqrt.pop %v3207
        %v3212 = vrsqrt.pop %v3208
        %v3213 = vrsqrt.pop %v3209
        %v3214 = vmul.f32 %v3182, %v3210
        %v3215 = vmul.f32 %v3183, %v3211
        %v3216 = vmul.f32 %v3184, %v3212
        %v3217 = vmul.f32 %v3185, %v3213
        %v3219 = vlaneseq
        %v3220 = vshrl.u32 %v3219, 7
        %v3221 = vsub.s32 0, %v3220
        %v3222 = vrot.slane %v3163, %v3221
        %v3224 = vmul.f32 %v3214, %v3222
        %v3225 = vmul.f32 %v3215, %v3222
        %v3226 = vmul.f32 %v3216, %v3222
        %v3227 = vmul.f32 %v3217, %v3222
        %v3229 = vlaneseq
        %v3230 = vshrl.u32 %v3229, 7
        %v3231 = vsub.s32 0, %v3230
        %v3232 = vrot.slane %v3164, %v3231
        %v3234 = vadd.f32 %v3224, %v3232
        %v3235 = vadd.f32 %v3225, %v3232
        %v3236 = vadd.f32 %v3226, %v3232
        %v3237 = vadd.f32 %v3227, %v3232
        %v3238 = vld [vmem:[%s755] sm:$0xff]
        %v3239 = vld [vmem:[%s755 + $0x8] sm:$0xff]
        %v3240 = vld [vmem:[%s755 + $0x10] sm:$0xff]
        %v3241 = vld [vmem:[%s755 + $0x18] sm:$0xff]
        %v3242 = vld [vmem:[%s902] sm:$0x1]
        %v3244 = vlaneseq
        %v3245 = vshrl.u32 %v3244, 7
        %v3246 = vsub.s32 0, %v3245
        %v3247 = vrot.slane %v3242, %v3246
        %v3250 = vsel %vm952, %v3234, 0
        %v3253 = vsel %vm952, %v3235, 0
        %v3256 = vsel %vm952, %v3236, 0
        %v3259 = vsel %vm952, %v3237, 0
        %3261 = vmatprep.subr.mxu0 0.0
        %3262 = vmatpush1.msra.mxu0 0.0
        %3263 = vmatprep.subr.mxu0 0.0
        %3264 = vmatpush1.msra.mxu0 0.0
        %3265 = vmatprep.subr.mxu0 0.0
        %3266 = vmatpush1.msra.mxu0 0.0
        %3267 = vmatprep.subr.mxu0 0.0
        %3268 = vmatpush1.msra.mxu0 0.0
        %3269 = vmatprep.subr.mxu0 0.0
        %3270 = vmatpush1.msra.mxu0 0.0
        %3271 = vmatprep.subr.mxu0 0.0
        %3272 = vmatpush1.msra.mxu0 0.0
        %3273 = vmatprep.subr.mxu0 0.0
        %3274 = vmatpush1.msra.mxu0 0.0
        %3275 = vmatprep.subr.mxu0 0.0
        %3276 = vmatpush1.msra.mxu0 0.0
        %3277 = vmatprep.subr.mxu0 0.0
        %3278 = vmatpush1.msra.mxu0 0.0
        %3279 = vmatprep.subr.mxu0 0.0
        %3280 = vmatpush1.msra.mxu0 0.0
        %3281 = vmatprep.subr.mxu0 0.0
        %3282 = vmatpush1.msra.mxu0 0.0
        %3283 = vmatprep.subr.mxu0 0.0
        %3284 = vmatpush1.msra.mxu0 0.0
        %3285 = vmatprep.subr.mxu0 0.0
        %3286 = vmatpush1.msra.mxu0 %v3241
        %3287 = vmatprep.subr.mxu0 0.0
        %3288 = vmatpush1.msra.mxu0 %v3240
        %3289 = vmatprep.subr.mxu0 0.0
        %3290 = vmatpush1.msra.mxu0 %v3239
        %3291 = vmatprep.subr.mxu0 0.0
        %3292 = vmatpush1.msra.mxu0 %v3238
        %3293 = vmatprep.subr.mxu0 0.0
        %3294 = vmatpush2.msra.mxu0 0.0
        %3295 = vmatprep.subr.mxu0 0.0
        %3296 = vmatpush2.msra.mxu0 0.0
        %3297 = vmatprep.subr.mxu0 0.0
        %3298 = vmatpush2.msra.mxu0 0.0
        %3299 = vmatprep.subr.mxu0 0.0
        %3300 = vmatpush2.msra.mxu0 0.0
        %3301 = vmatprep.subr.mxu0 0.0
        %3302 = vmatpush2.msra.mxu0 0.0
        %3303 = vmatprep.subr.mxu0 0.0
        %3304 = vmatpush2.msra.mxu0 0.0
        %3305 = vmatprep.subr.mxu0 0.0
        %3306 = vmatpush2.msra.mxu0 0.0
        %3307 = vmatprep.subr.mxu0 0.0
        %3308 = vmatpush2.msra.mxu0 0.0
        %3309 = vmatprep.subr.mxu0 0.0
        %3310 = vmatpush2.msra.mxu0 0.0
        %3311 = vmatprep.subr.mxu0 0.0
        %3312 = vmatpush2.msra.mxu0 0.0
        %3313 = vmatprep.subr.mxu0 0.0
        %3314 = vmatpush2.msra.mxu0 0.0
        %3315 = vmatprep.subr.mxu0 0.0
        %3316 = vmatpush2.msra.mxu0 0.0
        %3317 = vmatprep.subr.mxu0 0.0
        %3318 = vmatpush2.msra.mxu0 0.0
        %3319 = vmatprep.subr.mxu0 0.0
        %3320 = vmatpush2.msra.mxu0 0.0
        %3321 = vmatprep.subr.mxu0 0.0
        %3322 = vmatpush2.msra.mxu0 0.0
        %3323 = vmatprep.subr.mxu0 0.0
        %3324 = vmatpush2.msra.mxu0 0.0
        %3325 = vmatprep.mubr.f32.mxu0 0.0
        %3326 = vmatmul.mubr.f32.gmra.mxu0 %v3250
        %v3327 = vpop.f32.mrf.mxu0
        %v3328 = vadd.f32 %v3247, %v3327
        %v3329 = vpop.f32.mrf.mxu0
        %3330 = vmatprep.mubr.f32.mxu0 0.0
        %3331 = vmatmul.mubr.f32.gmra.mxu0 %v3253
        %v3332 = vpop.f32.mrf.mxu0
        %v3333 = vadd.f32 %v3247, %v3332
        %v3334 = vpop.f32.mrf.mxu0
        %3335 = vmatprep.mubr.f32.mxu0 0.0
        %3336 = vmatmul.mubr.f32.gmra.mxu0 %v3256
        %v3337 = vpop.f32.mrf.mxu0
        %v3338 = vadd.f32 %v3247, %v3337
        %v3339 = vpop.f32.mrf.mxu0
        %3340 = vmatprep.mubr.f32.mxu0 0.0
        %3341 = vmatmul.mubr.f32.gmra.mxu0 %v3259
        %v3342 = vpop.f32.mrf.mxu0
        %v3343 = vadd.f32 %v3247, %v3342
        %v3344 = vpop.f32.mrf.mxu0
        %3345 = vdwg.mxu0
        %v3346 = vmax.f32 %v3328, 0.0
        %v3347 = vmax.f32 %v3333, 0.0
        %v3348 = vmax.f32 %v3338, 0.0
        %v3349 = vmax.f32 %v3343, 0.0
        %v3350 = vld [vmem:[%s907] sm:$0xff]
        %v3351 = vld [vmem:[%s907 + $0x8] sm:$0xff]
        %v3352 = vld [vmem:[%s907 + $0x10] sm:$0xff]
        %v3353 = vld [vmem:[%s907 + $0x18] sm:$0xff]
        %v3354 = vld [vmem:[%s907 + $0x20] sm:$0xff]
        %v3355 = vld [vmem:[%s907 + $0x28] sm:$0xff]
        %v3356 = vld [vmem:[%s907 + $0x30] sm:$0xff]
        %v3357 = vld [vmem:[%s907 + $0x38] sm:$0xff]
        %v3358 = vld [vmem:[%s910] sm:$0x1]
        %v3360 = vlaneseq
        %v3361 = vshrl.u32 %v3360, 7
        %v3362 = vsub.s32 0, %v3361
        %v3363 = vrot.slane %v3358, %v3362
        %vm3365 = vcmask 523264
        %v3367 = vsel %vm3365, %v3346, 0
        %v3370 = vsel %vm3365, %v3347, 0
        %v3373 = vsel %vm3365, %v3348, 0
        %v3376 = vsel %vm3365, %v3349, 0
        %3378 = vmatprep.subr.mxu0 0.0
        %3379 = vmatpush1.msra.mxu0 0.0
        %3380 = vmatprep.subr.mxu0 0.0
        %3381 = vmatpush1.msra.mxu0 0.0
        %3382 = vmatprep.subr.mxu0 0.0
        %3383 = vmatpush1.msra.mxu0 0.0
        %3384 = vmatprep.subr.mxu0 0.0
        %3385 = vmatpush1.msra.mxu0 0.0
        %3386 = vmatprep.subr.mxu0 0.0
        %3387 = vmatpush1.msra.mxu0 0.0
        %3388 = vmatprep.subr.mxu0 0.0
        %3389 = vmatpush1.msra.mxu0 0.0
        %3390 = vmatprep.subr.mxu0 0.0
        %3391 = vmatpush1.msra.mxu0 0.0
        %3392 = vmatprep.subr.mxu0 0.0
        %3393 = vmatpush1.msra.mxu0 0.0
        %3394 = vmatprep.subr.mxu0 0.0
        %3395 = vmatpush1.msra.mxu0 %v3357
        %3396 = vmatprep.subr.mxu0 0.0
        %3397 = vmatpush1.msra.mxu0 %v3356
        %3398 = vmatprep.subr.mxu0 0.0
        %3399 = vmatpush1.msra.mxu0 %v3355
        %3400 = vmatprep.subr.mxu0 0.0
        %3401 = vmatpush1.msra.mxu0 %v3354
        %3402 = vmatprep.subr.mxu0 0.0
        %3403 = vmatpush1.msra.mxu0 %v3353
        %3404 = vmatprep.subr.mxu0 0.0
        %3405 = vmatpush1.msra.mxu0 %v3352
        %3406 = vmatprep.subr.mxu0 0.0
        %3407 = vmatpush1.msra.mxu0 %v3351
        %3408 = vmatprep.subr.mxu0 0.0
        %3409 = vmatpush1.msra.mxu0 %v3350
        %3410 = vmatprep.subr.mxu0 0.0
        %3411 = vmatpush2.msra.mxu0 0.0
        %3412 = vmatprep.subr.mxu0 0.0
        %3413 = vmatpush2.msra.mxu0 0.0
        %3414 = vmatprep.subr.mxu0 0.0
        %3415 = vmatpush2.msra.mxu0 0.0
        %3416 = vmatprep.subr.mxu0 0.0
        %3417 = vmatpush2.msra.mxu0 0.0
        %3418 = vmatprep.subr.mxu0 0.0
        %3419 = vmatpush2.msra.mxu0 0.0
        %3420 = vmatprep.subr.mxu0 0.0
        %3421 = vmatpush2.msra.mxu0 0.0
        %3422 = vmatprep.subr.mxu0 0.0
        %3423 = vmatpush2.msra.mxu0 0.0
        %3424 = vmatprep.subr.mxu0 0.0
        %3425 = vmatpush2.msra.mxu0 0.0
        %3426 = vmatprep.subr.mxu0 0.0
        %3427 = vmatpush2.msra.mxu0 0.0
        %3428 = vmatprep.subr.mxu0 0.0
        %3429 = vmatpush2.msra.mxu0 0.0
        %3430 = vmatprep.subr.mxu0 0.0
        %3431 = vmatpush2.msra.mxu0 0.0
        %3432 = vmatprep.subr.mxu0 0.0
        %3433 = vmatpush2.msra.mxu0 0.0
        %3434 = vmatprep.subr.mxu0 0.0
        %3435 = vmatpush2.msra.mxu0 0.0
        %3436 = vmatprep.subr.mxu0 0.0
        %3437 = vmatpush2.msra.mxu0 0.0
        %3438 = vmatprep.subr.mxu0 0.0
        %3439 = vmatpush2.msra.mxu0 0.0
        %3440 = vmatprep.subr.mxu0 0.0
        %3441 = vmatpush2.msra.mxu0 0.0
        %3442 = vmatprep.mubr.f32.mxu0 0.0
        %3443 = vmatmul.mubr.f32.gmra.mxu0 %v3367
        %v3444 = vpop.f32.mrf.mxu0
        %v3445 = vadd.f32 %v3363, %v3444
        %v3446 = vpop.f32.mrf.mxu0
        %3447 = vmatprep.mubr.f32.mxu0 0.0
        %3448 = vmatmul.mubr.f32.gmra.mxu0 %v3370
        %v3449 = vpop.f32.mrf.mxu0
        %v3450 = vadd.f32 %v3363, %v3449
        %v3451 = vpop.f32.mrf.mxu0
        %3452 = vmatprep.mubr.f32.mxu0 0.0
        %3453 = vmatmul.mubr.f32.gmra.mxu0 %v3373
        %v3454 = vpop.f32.mrf.mxu0
        %v3455 = vadd.f32 %v3363, %v3454
        %v3456 = vpop.f32.mrf.mxu0
        %3457 = vmatprep.mubr.f32.mxu0 0.0
        %3458 = vmatmul.mubr.f32.gmra.mxu0 %v3376
        %v3459 = vpop.f32.mrf.mxu0
        %v3460 = vadd.f32 %v3363, %v3459
        %v3461 = vpop.f32.mrf.mxu0
        %3462 = vdwg.mxu0
        %v3463 = vadd.f32 %v3234, %v3445
        %v3464 = vadd.f32 %v3235, %v3450
        %v3465 = vadd.f32 %v3236, %v3455
        %v3466 = vadd.f32 %v3237, %v3460
        %v3467 = vld [vmem:[%s913] sm:$0x1]
        %v3468 = vld [vmem:[%s916] sm:$0x1]
        %v3469 = vsel %vm952, %v3463, 0.0
        %3470 = vadd.xlane.f32.xlu0 %v3469
        %v3471 = vpop.xlane.xlu0 %3470
        %v3472 = vsel %vm952, %v3464, 0.0
        %3473 = vadd.xlane.f32.xlu0 %v3472
        %v3474 = vpop.xlane.xlu0 %3473
        %v3475 = vsel %vm952, %v3465, 0.0
        %3476 = vadd.xlane.f32.xlu0 %v3475
        %v3477 = vpop.xlane.xlu0 %3476
        %v3478 = vsel %vm952, %v3466, 0.0
        %3479 = vadd.xlane.f32.xlu0 %v3478
        %v3480 = vpop.xlane.xlu0 %3479
        %v3481 = vmul.f32 %v3471, %v3177
        %v3482 = vmul.f32 %v3474, %v3177
        %v3483 = vmul.f32 %v3477, %v3177
        %v3484 = vmul.f32 %v3480, %v3177
        %v3485 = vsub.f32 %v3463, %v3481
        %v3486 = vsub.f32 %v3464, %v3482
        %v3487 = vsub.f32 %v3465, %v3483
        %v3488 = vsub.f32 %v3466, %v3484
        %v3489 = vmul.f32 %v3485, %v3485
        %v3490 = vmul.f32 %v3486, %v3486
        %v3491 = vmul.f32 %v3487, %v3487
        %v3492 = vmul.f32 %v3488, %v3488
        %v3493 = vsel %vm952, %v3489, 0.0
        %3494 = vadd.xlane.f32.xlu0 %v3493
        %v3495 = vpop.xlane.xlu0 %3494
        %v3496 = vsel %vm952, %v3490, 0.0
        %3497 = vadd.xlane.f32.xlu0 %v3496
        %v3498 = vpop.xlane.xlu0 %3497
        %v3499 = vsel %vm952, %v3491, 0.0
        %3500 = vadd.xlane.f32.xlu0 %v3499
        %v3501 = vpop.xlane.xlu0 %3500
        %v3502 = vsel %vm952, %v3492, 0.0
        %3503 = vadd.xlane.f32.xlu0 %v3502
        %v3504 = vpop.xlane.xlu0 %3503
        %v3505 = vmul.f32 %v3495, %v3177
        %v3506 = vmul.f32 %v3498, %v3177
        %v3507 = vmul.f32 %v3501, %v3177
        %v3508 = vmul.f32 %v3504, %v3177
        %v3509 = vadd.f32 %v3505, 1e-05
        %v3510 = vadd.f32 %v3506, 1e-05
        %v3511 = vadd.f32 %v3507, 1e-05
        %v3512 = vadd.f32 %v3508, 1e-05
        %v3513 = vrsqrt.pop %v3509
        %v3514 = vrsqrt.pop %v3510
        %v3515 = vrsqrt.pop %v3511
        %v3516 = vrsqrt.pop %v3512
        %v3517 = vmul.f32 %v3485, %v3513
        %v3518 = vmul.f32 %v3486, %v3514
        %v3519 = vmul.f32 %v3487, %v3515
        %v3520 = vmul.f32 %v3488, %v3516
        %v3522 = vlaneseq
        %v3523 = vshrl.u32 %v3522, 7
        %v3524 = vsub.s32 0, %v3523
        %v3525 = vrot.slane %v3467, %v3524
        %v3527 = vmul.f32 %v3517, %v3525
        %v3528 = vmul.f32 %v3518, %v3525
        %v3529 = vmul.f32 %v3519, %v3525
        %v3530 = vmul.f32 %v3520, %v3525
        %v3532 = vlaneseq
        %v3533 = vshrl.u32 %v3532, 7
        %v3534 = vsub.s32 0, %v3533
        %v3535 = vrot.slane %v3468, %v3534
        %v3537 = vadd.f32 %v3527, %v3535
        %v3538 = vadd.f32 %v3528, %v3535
        %v3539 = vadd.f32 %v3529, %v3535
        %v3540 = vadd.f32 %v3530, %v3535
        %3541 = vst.msk [vmem:[#allocation2] sm:$0xff] %vm952, %v3537
        %3542 = vst.msk [vmem:[#allocation2 + $0x8] sm:$0xff] %vm952, %v3538
        %3543 = vst.msk [vmem:[#allocation2 + $0x10] sm:$0xff] %vm952, %v3539
        %3544 = vst.msk [vmem:[#allocation2 + $0x18] sm:$0xff] %vm952, %v3540
        %3545 = vst.msk [vmem:[%s862] sm:$0xff] %vm952, %v3537
        %3546 = vst.msk [vmem:[%s862 + $0x8] sm:$0xff] %vm952, %v3538
        %3547 = vst.msk [vmem:[%s869] sm:$0xff] %vm952, %v3539
        %3548 = vst.msk [vmem:[%s869 + $0x8] sm:$0xff] %vm952, %v3540
        %s3549 = sand.u32 %s502, 1
        %s3550 = scalar_lea.sflag [#allocation5], %s3549
        %s3551 = sand.u32 %s502, 1
        %s3552 = smul.addr %s3551, 16
        %s3553 = scalar_lea.vmem [#allocation11], %s3552
        %s3554 = sand.u32 %s528, 1
        %s3555 = scalar_lea.sflag [#allocation13], %s3554
        %s3556 = sand.u32 %s528, 1
        %s3557 = smul.addr %s3556, 16
        %s3558 = scalar_lea.vmem [#allocation12], %s3557
        // Predicated region
        $region109: #{tpu_custom_call.1} parent=87 // pred_check
          %p3559 = pneg %p512
        $region110: #{tpu_custom_call.1} parent=87 // pred_check_branch
          %3561 = sbr.rel (%p3559) target = $region112
        $region111: #{tpu_custom_call.1} parent=87 // pred_region
          %s3563 = ssub.s32 256, 256
          %3564 = vsyncadd %s3550, %s3563
          %s3565 = smul.addr %s49, 2
          %s3566 = smul.addr %s3565, 128
          %s3567 = scalar_lea.hbm %s17, %s3566
          %s3568 = sshll.u32 %s3553, 4
          %s3569 = int_to_ptr.vmem [resolvable:$true] %s3568
          %3574 = dma.vmem_to_hbm [thread:$0]  %s3569, 256, %s3567, %s3550, 128, 128, 8
        $region112: #{tpu_custom_call.1} parent=87 // pred_fallthru
          _
        // Predicated region
        $region113: #{tpu_custom_call.1} parent=87 // pred_check
          %p3575 = pneg %p538
        $region114: #{tpu_custom_call.1} parent=87 // pred_check_branch
          %3577 = sbr.rel (%p3575) target = $region116
        $region115: #{tpu_custom_call.1} parent=87 // pred_region
          %s3579 = ssub.s32 256, 256
          %3580 = vsyncadd %s3555, %s3579
          %s3581 = smul.addr %s49, 2
          %s3582 = smul.addr %s3581, 128
          %s3583 = scalar_lea.hbm %s18, %s3582
          %s3584 = sshll.u32 %s3558, 4
          %s3585 = int_to_ptr.vmem [resolvable:$true] %s3584
          %3590 = dma.vmem_to_hbm [thread:$0]  %s3585, 256, %s3583, %s3555, 128, 128, 8
        $region116: #{tpu_custom_call.1} parent=87 // pred_fallthru
          _
      $region88: #{tpu_custom_call.1} parent=5 // pred_fallthru
        _
      %p3591 = scmp.le.s32.totalorder 2, %s40
      // Predicated region
      $region117: #{tpu_custom_call.1} parent=5 // pred_check
        %p3592 = pneg %p3591
      $region118: #{tpu_custom_call.1} parent=5 // pred_check_branch
        %3594 = sbr.rel (%p3592) target = $region120
      $region119: #{tpu_custom_call.1} parent=5 // pred_region
        %s3595 = ssub.s32 %s40, 2
        // Predicated region
        $region121: #{tpu_custom_call.1} parent=119 // pred_check
          %p3596 = pneg %p518
        $region122: #{tpu_custom_call.1} parent=119 // pred_check_branch
          %3598 = sbr.rel (%p3596) target = $region124
        $region123: #{tpu_custom_call.1} parent=119 // pred_region
          %s3599 = sand.u32 %s503, 1
          %s3600 = scalar_lea.sflag [#allocation5], %s3599
          %s3601 = sand.u32 %s503, 1
          %s3602 = smul.addr %s3601, 16
          %s3603 = scalar_lea.vmem [#allocation11], %s3602
          %3604 = dma.done %s3600, 256
        $region124: #{tpu_custom_call.1} parent=119 // pred_fallthru
          _
        // Predicated region
        $region125: #{tpu_custom_call.1} parent=119 // pred_check
          %p3605 = pneg %p544
        $region126: #{tpu_custom_call.1} parent=119 // pred_check_branch
          %3607 = sbr.rel (%p3605) target = $region128
        $region127: #{tpu_custom_call.1} parent=119 // pred_region
          %s3608 = sand.u32 %s529, 1
          %s3609 = scalar_lea.sflag [#allocation13], %s3608
          %s3610 = sand.u32 %s529, 1
          %s3611 = smul.addr %s3610, 16
          %s3612 = scalar_lea.vmem [#allocation12], %s3611
          %3613 = dma.done %s3609, 256
        $region128: #{tpu_custom_call.1} parent=119 // pred_fallthru
          _
      $region120: #{tpu_custom_call.1} parent=5 // pred_fallthru
        _
    $region6: #{tpu_custom_call.1} parent=1 // loop_footer
      %s44 = sadd.s32 1, %s40
    $region7: #{tpu_custom_call.1} parent=1 // loop_footer_branch
      %39 = sbr.rel target = $region3
    $region8: #{tpu_custom_call.1} parent=1 // loop_exit
      _
    %3614 = vsyncpa [#allocation4], 1
    %s3615 = scalar_lea.sflag [#allocation4], 1
    %3616 = vsyncpa %s3615, 1
    %3617 = vsyncpa [#allocation7], 1
    %s3618 = scalar_lea.sflag [#allocation7], 1
    %3619 = vsyncpa %s3618, 1
    %3620 = vsyncpa [#allocation10], 1
    %s3621 = scalar_lea.sflag [#allocation10], 1
    %3622 = vsyncpa %s3621, 1
    %3623 = vsyncpa [#allocation5], 1
    %s3624 = scalar_lea.sflag [#allocation5], 1
    %3625 = vsyncpa %s3624, 1
    %3626 = vsyncpa [#allocation13], 1
    %s3627 = scalar_lea.sflag [#allocation13], 1
    %3628 = vsyncpa %s3627, 1

</llo_original>
